<compile_context>
chip_gen: v5e
topology: v5e:2x2
jax: 0.10.0
libtpu: 0.0.40
codegen_flags: <defaults>
</compile_context>

<pallas_src>
import functools

import jax
import jax.numpy as jnp
from jax.experimental import pallas as pl
from jax.experimental.pallas import tpu as pltpu

KERNEL_SIZE = 4
LEAKY_SLOPE = 0.2
PADDING = 1
STRIDE = 2
BN_EPS = 1e-5
LANES = 128          # channel dims padded to 128 lanes -> lane-dense stores
SUBLANES_BF16 = 16   # bf16 packs 2 rows/sublane -> native (16, 128) tile


# --------------------------------------------------------------------------
# Kernel 1: conv (im2col matmul) + bias + activation   (layers 1 and 5)
# --------------------------------------------------------------------------
def _conv_bias_act_kernel(a_ref, w_ref, shift_ref, o_ref, *, act, slope):
    y = jnp.dot(a_ref[...], w_ref[...], preferred_element_type=jnp.float32)
    z = y + shift_ref[...]
    if act == "leaky":
        # max(z, slope*z) == LeakyReLU for 0 < slope < 1 (one mul + one max).
        z = jnp.maximum(z, slope * z)
    else:  # sigmoid: keep exp and reciprocal on the EUP slot
        e = jnp.exp(-z)
        z = pl.reciprocal(1.0 + e, approx=True)
    o_ref[...] = z.astype(o_ref.dtype)


# --------------------------------------------------------------------------
# Kernel 2: conv (im2col matmul) + BatchNorm (training stats) + LeakyReLU
#           Two-phase grid: (phase, m_tile)
#             phase 0: accumulate per-lane sum / sum-of-squares over all tiles
#             phase 1: recompute the (cheap) matmul, apply affine + activation
#           Stats are accumulated ACROSS tiles in VMEM scratch, so tiling over
#           M is always statistically correct (review correctness concern).
# --------------------------------------------------------------------------
def _conv_bn_act_kernel(a_ref, w_ref, scale_ref, shift_ref, o_ref,
                        sum_ref, ssq_ref, *, slope, eps, m_real):
    phase = pl.program_id(0)
    tile = pl.program_id(1)
    y = jnp.dot(a_ref[...], w_ref[...], preferred_element_type=jnp.float32)

    @pl.when(jnp.logical_and(phase == 0, tile == 0))
    def _init():
        sum_ref[...] = jnp.zeros_like(sum_ref)
        ssq_ref[...] = jnp.zeros_like(ssq_ref)

    @pl.when(phase == 0)
    def _accumulate():
        # Zero-padded rows/lanes contribute exact zeros, so dividing by the
        # real row count later keeps the statistics correct.
        sum_ref[...] += jnp.sum(y, axis=0, keepdims=True)
        ssq_ref[...] += jnp.sum(y * y, axis=0, keepdims=True)
        # Deterministic placeholder store; phase 1 overwrites this block.
        o_ref[...] = jnp.zeros_like(o_ref)

    @pl.when(phase == 1)
    def _finalize():
        # NOTE: E[x^2]-E[x]^2 in f32 -- fine for DCGAN-scale activations
        # (0.02-init weights); switch to two-pass (x-mean)^2 if reused with
        # large-magnitude inputs.
        inv_m = 1.0 / m_real
        mean = sum_ref[...] * inv_m
        var = ssq_ref[...] * inv_m - mean * mean
        inv_std = jax.lax.rsqrt(var + eps)
        sc = scale_ref[...] * inv_std          # gamma=0 on padded lanes -> 0
        sh = shift_ref[...] - mean * sc
        z = y * sc + sh
        z = jnp.maximum(z, slope * z)
        o_ref[...] = z.astype(o_ref.dtype)


# --------------------------------------------------------------------------
# Helpers
# --------------------------------------------------------------------------
def _round_up(x, mult):
    return ((x + mult - 1) // mult) * mult


def _pick_tile_m(mpad, cap):
    for t in (2048, 1024, 512, 256, 128, 64, 32, 16):
        if t <= cap and mpad % t == 0:
            return t
    return mpad


def _im2col_bf16(x_nhwc, cin_real, k, stride, padding):
    """Strided-conv im2col built directly in bf16:
    (N,H,W,C) -> (N*Hout*Wout, k*k*cin_real)."""
    n, h, w, _ = x_nhwc.shape
    xr = x_nhwc[..., :cin_real].astype(jnp.bfloat16)
    xp = jnp.pad(xr, ((0, 0), (padding, padding), (padding, padding), (0, 0)))
    hout = (h + 2 * padding - k) // stride + 1
    wout = (w + 2 * padding - k) // stride + 1
    taps = []
    for i in range(k):
        for j in range(k):
            taps.append(xp[:, i:i + stride * (hout - 1) + 1:stride,
                            j:j + stride * (wout - 1) + 1:stride, :])
    a = jnp.stack(taps, axis=3)                       # (N, Ho, Wo, k*k, Cin)
    return a.reshape(n * hout * wout, k * k * cin_real), hout, wout


# --------------------------------------------------------------------------
# One Conv2d (+ optional BN) + activation layer as one fused pallas_call
# --------------------------------------------------------------------------
def conv_block(x_nhwc, w, bias, use_bn, stride, padding, act, out_dtype):
    """x_nhwc: (N,H,W,C) with real input channels in the low lanes.
    Returns (N, Hout, Wout, Cpad) with real output channels in the low lanes."""
    n = x_nhwc.shape[0]
    cout, cin, k, _ = w.shape

    a, hout, wout = _im2col_bf16(x_nhwc, cin, k, stride, padding)
    m, kk = a.shape
    kpad = _round_up(kk, LANES)          # lane-align the contraction dim (128, not 256)
    cpad = _round_up(cout, LANES)        # lane-dense output stores
    mpad = _round_up(m, SUBLANES_BF16)   # native bf16 (16,128) tiling
    a = jnp.pad(a, ((0, mpad - m), (0, kpad - kk)))   # single bf16 pad

    # Weight matrix rows ordered (tap_i, tap_j, cin) to match im2col taps;
    # zero-padded lanes keep padded output channels exactly zero.
    w_mat = jnp.transpose(w, (2, 3, 1, 0)).reshape(kk, cout)
    w_mat = jnp.pad(w_mat, ((0, kpad - kk), (0, cpad - cout))).astype(jnp.bfloat16)

    if use_bn:
        # gamma=1 / beta=0 on real channels (PyTorch default init), 0 on pads.
        scale = jnp.zeros((1, cpad), jnp.float32).at[0, :cout].set(1.0)
        shift = jnp.zeros((1, cpad), jnp.float32)
        tm = _pick_tile_m(mpad, cap=256)
        y = pl.pallas_call(
            functools.partial(_conv_bn_act_kernel, slope=LEAKY_SLOPE,
                              eps=BN_EPS, m_real=float(m)),
            out_shape=jax.ShapeDtypeStruct((mpad, cpad), out_dtype),
            grid=(2, mpad // tm),                      # (phase, m_tile)
            in_specs=[
                pl.BlockSpec((tm, kpad), lambda p, t: (t, 0)),
                pl.BlockSpec((kpad, cpad), lambda p, t: (0, 0)),
                pl.BlockSpec((1, cpad), lambda p, t: (0, 0)),
                pl.BlockSpec((1, cpad), lambda p, t: (0, 0)),
            ],
            out_specs=pl.BlockSpec((tm, cpad), lambda p, t: (t, 0)),
            scratch_shapes=[pltpu.VMEM((1, cpad), jnp.float32),   # sum
                            pltpu.VMEM((1, cpad), jnp.float32)],  # sum of squares
            compiler_params=pltpu.CompilerParams(
                dimension_semantics=("arbitrary", "arbitrary")),
        )(a, w_mat, scale, shift)
    else:
        shift = jnp.zeros((1, cpad), jnp.float32).at[0, :cout].set(bias)
        tm = _pick_tile_m(mpad, cap=1024)              # no cross-row dependency
        y = pl.pallas_call(
            functools.partial(_conv_bias_act_kernel, act=act, slope=LEAKY_SLOPE),
            out_shape=jax.ShapeDtypeStruct((mpad, cpad), out_dtype),
            grid=(mpad // tm,),
            in_specs=[
                pl.BlockSpec((tm, kpad), lambda i: (i, 0)),
                pl.BlockSpec((kpad, cpad), lambda i: (0, 0)),
                pl.BlockSpec((1, cpad), lambda i: (0, 0)),
            ],
            out_specs=pl.BlockSpec((tm, cpad), lambda i: (i, 0)),
            compiler_params=pltpu.CompilerParams(
                dimension_semantics=("parallel",)),
        )(a, w_mat, shift)

    return y[:m].reshape(n, hout, wout, cpad)


def discriminator_forward(x_nchw, params):
    """x_nchw: (N, channels_img, 64, 64).  Returns (N, 1, 1, 1) NCHW float32."""
    x = jnp.transpose(x_nchw, (0, 2, 3, 1)).astype(jnp.bfloat16)   # NCHW -> NHWC
    n_layers = len(params)
    for idx, (w, bias, use_bn, stride, padding, act) in enumerate(params):
        last = idx == n_layers - 1
        x = conv_block(x, w, bias, use_bn, stride, padding, act,
                       out_dtype=jnp.float32 if last else jnp.bfloat16)
    cout_last = params[-1][0].shape[0]
    out = x[..., :cout_last]                          # drop lane padding
    return jnp.transpose(out, (0, 3, 1, 2))           # back to NCHW


# --------------------------------------------------------------------------
# Pure-JAX f32 reference (identical semantics) for a correctness check
# --------------------------------------------------------------------------
def _reference_forward(x_nchw, params):
    x = x_nchw
    for (w, bias, use_bn, stride, padding, act) in params:
        x = jax.lax.conv_general_dilated(
            x, w, window_strides=(stride, stride),
            padding=((padding, padding), (padding, padding)),
            dimension_numbers=("NCHW", "OIHW", "NCHW"))
        if bias is not None:
            x = x + bias.reshape(1, -1, 1, 1)
        if use_bn:
            mean = jnp.mean(x, axis=(0, 2, 3), keepdims=True)
            var = jnp.mean((x - mean) ** 2, axis=(0, 2, 3), keepdims=True)
            x = (x - mean) * jax.lax.rsqrt(var + BN_EPS)
        if act == "leaky":
            x = jnp.where(x >= 0.0, x, LEAKY_SLOPE * x)
        else:
            x = jax.nn.sigmoid(x)
    return x


# --------------------------------------------------------------------------
# Driver
# --------------------------------------------------------------------------
if __name__ == "__main__":
    channels_img, features_d = 3, 8
    batch = 2
    fd = features_d

    # (cin, cout, stride, padding, has_bias, use_bn, activation)
    layer_cfg = [
        (channels_img, fd,     STRIDE, PADDING, True,  False, "leaky"),
        (fd,           fd * 2, STRIDE, PADDING, False, True,  "leaky"),
        (fd * 2,       fd * 4, STRIDE, PADDING, False, True,  "leaky"),
        (fd * 4,       fd * 8, STRIDE, PADDING, False, True,  "leaky"),
        (fd * 8,       1,      STRIDE, 0,       True,  False, "sigmoid"),
    ]

    key = jax.random.PRNGKey(0)
    keys = jax.random.split(key, 2 * len(layer_cfg) + 1)

    params = []
    for idx, (cin, cout, s, p, has_bias, use_bn, act) in enumerate(layer_cfg):
        w = 0.02 * jax.random.normal(
            keys[2 * idx], (cout, cin, KERNEL_SIZE, KERNEL_SIZE), jnp.float32)
        bias = (0.05 * jax.random.normal(keys[2 * idx + 1], (cout,), jnp.float32)
                if has_bias else None)
        params.append((w, bias, use_bn, s, p, act))

    # DCGAN discriminator expects N x channels_img x 64 x 64 inputs
    # (the final 4x4 / stride-2 / pad-0 conv maps 4x4 -> 1x1).
    x = jax.random.normal(keys[-1], (batch, channels_img, 64, 64), jnp.float32)

    fwd = jax.jit(lambda inp: discriminator_forward(inp, params))
    out = jax.block_until_ready(fwd(x))

    assert out.shape == (batch, 1, 1, 1), out.shape
    assert bool(jnp.all(jnp.isfinite(out)))
    # sigmoid range (small slack for the approx-reciprocal EUP path)
    assert bool(jnp.all((out >= -1e-3) & (out <= 1.0 + 1e-3)))

    ref = _reference_forward(x, params)
    max_err = float(jnp.max(jnp.abs(out - ref)))
    assert max_err < 5e-2, max_err          # bf16 MXU operands + bf16 activations

    print("KERNEL_OK")
</pallas_src>

<mosaic_0001>
module attributes {stable_mosaic.version = 11 : i64} {
  func.func @_conv_bias_act_kernel(%arg0: i32, %arg1: memref<1024x128xbf16, #tpu.memory_space<vmem>>, %arg2: memref<128x128xbf16, #tpu.memory_space<vmem>>, %arg3: memref<1x128xf32, #tpu.memory_space<vmem>>, %arg4: memref<1024x128xbf16, #tpu.memory_space<vmem>>) attributes {dimension_semantics = [#tpu.dimension_semantics<parallel>], iteration_bounds = array<i64: 2>, scalar_prefetch = 0 : i64, scratch_operands = 0 : i64, tpu.core_type = #tpu.core_type<tc>, window_params = [{transform_indices = @transform_0, window_bounds = array<i64: 1024, 128>}, {pipeline_mode = #tpu.pipeline_mode<synchronous>, transform_indices = @transform_1, window_bounds = array<i64: 128, 128>}, {pipeline_mode = #tpu.pipeline_mode<synchronous>, transform_indices = @transform_2, window_bounds = array<i64: 1, 128>}, {transform_indices = @transform_3, window_bounds = array<i64: 1024, 128>}]} {
    %c0 = arith.constant 0 : index
    %c0_0 = arith.constant 0 : index
    %0 = vector.load %arg1[%c0, %c0_0] : memref<1024x128xbf16, #tpu.memory_space<vmem>>, vector<1024x128xbf16>
    %c0_1 = arith.constant 0 : index
    %c0_2 = arith.constant 0 : index
    %1 = vector.load %arg2[%c0_1, %c0_2] : memref<128x128xbf16, #tpu.memory_space<vmem>>, vector<128x128xbf16>
    %cst = arith.constant dense<0.000000e+00> : vector<1024x128xf32>
    %2 = tpu.matmul %0, %1, %cst {dimension_numbers = #tpu.dot_dimension_numbers<[1], [0], [0], [1], [0, 0, 1, 1], [], []>} : vector<1024x128xbf16>, vector<128x128xbf16>, vector<1024x128xf32> -> vector<1024x128xf32>
    %c0_3 = arith.constant 0 : index
    %c0_4 = arith.constant 0 : index
    %3 = vector.load %arg3[%c0_3, %c0_4] : memref<1x128xf32, #tpu.memory_space<vmem>>, vector<1x128xf32>
    %4 = vector.broadcast %3 : vector<1x128xf32> to vector<1024x128xf32>
    %5 = arith.addf %2, %4 : vector<1024x128xf32>
    %cst_5 = arith.constant 2.000000e-01 : f32
    %6 = vector.broadcast %cst_5 : f32 to vector<1024x128xf32>
    %7 = arith.mulf %6, %5 : vector<1024x128xf32>
    %8 = arith.maximumf %5, %7 : vector<1024x128xf32>
    %9 = arith.truncf %8 : vector<1024x128xf32> to vector<1024x128xbf16>
    %c0_6 = arith.constant 0 : index
    %c0_7 = arith.constant 0 : index
    %10 = vector.load %arg4[%c0_6, %c0_7] : memref<1024x128xbf16, #tpu.memory_space<vmem>>, vector<1024x128xbf16>
    tpu.vector_store %arg4[%c0_6, %c0_7], %9 {strides = array<i32>} : memref<1024x128xbf16, #tpu.memory_space<vmem>>, vector<1024x128xbf16>,
    return
  }
  func.func @transform_0(%arg0: i32) -> (i32, i32) {
    %c0_i32 = arith.constant 0 : i32
    %c0_i32_0 = arith.constant 0 : i32
    return %arg0, %c0_i32 : i32, i32
  }
  func.func @transform_1(%arg0: i32) -> (i32, i32) {
    %c0_i32 = arith.constant 0 : i32
    %c0_i32_0 = arith.constant 0 : i32
    %c0_i32_1 = arith.constant 0 : i32
    return %c0_i32, %c0_i32_0 : i32, i32
  }
  func.func @transform_2(%arg0: i32) -> (i32, i32) {
    %c0_i32 = arith.constant 0 : i32
    %c0_i32_0 = arith.constant 0 : i32
    %c0_i32_1 = arith.constant 0 : i32
    return %c0_i32, %c0_i32_0 : i32, i32
  }
  func.func @transform_3(%arg0: i32) -> (i32, i32) {
    %c0_i32 = arith.constant 0 : i32
    %c0_i32_0 = arith.constant 0 : i32
    return %arg0, %c0_i32 : i32, i32
  }
}

module attributes {stable_mosaic.version = 11 : i64} {
  func.func @_conv_bn_act_kernel(%arg0: i32, %arg1: i32, %arg2: memref<256x128xbf16, #tpu.memory_space<vmem>>, %arg3: memref<128x128xbf16, #tpu.memory_space<vmem>>, %arg4: memref<1x128xf32, #tpu.memory_space<vmem>>, %arg5: memref<1x128xf32, #tpu.memory_space<vmem>>, %arg6: memref<256x128xbf16, #tpu.memory_space<vmem>>, %arg7: memref<1x128xf32, #tpu.memory_space<vmem>>, %arg8: memref<1x128xf32, #tpu.memory_space<vmem>>) attributes {dimension_semantics = [#tpu.dimension_semantics<arbitrary>, #tpu.dimension_semantics<arbitrary>], iteration_bounds = array<i64: 2, 2>, scalar_prefetch = 0 : i64, scratch_operands = 2 : i64, tpu.core_type = #tpu.core_type<tc>, window_params = [{transform_indices = @transform_0, window_bounds = array<i64: 256, 128>}, {pipeline_mode = #tpu.pipeline_mode<synchronous>, transform_indices = @transform_1, window_bounds = array<i64: 128, 128>}, {pipeline_mode = #tpu.pipeline_mode<synchronous>, transform_indices = @transform_2, window_bounds = array<i64: 1, 128>}, {pipeline_mode = #tpu.pipeline_mode<synchronous>, transform_indices = @transform_3, window_bounds = array<i64: 1, 128>}, {transform_indices = @transform_4, window_bounds = array<i64: 256, 128>}]} {
    %c0 = arith.constant 0 : index
    %c0_0 = arith.constant 0 : index
    %0 = vector.load %arg2[%c0, %c0_0] : memref<256x128xbf16, #tpu.memory_space<vmem>>, vector<256x128xbf16>
    %c0_1 = arith.constant 0 : index
    %c0_2 = arith.constant 0 : index
    %1 = vector.load %arg3[%c0_1, %c0_2] : memref<128x128xbf16, #tpu.memory_space<vmem>>, vector<128x128xbf16>
    %cst = arith.constant dense<0.000000e+00> : vector<256x128xf32>
    %2 = tpu.matmul %0, %1, %cst {dimension_numbers = #tpu.dot_dimension_numbers<[1], [0], [0], [1], [0, 0, 1, 1], [], []>} : vector<256x128xbf16>, vector<128x128xbf16>, vector<256x128xf32> -> vector<256x128xf32>
    %c0_i32 = arith.constant 0 : i32
    %3 = arith.cmpi eq, %arg0, %c0_i32 : i32
    %c0_i32_3 = arith.constant 0 : i32
    %4 = arith.cmpi eq, %arg1, %c0_i32_3 : i32
    %5 = arith.andi %3, %4 : i1
    %6 = arith.extui %5 : i1 to i32
    %c0_i32_4 = arith.constant 0 : i32
    %7 = arith.cmpi ne, %6, %c0_i32_4 : i32
    scf.if %7 {
      %cst_8 = arith.constant 0.000000e+00 : f32
      %14 = vector.broadcast %cst_8 : f32 to vector<1x128xf32>
      %c0_9 = arith.constant 0 : index
      %c0_10 = arith.constant 0 : index
      %15 = vector.load %arg7[%c0_9, %c0_10] : memref<1x128xf32, #tpu.memory_space<vmem>>, vector<1x128xf32>
      tpu.vector_store %arg7[%c0_9, %c0_10], %14 {strides = array<i32>} : memref<1x128xf32, #tpu.memory_space<vmem>>, vector<1x128xf32>,
      %cst_11 = arith.constant 0.000000e+00 : f32
      %16 = vector.broadcast %cst_11 : f32 to vector<1x128xf32>
      %c0_12 = arith.constant 0 : index
      %c0_13 = arith.constant 0 : index
      %17 = vector.load %arg8[%c0_12, %c0_13] : memref<1x128xf32, #tpu.memory_space<vmem>>, vector<1x128xf32>
      tpu.vector_store %arg8[%c0_12, %c0_13], %16 {strides = array<i32>} : memref<1x128xf32, #tpu.memory_space<vmem>>, vector<1x128xf32>,
    } else {
    }
    %c0_i32_5 = arith.constant 0 : i32
    %8 = arith.cmpi eq, %arg0, %c0_i32_5 : i32
    %9 = arith.extui %8 : i1 to i32
    %c0_i32_6 = arith.constant 0 : i32
    %10 = arith.cmpi ne, %9, %c0_i32_6 : i32
    scf.if %10 {
      %c0_8 = arith.constant 0 : index
      %c0_9 = arith.constant 0 : index
      %14 = vector.load %arg7[%c0_8, %c0_9] : memref<1x128xf32, #tpu.memory_space<vmem>>, vector<1x128xf32>
      %cst_10 = arith.constant dense<0.000000e+00> : vector<128xf32>
      %15 = vector.multi_reduction <add>, %2, %cst_10 [0] : vector<256x128xf32> to vector<128xf32>
      %16 = vector.shape_cast %15 : vector<128xf32> to vector<1x128xf32>
      %17 = arith.addf %14, %16 : vector<1x128xf32>
      %c0_11 = arith.constant 0 : index
      %c0_12 = arith.constant 0 : index
      %18 = vector.load %arg7[%c0_11, %c0_12] : memref<1x128xf32, #tpu.memory_space<vmem>>, vector<1x128xf32>
      tpu.vector_store %arg7[%c0_11, %c0_12], %17 {strides = array<i32>} : memref<1x128xf32, #tpu.memory_space<vmem>>, vector<1x128xf32>,
      %c0_13 = arith.constant 0 : index
      %c0_14 = arith.constant 0 : index
      %19 = vector.load %arg8[%c0_13, %c0_14] : memref<1x128xf32, #tpu.memory_space<vmem>>, vector<1x128xf32>
      %20 = arith.mulf %2, %2 : vector<256x128xf32>
      %cst_15 = arith.constant dense<0.000000e+00> : vector<128xf32>
      %21 = vector.multi_reduction <add>, %20, %cst_15 [0] : vector<256x128xf32> to vector<128xf32>
      %22 = vector.shape_cast %21 : vector<128xf32> to vector<1x128xf32>
      %23 = arith.addf %19, %22 : vector<1x128xf32>
      %c0_16 = arith.constant 0 : index
      %c0_17 = arith.constant 0 : index
      %24 = vector.load %arg8[%c0_16, %c0_17] : memref<1x128xf32, #tpu.memory_space<vmem>>, vector<1x128xf32>
      tpu.vector_store %arg8[%c0_16, %c0_17], %23 {strides = array<i32>} : memref<1x128xf32, #tpu.memory_space<vmem>>, vector<1x128xf32>,
      %cst_18 = arith.constant 0.000000e+00 : bf16
      %25 = vector.broadcast %cst_18 : bf16 to vector<256x128xbf16>
      %c0_19 = arith.constant 0 : index
      %c0_20 = arith.constant 0 : index
      %26 = vector.load %arg6[%c0_19, %c0_20] : memref<256x128xbf16, #tpu.memory_space<vmem>>, vector<256x128xbf16>
      tpu.vector_store %arg6[%c0_19, %c0_20], %25 {strides = array<i32>} : memref<256x128xbf16, #tpu.memory_space<vmem>>, vector<256x128xbf16>,
    } else {
    }
    %c1_i32 = arith.constant 1 : i32
    %11 = arith.cmpi eq, %arg0, %c1_i32 : i32
    %12 = arith.extui %11 : i1 to i32
    %c0_i32_7 = arith.constant 0 : i32
    %13 = arith.cmpi ne, %12, %c0_i32_7 : i32
    scf.if %13 {
      %c0_8 = arith.constant 0 : index
      %c0_9 = arith.constant 0 : index
      %14 = vector.load %arg7[%c0_8, %c0_9] : memref<1x128xf32, #tpu.memory_space<vmem>>, vector<1x128xf32>
      %cst_10 = arith.constant 0.001953125 : f32
      %15 = vector.broadcast %cst_10 : f32 to vector<1x128xf32>
      %16 = arith.mulf %14, %15 : vector<1x128xf32>
      %c0_11 = arith.constant 0 : index
      %c0_12 = arith.constant 0 : index
      %17 = vector.load %arg8[%c0_11, %c0_12] : memref<1x128xf32, #tpu.memory_space<vmem>>, vector<1x128xf32>
      %cst_13 = arith.constant 0.001953125 : f32
      %18 = vector.broadcast %cst_13 : f32 to vector<1x128xf32>
      %19 = arith.mulf %17, %18 : vector<1x128xf32>
      %20 = arith.mulf %16, %16 : vector<1x128xf32>
      %21 = arith.subf %19, %20 : vector<1x128xf32>
      %cst_14 = arith.constant 9.99999974E-6 : f32
      %22 = vector.broadcast %cst_14 : f32 to vector<1x128xf32>
      %23 = arith.addf %21, %22 : vector<1x128xf32>
      %24 = math.rsqrt %23 : vector<1x128xf32>
      %c0_15 = arith.constant 0 : index
      %c0_16 = arith.constant 0 : index
      %25 = vector.load %arg4[%c0_15, %c0_16] : memref<1x128xf32, #tpu.memory_space<vmem>>, vector<1x128xf32>
      %26 = arith.mulf %25, %24 : vector<1x128xf32>
      %c0_17 = arith.constant 0 : index
      %c0_18 = arith.constant 0 : index
      %27 = vector.load %arg5[%c0_17, %c0_18] : memref<1x128xf32, #tpu.memory_space<vmem>>, vector<1x128xf32>
      %28 = arith.mulf %16, %26 : vector<1x128xf32>
      %29 = arith.subf %27, %28 : vector<1x128xf32>
      %30 = vector.broadcast %26 : vector<1x128xf32> to vector<256x128xf32>
      %31 = arith.mulf %2, %30 : vector<256x128xf32>
      %32 = vector.broadcast %29 : vector<1x128xf32> to vector<256x128xf32>
      %33 = arith.addf %31, %32 : vector<256x128xf32>
      %cst_19 = arith.constant 2.000000e-01 : f32
      %34 = vector.broadcast %cst_19 : f32 to vector<256x128xf32>
      %35 = arith.mulf %34, %33 : vector<256x128xf32>
      %36 = arith.maximumf %33, %35 : vector<256x128xf32>
      %37 = arith.truncf %36 : vector<256x128xf32> to vector<256x128xbf16>
      %c0_20 = arith.constant 0 : index
      %c0_21 = arith.constant 0 : index
      %38 = vector.load %arg6[%c0_20, %c0_21] : memref<256x128xbf16, #tpu.memory_space<vmem>>, vector<256x128xbf16>
      tpu.vector_store %arg6[%c0_20, %c0_21], %37 {strides = array<i32>} : memref<256x128xbf16, #tpu.memory_space<vmem>>, vector<256x128xbf16>,
    } else {
    }
    return
  }
  func.func @transform_0(%arg0: i32, %arg1: i32) -> (i32, i32) {
    %c0_i32 = arith.constant 0 : i32
    %c0_i32_0 = arith.constant 0 : i32
    return %arg1, %c0_i32 : i32, i32
  }
  func.func @transform_1(%arg0: i32, %arg1: i32) -> (i32, i32) {
    %c0_i32 = arith.constant 0 : i32
    %c0_i32_0 = arith.constant 0 : i32
    %c0_i32_1 = arith.constant 0 : i32
    return %c0_i32, %c0_i32_0 : i32, i32
  }
  func.func @transform_2(%arg0: i32, %arg1: i32) -> (i32, i32) {
    %c0_i32 = arith.constant 0 : i32
    %c0_i32_0 = arith.constant 0 : i32
    %c0_i32_1 = arith.constant 0 : i32
    return %c0_i32, %c0_i32_0 : i32, i32
  }
  func.func @transform_3(%arg0: i32, %arg1: i32) -> (i32, i32) {
    %c0_i32 = arith.constant 0 : i32
    %c0_i32_0 = arith.constant 0 : i32
    %c0_i32_1 = arith.constant 0 : i32
    return %c0_i32, %c0_i32_0 : i32, i32
  }
  func.func @transform_4(%arg0: i32, %arg1: i32) -> (i32, i32) {
    %c0_i32 = arith.constant 0 : i32
    %c0_i32_0 = arith.constant 0 : i32
    return %arg1, %c0_i32 : i32, i32
  }
}

module attributes {stable_mosaic.version = 11 : i64} {
  func.func @_conv_bn_act_kernel(%arg0: i32, %arg1: i32, %arg2: memref<128x256xbf16, #tpu.memory_space<vmem>>, %arg3: memref<256x128xbf16, #tpu.memory_space<vmem>>, %arg4: memref<1x128xf32, #tpu.memory_space<vmem>>, %arg5: memref<1x128xf32, #tpu.memory_space<vmem>>, %arg6: memref<128x128xbf16, #tpu.memory_space<vmem>>, %arg7: memref<1x128xf32, #tpu.memory_space<vmem>>, %arg8: memref<1x128xf32, #tpu.memory_space<vmem>>) attributes {dimension_semantics = [#tpu.dimension_semantics<arbitrary>, #tpu.dimension_semantics<arbitrary>], iteration_bounds = array<i64: 2, 1>, scalar_prefetch = 0 : i64, scratch_operands = 2 : i64, tpu.core_type = #tpu.core_type<tc>, window_params = [{transform_indices = @transform_0, window_bounds = array<i64: 128, 256>}, {pipeline_mode = #tpu.pipeline_mode<synchronous>, transform_indices = @transform_1, window_bounds = array<i64: 256, 128>}, {pipeline_mode = #tpu.pipeline_mode<synchronous>, transform_indices = @transform_2, window_bounds = array<i64: 1, 128>}, {pipeline_mode = #tpu.pipeline_mode<synchronous>, transform_indices = @transform_3, window_bounds = array<i64: 1, 128>}, {transform_indices = @transform_4, window_bounds = array<i64: 128, 128>}]} {
    %c0 = arith.constant 0 : index
    %c0_0 = arith.constant 0 : index
    %0 = vector.load %arg2[%c0, %c0_0] : memref<128x256xbf16, #tpu.memory_space<vmem>>, vector<128x256xbf16>
    %c0_1 = arith.constant 0 : index
    %c0_2 = arith.constant 0 : index
    %1 = vector.load %arg3[%c0_1, %c0_2] : memref<256x128xbf16, #tpu.memory_space<vmem>>, vector<256x128xbf16>
    %cst = arith.constant dense<0.000000e+00> : vector<128x128xf32>
    %2 = tpu.matmul %0, %1, %cst {dimension_numbers = #tpu.dot_dimension_numbers<[1], [0], [0], [1], [0, 0, 1, 1], [], []>} : vector<128x256xbf16>, vector<256x128xbf16>, vector<128x128xf32> -> vector<128x128xf32>
    %c0_i32 = arith.constant 0 : i32
    %3 = arith.cmpi eq, %arg0, %c0_i32 : i32
    %c0_i32_3 = arith.constant 0 : i32
    %4 = arith.cmpi eq, %arg1, %c0_i32_3 : i32
    %5 = arith.andi %3, %4 : i1
    %6 = arith.extui %5 : i1 to i32
    %c0_i32_4 = arith.constant 0 : i32
    %7 = arith.cmpi ne, %6, %c0_i32_4 : i32
    scf.if %7 {
      %cst_8 = arith.constant 0.000000e+00 : f32
      %14 = vector.broadcast %cst_8 : f32 to vector<1x128xf32>
      %c0_9 = arith.constant 0 : index
      %c0_10 = arith.constant 0 : index
      %15 = vector.load %arg7[%c0_9, %c0_10] : memref<1x128xf32, #tpu.memory_space<vmem>>, vector<1x128xf32>
      tpu.vector_store %arg7[%c0_9, %c0_10], %14 {strides = array<i32>} : memref<1x128xf32, #tpu.memory_space<vmem>>, vector<1x128xf32>,
      %cst_11 = arith.constant 0.000000e+00 : f32
      %16 = vector.broadcast %cst_11 : f32 to vector<1x128xf32>
      %c0_12 = arith.constant 0 : index
      %c0_13 = arith.constant 0 : index
      %17 = vector.load %arg8[%c0_12, %c0_13] : memref<1x128xf32, #tpu.memory_space<vmem>>, vector<1x128xf32>
      tpu.vector_store %arg8[%c0_12, %c0_13], %16 {strides = array<i32>} : memref<1x128xf32, #tpu.memory_space<vmem>>, vector<1x128xf32>,
    } else {
    }
    %c0_i32_5 = arith.constant 0 : i32
    %8 = arith.cmpi eq, %arg0, %c0_i32_5 : i32
    %9 = arith.extui %8 : i1 to i32
    %c0_i32_6 = arith.constant 0 : i32
    %10 = arith.cmpi ne, %9, %c0_i32_6 : i32
    scf.if %10 {
      %c0_8 = arith.constant 0 : index
      %c0_9 = arith.constant 0 : index
      %14 = vector.load %arg7[%c0_8, %c0_9] : memref<1x128xf32, #tpu.memory_space<vmem>>, vector<1x128xf32>
      %cst_10 = arith.constant dense<0.000000e+00> : vector<128xf32>
      %15 = vector.multi_reduction <add>, %2, %cst_10 [0] : vector<128x128xf32> to vector<128xf32>
      %16 = vector.shape_cast %15 : vector<128xf32> to vector<1x128xf32>
      %17 = arith.addf %14, %16 : vector<1x128xf32>
      %c0_11 = arith.constant 0 : index
      %c0_12 = arith.constant 0 : index
      %18 = vector.load %arg7[%c0_11, %c0_12] : memref<1x128xf32, #tpu.memory_space<vmem>>, vector<1x128xf32>
      tpu.vector_store %arg7[%c0_11, %c0_12], %17 {strides = array<i32>} : memref<1x128xf32, #tpu.memory_space<vmem>>, vector<1x128xf32>,
      %c0_13 = arith.constant 0 : index
      %c0_14 = arith.constant 0 : index
      %19 = vector.load %arg8[%c0_13, %c0_14] : memref<1x128xf32, #tpu.memory_space<vmem>>, vector<1x128xf32>
      %20 = arith.mulf %2, %2 : vector<128x128xf32>
      %cst_15 = arith.constant dense<0.000000e+00> : vector<128xf32>
      %21 = vector.multi_reduction <add>, %20, %cst_15 [0] : vector<128x128xf32> to vector<128xf32>
      %22 = vector.shape_cast %21 : vector<128xf32> to vector<1x128xf32>
      %23 = arith.addf %19, %22 : vector<1x128xf32>
      %c0_16 = arith.constant 0 : index
      %c0_17 = arith.constant 0 : index
      %24 = vector.load %arg8[%c0_16, %c0_17] : memref<1x128xf32, #tpu.memory_space<vmem>>, vector<1x128xf32>
      tpu.vector_store %arg8[%c0_16, %c0_17], %23 {strides = array<i32>} : memref<1x128xf32, #tpu.memory_space<vmem>>, vector<1x128xf32>,
      %cst_18 = arith.constant 0.000000e+00 : bf16
      %25 = vector.broadcast %cst_18 : bf16 to vector<128x128xbf16>
      %c0_19 = arith.constant 0 : index
      %c0_20 = arith.constant 0 : index
      %26 = vector.load %arg6[%c0_19, %c0_20] : memref<128x128xbf16, #tpu.memory_space<vmem>>, vector<128x128xbf16>
      tpu.vector_store %arg6[%c0_19, %c0_20], %25 {strides = array<i32>} : memref<128x128xbf16, #tpu.memory_space<vmem>>, vector<128x128xbf16>,
    } else {
    }
    %c1_i32 = arith.constant 1 : i32
    %11 = arith.cmpi eq, %arg0, %c1_i32 : i32
    %12 = arith.extui %11 : i1 to i32
    %c0_i32_7 = arith.constant 0 : i32
    %13 = arith.cmpi ne, %12, %c0_i32_7 : i32
    scf.if %13 {
      %c0_8 = arith.constant 0 : index
      %c0_9 = arith.constant 0 : index
      %14 = vector.load %arg7[%c0_8, %c0_9] : memref<1x128xf32, #tpu.memory_space<vmem>>, vector<1x128xf32>
      %cst_10 = arith.constant 7.812500e-03 : f32
      %15 = vector.broadcast %cst_10 : f32 to vector<1x128xf32>
      %16 = arith.mulf %14, %15 : vector<1x128xf32>
      %c0_11 = arith.constant 0 : index
      %c0_12 = arith.constant 0 : index
      %17 = vector.load %arg8[%c0_11, %c0_12] : memref<1x128xf32, #tpu.memory_space<vmem>>, vector<1x128xf32>
      %cst_13 = arith.constant 7.812500e-03 : f32
      %18 = vector.broadcast %cst_13 : f32 to vector<1x128xf32>
      %19 = arith.mulf %17, %18 : vector<1x128xf32>
      %20 = arith.mulf %16, %16 : vector<1x128xf32>
      %21 = arith.subf %19, %20 : vector<1x128xf32>
      %cst_14 = arith.constant 9.99999974E-6 : f32
      %22 = vector.broadcast %cst_14 : f32 to vector<1x128xf32>
      %23 = arith.addf %21, %22 : vector<1x128xf32>
      %24 = math.rsqrt %23 : vector<1x128xf32>
      %c0_15 = arith.constant 0 : index
      %c0_16 = arith.constant 0 : index
      %25 = vector.load %arg4[%c0_15, %c0_16] : memref<1x128xf32, #tpu.memory_space<vmem>>, vector<1x128xf32>
      %26 = arith.mulf %25, %24 : vector<1x128xf32>
      %c0_17 = arith.constant 0 : index
      %c0_18 = arith.constant 0 : index
      %27 = vector.load %arg5[%c0_17, %c0_18] : memref<1x128xf32, #tpu.memory_space<vmem>>, vector<1x128xf32>
      %28 = arith.mulf %16, %26 : vector<1x128xf32>
      %29 = arith.subf %27, %28 : vector<1x128xf32>
      %30 = vector.broadcast %26 : vector<1x128xf32> to vector<128x128xf32>
      %31 = arith.mulf %2, %30 : vector<128x128xf32>
      %32 = vector.broadcast %29 : vector<1x128xf32> to vector<128x128xf32>
      %33 = arith.addf %31, %32 : vector<128x128xf32>
      %cst_19 = arith.constant 2.000000e-01 : f32
      %34 = vector.broadcast %cst_19 : f32 to vector<128x128xf32>
      %35 = arith.mulf %34, %33 : vector<128x128xf32>
      %36 = arith.maximumf %33, %35 : vector<128x128xf32>
      %37 = arith.truncf %36 : vector<128x128xf32> to vector<128x128xbf16>
      %c0_20 = arith.constant 0 : index
      %c0_21 = arith.constant 0 : index
      %38 = vector.load %arg6[%c0_20, %c0_21] : memref<128x128xbf16, #tpu.memory_space<vmem>>, vector<128x128xbf16>
      tpu.vector_store %arg6[%c0_20, %c0_21], %37 {strides = array<i32>} : memref<128x128xbf16, #tpu.memory_space<vmem>>, vector<128x128xbf16>,
    } else {
    }
    return
  }
  func.func @transform_0(%arg0: i32, %arg1: i32) -> (i32, i32) {
    %c0_i32 = arith.constant 0 : i32
    %c0_i32_0 = arith.constant 0 : i32
    return %arg1, %c0_i32 : i32, i32
  }
  func.func @transform_1(%arg0: i32, %arg1: i32) -> (i32, i32) {
    %c0_i32 = arith.constant 0 : i32
    %c0_i32_0 = arith.constant 0 : i32
    %c0_i32_1 = arith.constant 0 : i32
    return %c0_i32, %c0_i32_0 : i32, i32
  }
  func.func @transform_2(%arg0: i32, %arg1: i32) -> (i32, i32) {
    %c0_i32 = arith.constant 0 : i32
    %c0_i32_0 = arith.constant 0 : i32
    %c0_i32_1 = arith.constant 0 : i32
    return %c0_i32, %c0_i32_0 : i32, i32
  }
  func.func @transform_3(%arg0: i32, %arg1: i32) -> (i32, i32) {
    %c0_i32 = arith.constant 0 : i32
    %c0_i32_0 = arith.constant 0 : i32
    %c0_i32_1 = arith.constant 0 : i32
    return %c0_i32, %c0_i32_0 : i32, i32
  }
  func.func @transform_4(%arg0: i32, %arg1: i32) -> (i32, i32) {
    %c0_i32 = arith.constant 0 : i32
    %c0_i32_0 = arith.constant 0 : i32
    return %arg1, %c0_i32 : i32, i32
  }
}

module attributes {stable_mosaic.version = 11 : i64} {
  func.func @_conv_bn_act_kernel(%arg0: i32, %arg1: i32, %arg2: memref<32x512xbf16, #tpu.memory_space<vmem>>, %arg3: memref<512x128xbf16, #tpu.memory_space<vmem>>, %arg4: memref<1x128xf32, #tpu.memory_space<vmem>>, %arg5: memref<1x128xf32, #tpu.memory_space<vmem>>, %arg6: memref<32x128xbf16, #tpu.memory_space<vmem>>, %arg7: memref<1x128xf32, #tpu.memory_space<vmem>>, %arg8: memref<1x128xf32, #tpu.memory_space<vmem>>) attributes {dimension_semantics = [#tpu.dimension_semantics<arbitrary>, #tpu.dimension_semantics<arbitrary>], iteration_bounds = array<i64: 2, 1>, scalar_prefetch = 0 : i64, scratch_operands = 2 : i64, tpu.core_type = #tpu.core_type<tc>, window_params = [{transform_indices = @transform_0, window_bounds = array<i64: 32, 512>}, {pipeline_mode = #tpu.pipeline_mode<synchronous>, transform_indices = @transform_1, window_bounds = array<i64: 512, 128>}, {pipeline_mode = #tpu.pipeline_mode<synchronous>, transform_indices = @transform_2, window_bounds = array<i64: 1, 128>}, {pipeline_mode = #tpu.pipeline_mode<synchronous>, transform_indices = @transform_3, window_bounds = array<i64: 1, 128>}, {transform_indices = @transform_4, window_bounds = array<i64: 32, 128>}]} {
    %c0 = arith.constant 0 : index
    %c0_0 = arith.constant 0 : index
    %0 = vector.load %arg2[%c0, %c0_0] : memref<32x512xbf16, #tpu.memory_space<vmem>>, vector<32x512xbf16>
    %c0_1 = arith.constant 0 : index
    %c0_2 = arith.constant 0 : index
    %1 = vector.load %arg3[%c0_1, %c0_2] : memref<512x128xbf16, #tpu.memory_space<vmem>>, vector<512x128xbf16>
    %cst = arith.constant dense<0.000000e+00> : vector<32x128xf32>
    %2 = tpu.matmul %0, %1, %cst {dimension_numbers = #tpu.dot_dimension_numbers<[1], [0], [0], [1], [0, 0, 1, 1], [], []>} : vector<32x512xbf16>, vector<512x128xbf16>, vector<32x128xf32> -> vector<32x128xf32>
    %c0_i32 = arith.constant 0 : i32
    %3 = arith.cmpi eq, %arg0, %c0_i32 : i32
    %c0_i32_3 = arith.constant 0 : i32
    %4 = arith.cmpi eq, %arg1, %c0_i32_3 : i32
    %5 = arith.andi %3, %4 : i1
    %6 = arith.extui %5 : i1 to i32
    %c0_i32_4 = arith.constant 0 : i32
    %7 = arith.cmpi ne, %6, %c0_i32_4 : i32
    scf.if %7 {
      %cst_8 = arith.constant 0.000000e+00 : f32
      %14 = vector.broadcast %cst_8 : f32 to vector<1x128xf32>
      %c0_9 = arith.constant 0 : index
      %c0_10 = arith.constant 0 : index
      %15 = vector.load %arg7[%c0_9, %c0_10] : memref<1x128xf32, #tpu.memory_space<vmem>>, vector<1x128xf32>
      tpu.vector_store %arg7[%c0_9, %c0_10], %14 {strides = array<i32>} : memref<1x128xf32, #tpu.memory_space<vmem>>, vector<1x128xf32>,
      %cst_11 = arith.constant 0.000000e+00 : f32
      %16 = vector.broadcast %cst_11 : f32 to vector<1x128xf32>
      %c0_12 = arith.constant 0 : index
      %c0_13 = arith.constant 0 : index
      %17 = vector.load %arg8[%c0_12, %c0_13] : memref<1x128xf32, #tpu.memory_space<vmem>>, vector<1x128xf32>
      tpu.vector_store %arg8[%c0_12, %c0_13], %16 {strides = array<i32>} : memref<1x128xf32, #tpu.memory_space<vmem>>, vector<1x128xf32>,
    } else {
    }
    %c0_i32_5 = arith.constant 0 : i32
    %8 = arith.cmpi eq, %arg0, %c0_i32_5 : i32
    %9 = arith.extui %8 : i1 to i32
    %c0_i32_6 = arith.constant 0 : i32
    %10 = arith.cmpi ne, %9, %c0_i32_6 : i32
    scf.if %10 {
      %c0_8 = arith.constant 0 : index
      %c0_9 = arith.constant 0 : index
      %14 = vector.load %arg7[%c0_8, %c0_9] : memref<1x128xf32, #tpu.memory_space<vmem>>, vector<1x128xf32>
      %cst_10 = arith.constant dense<0.000000e+00> : vector<128xf32>
      %15 = vector.multi_reduction <add>, %2, %cst_10 [0] : vector<32x128xf32> to vector<128xf32>
      %16 = vector.shape_cast %15 : vector<128xf32> to vector<1x128xf32>
      %17 = arith.addf %14, %16 : vector<1x128xf32>
      %c0_11 = arith.constant 0 : index
      %c0_12 = arith.constant 0 : index
      %18 = vector.load %arg7[%c0_11, %c0_12] : memref<1x128xf32, #tpu.memory_space<vmem>>, vector<1x128xf32>
      tpu.vector_store %arg7[%c0_11, %c0_12], %17 {strides = array<i32>} : memref<1x128xf32, #tpu.memory_space<vmem>>, vector<1x128xf32>,
      %c0_13 = arith.constant 0 : index
      %c0_14 = arith.constant 0 : index
      %19 = vector.load %arg8[%c0_13, %c0_14] : memref<1x128xf32, #tpu.memory_space<vmem>>, vector<1x128xf32>
      %20 = arith.mulf %2, %2 : vector<32x128xf32>
      %cst_15 = arith.constant dense<0.000000e+00> : vector<128xf32>
      %21 = vector.multi_reduction <add>, %20, %cst_15 [0] : vector<32x128xf32> to vector<128xf32>
      %22 = vector.shape_cast %21 : vector<128xf32> to vector<1x128xf32>
      %23 = arith.addf %19, %22 : vector<1x128xf32>
      %c0_16 = arith.constant 0 : index
      %c0_17 = arith.constant 0 : index
      %24 = vector.load %arg8[%c0_16, %c0_17] : memref<1x128xf32, #tpu.memory_space<vmem>>, vector<1x128xf32>
      tpu.vector_store %arg8[%c0_16, %c0_17], %23 {strides = array<i32>} : memref<1x128xf32, #tpu.memory_space<vmem>>, vector<1x128xf32>,
      %cst_18 = arith.constant 0.000000e+00 : bf16
      %25 = vector.broadcast %cst_18 : bf16 to vector<32x128xbf16>
      %c0_19 = arith.constant 0 : index
      %c0_20 = arith.constant 0 : index
      %26 = vector.load %arg6[%c0_19, %c0_20] : memref<32x128xbf16, #tpu.memory_space<vmem>>, vector<32x128xbf16>
      tpu.vector_store %arg6[%c0_19, %c0_20], %25 {strides = array<i32>} : memref<32x128xbf16, #tpu.memory_space<vmem>>, vector<32x128xbf16>,
    } else {
    }
    %c1_i32 = arith.constant 1 : i32
    %11 = arith.cmpi eq, %arg0, %c1_i32 : i32
    %12 = arith.extui %11 : i1 to i32
    %c0_i32_7 = arith.constant 0 : i32
    %13 = arith.cmpi ne, %12, %c0_i32_7 : i32
    scf.if %13 {
      %c0_8 = arith.constant 0 : index
      %c0_9 = arith.constant 0 : index
      %14 = vector.load %arg7[%c0_8, %c0_9] : memref<1x128xf32, #tpu.memory_space<vmem>>, vector<1x128xf32>
      %cst_10 = arith.constant 3.125000e-02 : f32
      %15 = vector.broadcast %cst_10 : f32 to vector<1x128xf32>
      %16 = arith.mulf %14, %15 : vector<1x128xf32>
      %c0_11 = arith.constant 0 : index
      %c0_12 = arith.constant 0 : index
      %17 = vector.load %arg8[%c0_11, %c0_12] : memref<1x128xf32, #tpu.memory_space<vmem>>, vector<1x128xf32>
      %cst_13 = arith.constant 3.125000e-02 : f32
      %18 = vector.broadcast %cst_13 : f32 to vector<1x128xf32>
      %19 = arith.mulf %17, %18 : vector<1x128xf32>
      %20 = arith.mulf %16, %16 : vector<1x128xf32>
      %21 = arith.subf %19, %20 : vector<1x128xf32>
      %cst_14 = arith.constant 9.99999974E-6 : f32
      %22 = vector.broadcast %cst_14 : f32 to vector<1x128xf32>
      %23 = arith.addf %21, %22 : vector<1x128xf32>
      %24 = math.rsqrt %23 : vector<1x128xf32>
      %c0_15 = arith.constant 0 : index
      %c0_16 = arith.constant 0 : index
      %25 = vector.load %arg4[%c0_15, %c0_16] : memref<1x128xf32, #tpu.memory_space<vmem>>, vector<1x128xf32>
      %26 = arith.mulf %25, %24 : vector<1x128xf32>
      %c0_17 = arith.constant 0 : index
      %c0_18 = arith.constant 0 : index
      %27 = vector.load %arg5[%c0_17, %c0_18] : memref<1x128xf32, #tpu.memory_space<vmem>>, vector<1x128xf32>
      %28 = arith.mulf %16, %26 : vector<1x128xf32>
      %29 = arith.subf %27, %28 : vector<1x128xf32>
      %30 = vector.broadcast %26 : vector<1x128xf32> to vector<32x128xf32>
      %31 = arith.mulf %2, %30 : vector<32x128xf32>
      %32 = vector.broadcast %29 : vector<1x128xf32> to vector<32x128xf32>
      %33 = arith.addf %31, %32 : vector<32x128xf32>
      %cst_19 = arith.constant 2.000000e-01 : f32
      %34 = vector.broadcast %cst_19 : f32 to vector<32x128xf32>
      %35 = arith.mulf %34, %33 : vector<32x128xf32>
      %36 = arith.maximumf %33, %35 : vector<32x128xf32>
      %37 = arith.truncf %36 : vector<32x128xf32> to vector<32x128xbf16>
      %c0_20 = arith.constant 0 : index
      %c0_21 = arith.constant 0 : index
      %38 = vector.load %arg6[%c0_20, %c0_21] : memref<32x128xbf16, #tpu.memory_space<vmem>>, vector<32x128xbf16>
      tpu.vector_store %arg6[%c0_20, %c0_21], %37 {strides = array<i32>} : memref<32x128xbf16, #tpu.memory_space<vmem>>, vector<32x128xbf16>,
    } else {
    }
    return
  }
  func.func @transform_0(%arg0: i32, %arg1: i32) -> (i32, i32) {
    %c0_i32 = arith.constant 0 : i32
    %c0_i32_0 = arith.constant 0 : i32
    return %arg1, %c0_i32 : i32, i32
  }
  func.func @transform_1(%arg0: i32, %arg1: i32) -> (i32, i32) {
    %c0_i32 = arith.constant 0 : i32
    %c0_i32_0 = arith.constant 0 : i32
    %c0_i32_1 = arith.constant 0 : i32
    return %c0_i32, %c0_i32_0 : i32, i32
  }
  func.func @transform_2(%arg0: i32, %arg1: i32) -> (i32, i32) {
    %c0_i32 = arith.constant 0 : i32
    %c0_i32_0 = arith.constant 0 : i32
    %c0_i32_1 = arith.constant 0 : i32
    return %c0_i32, %c0_i32_0 : i32, i32
  }
  func.func @transform_3(%arg0: i32, %arg1: i32) -> (i32, i32) {
    %c0_i32 = arith.constant 0 : i32
    %c0_i32_0 = arith.constant 0 : i32
    %c0_i32_1 = arith.constant 0 : i32
    return %c0_i32, %c0_i32_0 : i32, i32
  }
  func.func @transform_4(%arg0: i32, %arg1: i32) -> (i32, i32) {
    %c0_i32 = arith.constant 0 : i32
    %c0_i32_0 = arith.constant 0 : i32
    return %arg1, %c0_i32 : i32, i32
  }
}

module attributes {stable_mosaic.version = 11 : i64} {
  func.func @_conv_bias_act_kernel(%arg0: i32, %arg1: memref<16x1024xbf16, #tpu.memory_space<vmem>>, %arg2: memref<1024x128xbf16, #tpu.memory_space<vmem>>, %arg3: memref<1x128xf32, #tpu.memory_space<vmem>>, %arg4: memref<16x128xf32, #tpu.memory_space<vmem>>) attributes {dimension_semantics = [#tpu.dimension_semantics<parallel>], iteration_bounds = array<i64: 1>, scalar_prefetch = 0 : i64, scratch_operands = 0 : i64, tpu.core_type = #tpu.core_type<tc>, window_params = [{transform_indices = @transform_0, window_bounds = array<i64: 16, 1024>}, {pipeline_mode = #tpu.pipeline_mode<synchronous>, transform_indices = @transform_1, window_bounds = array<i64: 1024, 128>}, {pipeline_mode = #tpu.pipeline_mode<synchronous>, transform_indices = @transform_2, window_bounds = array<i64: 1, 128>}, {transform_indices = @transform_3, window_bounds = array<i64: 16, 128>}]} {
    %c0 = arith.constant 0 : index
    %c0_0 = arith.constant 0 : index
    %0 = vector.load %arg1[%c0, %c0_0] : memref<16x1024xbf16, #tpu.memory_space<vmem>>, vector<16x1024xbf16>
    %c0_1 = arith.constant 0 : index
    %c0_2 = arith.constant 0 : index
    %1 = vector.load %arg2[%c0_1, %c0_2] : memref<1024x128xbf16, #tpu.memory_space<vmem>>, vector<1024x128xbf16>
    %cst = arith.constant dense<0.000000e+00> : vector<16x128xf32>
    %2 = tpu.matmul %0, %1, %cst {dimension_numbers = #tpu.dot_dimension_numbers<[1], [0], [0], [1], [0, 0, 1, 1], [], []>} : vector<16x1024xbf16>, vector<1024x128xbf16>, vector<16x128xf32> -> vector<16x128xf32>
    %c0_3 = arith.constant 0 : index
    %c0_4 = arith.constant 0 : index
    %3 = vector.load %arg3[%c0_3, %c0_4] : memref<1x128xf32, #tpu.memory_space<vmem>>, vector<1x128xf32>
    %4 = vector.broadcast %3 : vector<1x128xf32> to vector<16x128xf32>
    %5 = arith.addf %2, %4 : vector<16x128xf32>
    %cst_5 = arith.constant 0.000000e+00 : f32
    %6 = vector.broadcast %cst_5 : f32 to vector<16x128xf32>
    %7 = arith.subf %6, %5 : vector<16x128xf32>
    %8 = math.exp %7 : vector<16x128xf32>
    %cst_6 = arith.constant 1.000000e+00 : f32
    %9 = vector.broadcast %cst_6 : f32 to vector<16x128xf32>
    %10 = arith.addf %9, %8 : vector<16x128xf32>
    %11 = tpu.reciprocal %10 {approx = true} : vector<16x128xf32> -> vector<16x128xf32>
    %c0_7 = arith.constant 0 : index
    %c0_8 = arith.constant 0 : index
    %12 = vector.load %arg4[%c0_7, %c0_8] : memref<16x128xf32, #tpu.memory_space<vmem>>, vector<16x128xf32>
    tpu.vector_store %arg4[%c0_7, %c0_8], %11 {strides = array<i32>} : memref<16x128xf32, #tpu.memory_space<vmem>>, vector<16x128xf32>,
    return
  }
  func.func @transform_0(%arg0: i32) -> (i32, i32) {
    %c0_i32 = arith.constant 0 : i32
    %c0_i32_0 = arith.constant 0 : i32
    return %arg0, %c0_i32 : i32, i32
  }
  func.func @transform_1(%arg0: i32) -> (i32, i32) {
    %c0_i32 = arith.constant 0 : i32
    %c0_i32_0 = arith.constant 0 : i32
    %c0_i32_1 = arith.constant 0 : i32
    return %c0_i32, %c0_i32_0 : i32, i32
  }
  func.func @transform_2(%arg0: i32) -> (i32, i32) {
    %c0_i32 = arith.constant 0 : i32
    %c0_i32_0 = arith.constant 0 : i32
    %c0_i32_1 = arith.constant 0 : i32
    return %c0_i32, %c0_i32_0 : i32, i32
  }
  func.func @transform_3(%arg0: i32) -> (i32, i32) {
    %c0_i32 = arith.constant 0 : i32
    %c0_i32_0 = arith.constant 0 : i32
    return %arg0, %c0_i32 : i32, i32
  }
}

</mosaic_0001>

<llo_original>
// kernel: _lambda_.5
$region0: #{_lambda_.5}
  #allocation0 [shape = 'u32[]', space=smem, size = 0x4, offset = 0x4, fixed_abs, tag = 'smem constant byte address 0x4 - core index']
  #allocation1 [shape = 'u32[72,128]{1,0:T(1,128)}', space=vmem, size = 0x9000, scoped, tag = 'internal scratch']
  %s0 = inlined_call_operand.vmem [shape: bf16[2048,128], index: 0, kind: input, shape index: {}]
  %s1 = inlined_call_operand.vmem [shape: bf16[128,128], index: 1, kind: input, shape index: {}]
  %s2 = inlined_call_operand.vmem [shape: f32[1,128], index: 2, kind: input, shape index: {}]
  %s3 = inlined_call_operand.vmem [shape: bf16[2048,128], index: 3, kind: output, shape index: {}]
  %s4 = sld [smem:[#allocation0]]
  $region45: #{_lambda_.5} parent=0
    _
  %s6 = ssub.s32 1, %s4
  %s7 = scalar_select 0, %s6, %s4
  loop: start=0, step=1, limit=4
  $region2: #{_lambda_.5} parent=0 // loop_pre_header
    _
  $region3: #{_lambda_.5} parent=0 // loop_header
    %s9 = sphi 0, %s13
    %p10 = scmp.ge.s32.totalorder %s9, 4
    %s19 = sphi 0, %s21
    %s22 = sphi 0, %s19
    %s23 = sphi 0, %s22
    %s39 = sphi 0, %s23
    %s43 = sphi 0, %s43
    %s45 = sphi 0, %s43
    %s46 = sphi 0, %s45
    %s60 = sphi 0, %s46
    %s64 = sphi 0, %s64
    %s66 = sphi 0, %s64
    %s67 = sphi 0, %s66
    %s81 = sphi 0, %s67
    %s87 = sphi 0, %s89
    %s90 = sphi 0, %s87
    %s91 = sphi 0, %s90
    %s107 = sphi 0, %s91
  $region4: #{_lambda_.5} parent=0 // loop_header_branch
    %12 = sbr.rel (%p10) target = $region8
  $region5: #{_lambda_.5} parent=0 // loop_body
    %s14 = ssub.s32 %s9, 1
    %s15 = ssub.s32 %s9, 2
    %s16 = sadd.s32 %s9, 1
    %s17 = ssub.s32 %s9, %s16
    %p18 = scmp.eq.s32.totalorder %s17, 0
    %s20 = sadd.s32 %s19, 1
    %s21 = scalar_select %p18, %s19, %s20
    %p24 = pneg %p18
    %p25 = scmp.eq.s32.totalorder %s9, 1
    %p26 = por %p24, %p25
    %p27 = scmp.ne.s32.totalorder %s19, %s22
    %p28 = scmp.eq.s32.totalorder %s9, 0
    %p29 = por %p27, %p28
    %p30 = scmp.ne.s32.totalorder %s19, %s22
    %p31 = scmp.eq.s32.totalorder %s14, 1
    %p32 = por %p30, %p31
    %p33 = scmp.ne.s32.totalorder %s22, %s23
    %p34 = scmp.eq.s32.totalorder %s14, 0
    %p35 = por %p33, %p34
    %p36 = scmp.ne.s32.totalorder %s22, %s23
    %p37 = scmp.eq.s32.totalorder %s15, 1
    %p38 = por %p36, %p37
    %p40 = scmp.ne.s32.totalorder %s23, %s39
    %p41 = scmp.eq.s32.totalorder %s15, 0
    %p42 = por %p40, %p41
    %s44 = sadd.s32 %s43, 1
    %p47 = scmp.eq.s32.totalorder %s9, 1
    %p48 = scmp.ne.s32.totalorder %s43, %s45
    %p49 = scmp.eq.s32.totalorder %s9, 0
    %p50 = por %p48, %p49
    %p51 = scmp.ne.s32.totalorder %s43, %s45
    %p52 = scmp.eq.s32.totalorder %s14, 1
    %p53 = por %p51, %p52
    %p54 = scmp.ne.s32.totalorder %s45, %s46
    %p55 = scmp.eq.s32.totalorder %s14, 0
    %p56 = por %p54, %p55
    %p57 = scmp.ne.s32.totalorder %s45, %s46
    %p58 = scmp.eq.s32.totalorder %s15, 1
    %p59 = por %p57, %p58
    %p61 = scmp.ne.s32.totalorder %s46, %s60
    %p62 = scmp.eq.s32.totalorder %s15, 0
    %p63 = por %p61, %p62
    %s65 = sadd.s32 %s64, 1
    %p68 = scmp.eq.s32.totalorder %s9, 1
    %p69 = scmp.ne.s32.totalorder %s64, %s66
    %p70 = scmp.eq.s32.totalorder %s9, 0
    %p71 = por %p69, %p70
    %p72 = scmp.ne.s32.totalorder %s64, %s66
    %p73 = scmp.eq.s32.totalorder %s14, 1
    %p74 = por %p72, %p73
    %p75 = scmp.ne.s32.totalorder %s66, %s67
    %p76 = scmp.eq.s32.totalorder %s14, 0
    %p77 = por %p75, %p76
    %p78 = scmp.ne.s32.totalorder %s66, %s67
    %p79 = scmp.eq.s32.totalorder %s15, 1
    %p80 = por %p78, %p79
    %p82 = scmp.ne.s32.totalorder %s67, %s81
    %p83 = scmp.eq.s32.totalorder %s15, 0
    %p84 = por %p82, %p83
    %s85 = ssub.s32 %s9, %s16
    %p86 = scmp.eq.s32.totalorder %s85, 0
    %s88 = sadd.s32 %s87, 1
    %s89 = scalar_select %p86, %s87, %s88
    %p92 = pneg %p86
    %p93 = scmp.eq.s32.totalorder %s9, 1
    %p94 = por %p92, %p93
    %p95 = scmp.ne.s32.totalorder %s87, %s90
    %p96 = scmp.eq.s32.totalorder %s9, 0
    %p97 = por %p95, %p96
    %p98 = scmp.ne.s32.totalorder %s87, %s90
    %p99 = scmp.eq.s32.totalorder %s14, 1
    %p100 = por %p98, %p99
    %p101 = scmp.ne.s32.totalorder %s90, %s91
    %p102 = scmp.eq.s32.totalorder %s14, 0
    %p103 = por %p101, %p102
    %p104 = scmp.ne.s32.totalorder %s90, %s91
    %p105 = scmp.eq.s32.totalorder %s15, 1
    %p106 = por %p104, %p105
    %p108 = scmp.ne.s32.totalorder %s91, %s107
    %p109 = scmp.eq.s32.totalorder %s15, 0
    %p110 = por %p108, %p109
    %p111 = scmp.le.s32.totalorder 1, %s9
    %p112 = scmp.lt.s32.totalorder %s9, 3
    %p113 = pnand %p111, %p112
    %p114 = pneg %p113
    // Predicated region
    $region9: #{_lambda_.5} parent=5 // pred_check
      _
    $region10: #{_lambda_.5} parent=5 // pred_check_branch
      %116 = sbr.rel (%p113) target = $region12
    $region11: #{_lambda_.5} parent=5 // pred_region
      %s117 = ssub.s32 %s9, 1
      // Predicated region
      $region13: #{_lambda_.5} parent=11 // pred_check
        %p118 = pneg %p56
      $region14: #{_lambda_.5} parent=11 // pred_check_branch
        %120 = sbr.rel (%p118) target = $region16
      $region15: #{_lambda_.5} parent=11 // pred_region
        _
      $region16: #{_lambda_.5} parent=11 // pred_fallthru
        _
      // Predicated region
      $region17: #{_lambda_.5} parent=11 // pred_check
        %p121 = pneg %p77
      $region18: #{_lambda_.5} parent=11 // pred_check_branch
        %123 = sbr.rel (%p121) target = $region20
      $region19: #{_lambda_.5} parent=11 // pred_region
        _
      $region20: #{_lambda_.5} parent=11 // pred_fallthru
        _
    $region12: #{_lambda_.5} parent=5 // pred_fallthru
      _
    %p124 = scmp.lt.s32.totalorder %s9, 2
    // Predicated region
    $region21: #{_lambda_.5} parent=5 // pred_check
      %p125 = pneg %p124
    $region22: #{_lambda_.5} parent=5 // pred_check_branch
      %127 = sbr.rel (%p125) target = $region24
    $region23: #{_lambda_.5} parent=5 // pred_region
      // Predicated region
      $region25: #{_lambda_.5} parent=23 // pred_check
        %p128 = pneg %p29
      $region26: #{_lambda_.5} parent=23 // pred_check_branch
        %130 = sbr.rel (%p128) target = $region28
      $region27: #{_lambda_.5} parent=23 // pred_region
        %s131 = smul.u32 128, %s9
        %p132 = scmp.lt.s32.totalorder %s131, 255
        %s133 = scalar_select %p132, %s131, 255
        %s134 = smul.addr %s133, 4
        %s135 = scalar_lea.vmem %s0, %s134
        %s136 = smul.u32 128, %s9
      $region28: #{_lambda_.5} parent=23 // pred_fallthru
        _
    $region24: #{_lambda_.5} parent=5 // pred_fallthru
      _
    %p137 = scmp.le.s32.totalorder 1, %s9
    %p138 = scmp.lt.s32.totalorder %s9, 3
    %p139 = pnand %p137, %p138
    %p140 = pneg %p139
    // Predicated region
    $region29: #{_lambda_.5} parent=5 // pred_check
      _
    $region30: #{_lambda_.5} parent=5 // pred_check_branch
      %142 = sbr.rel (%p139) target = $region32
    $region31: #{_lambda_.5} parent=5 // pred_region
      %s143 = ssub.s32 %s9, 1
      %s144 = smul.u32 128, %s14
      %p145 = scmp.lt.s32.totalorder %s144, 255
      %s146 = scalar_select %p145, %s144, 255
      %s147 = smul.addr %s146, 4
      %s148 = scalar_lea.vmem %s0, %s147
      %p149 = pneg %p35
      %p150 = pneg %p32
      %p151 = pneg %p56
      %p152 = pneg %p53
      %p153 = pneg %p77
      %p154 = pneg %p74
      %p155 = pneg %p103
      %p156 = pneg %p100
      %s157 = smul.u32 128, %s14
      %p158 = scmp.lt.s32.totalorder %s157, 255
      %s159 = scalar_select %p158, %s157, 255
      %s160 = smul.addr %s159, 4
      %s161 = scalar_lea.vmem %s3, %s160
      %s162 = smul.u32 128, %s14
      %p163 = scmp.lt.s32.totalorder %s162, 255
      %s164 = scalar_select %p163, %s162, 255
      %s165 = smul.addr %s164, 4
      %s166 = scalar_lea.vmem %s0, %s165
      %s167 = smul.u32 128, %s14
      %s168 = smul.u32 128, %s14
      %p169 = scmp.lt.s32.totalorder %s168, 255
      %s170 = scalar_select %p169, %s168, 255
      %s171 = smul.addr %s170, 4
      %s172 = scalar_lea.vmem %s3, %s171
      %s173 = smul.u32 128, %s14
      %v174 = vld [vmem:[%s166] sm:$0xf]
      %v175 = vld [vmem:[%s166 + $0x4] sm:$0xf]
      %v176 = vld [vmem:[%s166 + $0x8] sm:$0xf]
      %v177 = vld [vmem:[%s166 + $0xc] sm:$0xf]
      %v178 = vld [vmem:[%s166 + $0x10] sm:$0xf]
      %v179 = vld [vmem:[%s166 + $0x14] sm:$0xf]
      %v180 = vld [vmem:[%s166 + $0x18] sm:$0xf]
      %v181 = vld [vmem:[%s166 + $0x1c] sm:$0xf]
      %v182 = vld [vmem:[%s166 + $0x20] sm:$0xf]
      %v183 = vld [vmem:[%s166 + $0x24] sm:$0xf]
      %v184 = vld [vmem:[%s166 + $0x28] sm:$0xf]
      %v185 = vld [vmem:[%s166 + $0x2c] sm:$0xf]
      %v186 = vld [vmem:[%s166 + $0x30] sm:$0xf]
      %v187 = vld [vmem:[%s166 + $0x34] sm:$0xf]
      %v188 = vld [vmem:[%s166 + $0x38] sm:$0xf]
      %v189 = vld [vmem:[%s166 + $0x3c] sm:$0xf]
      %v190 = vld [vmem:[%s166 + $0x40] sm:$0xf]
      %v191 = vld [vmem:[%s166 + $0x44] sm:$0xf]
      %v192 = vld [vmem:[%s166 + $0x48] sm:$0xf]
      %v193 = vld [vmem:[%s166 + $0x4c] sm:$0xf]
      %v194 = vld [vmem:[%s166 + $0x50] sm:$0xf]
      %v195 = vld [vmem:[%s166 + $0x54] sm:$0xf]
      %v196 = vld [vmem:[%s166 + $0x58] sm:$0xf]
      %v197 = vld [vmem:[%s166 + $0x5c] sm:$0xf]
      %v198 = vld [vmem:[%s166 + $0x60] sm:$0xf]
      %v199 = vld [vmem:[%s166 + $0x64] sm:$0xf]
      %v200 = vld [vmem:[%s166 + $0x68] sm:$0xf]
      %v201 = vld [vmem:[%s166 + $0x6c] sm:$0xf]
      %v202 = vld [vmem:[%s166 + $0x70] sm:$0xf]
      %v203 = vld [vmem:[%s166 + $0x74] sm:$0xf]
      %v204 = vld [vmem:[%s166 + $0x78] sm:$0xf]
      %v205 = vld [vmem:[%s166 + $0x7c] sm:$0xf]
      %v206 = vld [vmem:[%s166 + $0x80] sm:$0xf]
      %v207 = vld [vmem:[%s166 + $0x84] sm:$0xf]
      %v208 = vld [vmem:[%s166 + $0x88] sm:$0xf]
      %v209 = vld [vmem:[%s166 + $0x8c] sm:$0xf]
      %v210 = vld [vmem:[%s166 + $0x90] sm:$0xf]
      %v211 = vld [vmem:[%s166 + $0x94] sm:$0xf]
      %v212 = vld [vmem:[%s166 + $0x98] sm:$0xf]
      %v213 = vld [vmem:[%s166 + $0x9c] sm:$0xf]
      %v214 = vld [vmem:[%s166 + $0xa0] sm:$0xf]
      %v215 = vld [vmem:[%s166 + $0xa4] sm:$0xf]
      %v216 = vld [vmem:[%s166 + $0xa8] sm:$0xf]
      %v217 = vld [vmem:[%s166 + $0xac] sm:$0xf]
      %v218 = vld [vmem:[%s166 + $0xb0] sm:$0xf]
      %v219 = vld [vmem:[%s166 + $0xb4] sm:$0xf]
      %v220 = vld [vmem:[%s166 + $0xb8] sm:$0xf]
      %v221 = vld [vmem:[%s166 + $0xbc] sm:$0xf]
      %v222 = vld [vmem:[%s166 + $0xc0] sm:$0xf]
      %v223 = vld [vmem:[%s166 + $0xc4] sm:$0xf]
      %v224 = vld [vmem:[%s166 + $0xc8] sm:$0xf]
      %v225 = vld [vmem:[%s166 + $0xcc] sm:$0xf]
      %v226 = vld [vmem:[%s166 + $0xd0] sm:$0xf]
      %v227 = vld [vmem:[%s166 + $0xd4] sm:$0xf]
      %v228 = vld [vmem:[%s166 + $0xd8] sm:$0xf]
      %v229 = vld [vmem:[%s166 + $0xdc] sm:$0xf]
      %v230 = vld [vmem:[%s166 + $0xe0] sm:$0xf]
      %v231 = vld [vmem:[%s166 + $0xe4] sm:$0xf]
      %v232 = vld [vmem:[%s166 + $0xe8] sm:$0xf]
      %v233 = vld [vmem:[%s166 + $0xec] sm:$0xf]
      %v234 = vld [vmem:[%s166 + $0xf0] sm:$0xf]
      %v235 = vld [vmem:[%s166 + $0xf4] sm:$0xf]
      %v236 = vld [vmem:[%s166 + $0xf8] sm:$0xf]
      %v237 = vld [vmem:[%s166 + $0xfc] sm:$0xf]
      %v238 = vld [vmem:[%s166 + $0x100] sm:$0xf]
      %v239 = vld [vmem:[%s166 + $0x104] sm:$0xf]
      %v240 = vld [vmem:[%s166 + $0x108] sm:$0xf]
      %v241 = vld [vmem:[%s166 + $0x10c] sm:$0xf]
      %v242 = vld [vmem:[%s166 + $0x110] sm:$0xf]
      %v243 = vld [vmem:[%s166 + $0x114] sm:$0xf]
      %v244 = vld [vmem:[%s166 + $0x118] sm:$0xf]
      %v245 = vld [vmem:[%s166 + $0x11c] sm:$0xf]
      %v246 = vld [vmem:[%s166 + $0x120] sm:$0xf]
      %v247 = vld [vmem:[%s166 + $0x124] sm:$0xf]
      %v248 = vld [vmem:[%s166 + $0x128] sm:$0xf]
      %v249 = vld [vmem:[%s166 + $0x12c] sm:$0xf]
      %v250 = vld [vmem:[%s166 + $0x130] sm:$0xf]
      %v251 = vld [vmem:[%s166 + $0x134] sm:$0xf]
      %v252 = vld [vmem:[%s166 + $0x138] sm:$0xf]
      %v253 = vld [vmem:[%s166 + $0x13c] sm:$0xf]
      %v254 = vld [vmem:[%s166 + $0x140] sm:$0xf]
      %v255 = vld [vmem:[%s166 + $0x144] sm:$0xf]
      %v256 = vld [vmem:[%s166 + $0x148] sm:$0xf]
      %v257 = vld [vmem:[%s166 + $0x14c] sm:$0xf]
      %v258 = vld [vmem:[%s166 + $0x150] sm:$0xf]
      %v259 = vld [vmem:[%s166 + $0x154] sm:$0xf]
      %v260 = vld [vmem:[%s166 + $0x158] sm:$0xf]
      %v261 = vld [vmem:[%s166 + $0x15c] sm:$0xf]
      %v262 = vld [vmem:[%s166 + $0x160] sm:$0xf]
      %v263 = vld [vmem:[%s166 + $0x164] sm:$0xf]
      %v264 = vld [vmem:[%s166 + $0x168] sm:$0xf]
      %v265 = vld [vmem:[%s166 + $0x16c] sm:$0xf]
      %v266 = vld [vmem:[%s166 + $0x170] sm:$0xf]
      %v267 = vld [vmem:[%s166 + $0x174] sm:$0xf]
      %v268 = vld [vmem:[%s166 + $0x178] sm:$0xf]
      %v269 = vld [vmem:[%s166 + $0x17c] sm:$0xf]
      %v270 = vld [vmem:[%s166 + $0x180] sm:$0xf]
      %v271 = vld [vmem:[%s166 + $0x184] sm:$0xf]
      %v272 = vld [vmem:[%s166 + $0x188] sm:$0xf]
      %v273 = vld [vmem:[%s166 + $0x18c] sm:$0xf]
      %v274 = vld [vmem:[%s166 + $0x190] sm:$0xf]
      %v275 = vld [vmem:[%s166 + $0x194] sm:$0xf]
      %v276 = vld [vmem:[%s166 + $0x198] sm:$0xf]
      %v277 = vld [vmem:[%s166 + $0x19c] sm:$0xf]
      %v278 = vld [vmem:[%s166 + $0x1a0] sm:$0xf]
      %v279 = vld [vmem:[%s166 + $0x1a4] sm:$0xf]
      %v280 = vld [vmem:[%s166 + $0x1a8] sm:$0xf]
      %v281 = vld [vmem:[%s166 + $0x1ac] sm:$0xf]
      %v282 = vld [vmem:[%s166 + $0x1b0] sm:$0xf]
      %v283 = vld [vmem:[%s166 + $0x1b4] sm:$0xf]
      %v284 = vld [vmem:[%s166 + $0x1b8] sm:$0xf]
      %v285 = vld [vmem:[%s166 + $0x1bc] sm:$0xf]
      %v286 = vld [vmem:[%s166 + $0x1c0] sm:$0xf]
      %v287 = vld [vmem:[%s166 + $0x1c4] sm:$0xf]
      %v288 = vld [vmem:[%s166 + $0x1c8] sm:$0xf]
      %v289 = vld [vmem:[%s166 + $0x1cc] sm:$0xf]
      %v290 = vld [vmem:[%s166 + $0x1d0] sm:$0xf]
      %v291 = vld [vmem:[%s166 + $0x1d4] sm:$0xf]
      %v292 = vld [vmem:[%s166 + $0x1d8] sm:$0xf]
      %v293 = vld [vmem:[%s166 + $0x1dc] sm:$0xf]
      %v294 = vld [vmem:[%s166 + $0x1e0] sm:$0xf]
      %v295 = vld [vmem:[%s166 + $0x1e4] sm:$0xf]
      %v296 = vld [vmem:[%s166 + $0x1e8] sm:$0xf]
      %v297 = vld [vmem:[%s166 + $0x1ec] sm:$0xf]
      %v298 = vld [vmem:[%s166 + $0x1f0] sm:$0xf]
      %v299 = vld [vmem:[%s166 + $0x1f4] sm:$0xf]
      %v300 = vld [vmem:[%s166 + $0x1f8] sm:$0xf]
      %v301 = vld [vmem:[%s166 + $0x1fc] sm:$0xf]
      %v302 = vld [vmem:[%s1] sm:$0xf]
      %v303 = vld [vmem:[%s1 + $0x4] sm:$0xf]
      %v304 = vld [vmem:[%s1 + $0x8] sm:$0xf]
      %v305 = vld [vmem:[%s1 + $0xc] sm:$0xf]
      %v306 = vld [vmem:[%s1 + $0x10] sm:$0xf]
      %v307 = vld [vmem:[%s1 + $0x14] sm:$0xf]
      %v308 = vld [vmem:[%s1 + $0x18] sm:$0xf]
      %v309 = vld [vmem:[%s1 + $0x1c] sm:$0xf]
      %v310 = vld [vmem:[%s1 + $0x20] sm:$0xf]
      %v311 = vld [vmem:[%s1 + $0x24] sm:$0xf]
      %v312 = vld [vmem:[%s1 + $0x28] sm:$0xf]
      %v313 = vld [vmem:[%s1 + $0x2c] sm:$0xf]
      %v314 = vld [vmem:[%s1 + $0x30] sm:$0xf]
      %v315 = vld [vmem:[%s1 + $0x34] sm:$0xf]
      %v316 = vld [vmem:[%s1 + $0x38] sm:$0xf]
      %v317 = vld [vmem:[%s1 + $0x3c] sm:$0xf]
      %v318 = vld [vmem:[%s2] sm:$0x1]
      %v320 = vperm.slane %v318, 0
      %v450 = vunpack.c.l.b16 %v174
      %v451 = vunpack.c.l.b16 %v175
      %v452 = vunpack.c.l.b16 %v176
      %v453 = vunpack.c.l.b16 %v177
      %v454 = vunpack.c.l.b16 %v178
      %v455 = vunpack.c.l.b16 %v179
      %v456 = vunpack.c.l.b16 %v180
      %v457 = vunpack.c.l.b16 %v181
      %v458 = vunpack.c.l.b16 %v182
      %v459 = vunpack.c.l.b16 %v183
      %v460 = vunpack.c.l.b16 %v184
      %v461 = vunpack.c.l.b16 %v185
      %v462 = vunpack.c.l.b16 %v186
      %v463 = vunpack.c.l.b16 %v187
      %v464 = vunpack.c.l.b16 %v188
      %v465 = vunpack.c.l.b16 %v189
      %v466 = vunpack.c.l.b16 %v190
      %v467 = vunpack.c.l.b16 %v191
      %v468 = vunpack.c.l.b16 %v192
      %v469 = vunpack.c.l.b16 %v193
      %v470 = vunpack.c.l.b16 %v194
      %v471 = vunpack.c.l.b16 %v195
      %v472 = vunpack.c.l.b16 %v196
      %v473 = vunpack.c.l.b16 %v197
      %v474 = vunpack.c.l.b16 %v198
      %v475 = vunpack.c.l.b16 %v199
      %v476 = vunpack.c.l.b16 %v200
      %v477 = vunpack.c.l.b16 %v201
      %v478 = vunpack.c.l.b16 %v202
      %v479 = vunpack.c.l.b16 %v203
      %v480 = vunpack.c.l.b16 %v204
      %v481 = vunpack.c.l.b16 %v205
      %v482 = vunpack.c.l.b16 %v206
      %v483 = vunpack.c.l.b16 %v207
      %v484 = vunpack.c.l.b16 %v208
      %v485 = vunpack.c.l.b16 %v209
      %v486 = vunpack.c.l.b16 %v210
      %v487 = vunpack.c.l.b16 %v211
      %v488 = vunpack.c.l.b16 %v212
      %v489 = vunpack.c.l.b16 %v213
      %v490 = vunpack.c.l.b16 %v214
      %v491 = vunpack.c.l.b16 %v215
      %v492 = vunpack.c.l.b16 %v216
      %v493 = vunpack.c.l.b16 %v217
      %v494 = vunpack.c.l.b16 %v218
      %v495 = vunpack.c.l.b16 %v219
      %v496 = vunpack.c.l.b16 %v220
      %v497 = vunpack.c.l.b16 %v221
      %v498 = vunpack.c.l.b16 %v222
      %v499 = vunpack.c.l.b16 %v223
      %v500 = vunpack.c.l.b16 %v224
      %v501 = vunpack.c.l.b16 %v225
      %v502 = vunpack.c.l.b16 %v226
      %v503 = vunpack.c.l.b16 %v227
      %v504 = vunpack.c.l.b16 %v228
      %v505 = vunpack.c.l.b16 %v229
      %v506 = vunpack.c.l.b16 %v230
      %v507 = vunpack.c.l.b16 %v231
      %v508 = vunpack.c.l.b16 %v232
      %v509 = vunpack.c.l.b16 %v233
      %v510 = vunpack.c.l.b16 %v234
      %v511 = vunpack.c.l.b16 %v235
      %v512 = vunpack.c.l.b16 %v236
      %v513 = vunpack.c.l.b16 %v237
      %v514 = vunpack.c.l.b16 %v238
      %v515 = vunpack.c.l.b16 %v239
      %v516 = vunpack.c.l.b16 %v240
      %v517 = vunpack.c.l.b16 %v241
      %v518 = vunpack.c.l.b16 %v242
      %v519 = vunpack.c.l.b16 %v243
      %v520 = vunpack.c.l.b16 %v244
      %v521 = vunpack.c.l.b16 %v245
      %v522 = vunpack.c.l.b16 %v246
      %v523 = vunpack.c.l.b16 %v247
      %v524 = vunpack.c.l.b16 %v248
      %v525 = vunpack.c.l.b16 %v249
      %v526 = vunpack.c.l.b16 %v250
      %v527 = vunpack.c.l.b16 %v251
      %v528 = vunpack.c.l.b16 %v252
      %v529 = vunpack.c.l.b16 %v253
      %v530 = vunpack.c.l.b16 %v254
      %v531 = vunpack.c.l.b16 %v255
      %v532 = vunpack.c.l.b16 %v256
      %v533 = vunpack.c.l.b16 %v257
      %v534 = vunpack.c.l.b16 %v258
      %v535 = vunpack.c.l.b16 %v259
      %v536 = vunpack.c.l.b16 %v260
      %v537 = vunpack.c.l.b16 %v261
      %v538 = vunpack.c.l.b16 %v262
      %v539 = vunpack.c.l.b16 %v263
      %v540 = vunpack.c.l.b16 %v264
      %v541 = vunpack.c.l.b16 %v265
      %v542 = vunpack.c.l.b16 %v266
      %v543 = vunpack.c.l.b16 %v267
      %v544 = vunpack.c.l.b16 %v268
      %v545 = vunpack.c.l.b16 %v269
      %v546 = vunpack.c.l.b16 %v270
      %v547 = vunpack.c.l.b16 %v271
      %v548 = vunpack.c.l.b16 %v272
      %v549 = vunpack.c.l.b16 %v273
      %v550 = vunpack.c.l.b16 %v274
      %v551 = vunpack.c.l.b16 %v275
      %v552 = vunpack.c.l.b16 %v276
      %v553 = vunpack.c.l.b16 %v277
      %v554 = vunpack.c.l.b16 %v278
      %v555 = vunpack.c.l.b16 %v279
      %v556 = vunpack.c.l.b16 %v280
      %v557 = vunpack.c.l.b16 %v281
      %v558 = vunpack.c.l.b16 %v282
      %v559 = vunpack.c.l.b16 %v283
      %v560 = vunpack.c.l.b16 %v284
      %v561 = vunpack.c.l.b16 %v285
      %v562 = vunpack.c.l.b16 %v286
      %v563 = vunpack.c.l.b16 %v287
      %v564 = vunpack.c.l.b16 %v288
      %v565 = vunpack.c.l.b16 %v289
      %v566 = vunpack.c.l.b16 %v290
      %v567 = vunpack.c.l.b16 %v291
      %v568 = vunpack.c.l.b16 %v292
      %v569 = vunpack.c.l.b16 %v293
      %v570 = vunpack.c.l.b16 %v294
      %v571 = vunpack.c.l.b16 %v295
      %v572 = vunpack.c.l.b16 %v296
      %v573 = vunpack.c.l.b16 %v297
      %v574 = vunpack.c.l.b16 %v298
      %v575 = vunpack.c.l.b16 %v299
      %v576 = vunpack.c.l.b16 %v300
      %v577 = vunpack.c.l.b16 %v301
      %v578 = vpack.c.b16 %v451, %v450
      %v579 = vpack.c.b16 %v453, %v452
      %v580 = vpack.c.b16 %v455, %v454
      %v581 = vpack.c.b16 %v457, %v456
      %v582 = vpack.c.b16 %v459, %v458
      %v583 = vpack.c.b16 %v461, %v460
      %v584 = vpack.c.b16 %v463, %v462
      %v585 = vpack.c.b16 %v465, %v464
      %v586 = vpack.c.b16 %v467, %v466
      %v587 = vpack.c.b16 %v469, %v468
      %v588 = vpack.c.b16 %v471, %v470
      %v589 = vpack.c.b16 %v473, %v472
      %v590 = vpack.c.b16 %v475, %v474
      %v591 = vpack.c.b16 %v477, %v476
      %v592 = vpack.c.b16 %v479, %v478
      %v593 = vpack.c.b16 %v481, %v480
      %v594 = vpack.c.b16 %v483, %v482
      %v595 = vpack.c.b16 %v485, %v484
      %v596 = vpack.c.b16 %v487, %v486
      %v597 = vpack.c.b16 %v489, %v488
      %v598 = vpack.c.b16 %v491, %v490
      %v599 = vpack.c.b16 %v493, %v492
      %v600 = vpack.c.b16 %v495, %v494
      %v601 = vpack.c.b16 %v497, %v496
      %v602 = vpack.c.b16 %v499, %v498
      %v603 = vpack.c.b16 %v501, %v500
      %v604 = vpack.c.b16 %v503, %v502
      %v605 = vpack.c.b16 %v505, %v504
      %v606 = vpack.c.b16 %v507, %v506
      %v607 = vpack.c.b16 %v509, %v508
      %v608 = vpack.c.b16 %v511, %v510
      %v609 = vpack.c.b16 %v513, %v512
      %v610 = vpack.c.b16 %v515, %v514
      %v611 = vpack.c.b16 %v517, %v516
      %v612 = vpack.c.b16 %v519, %v518
      %v613 = vpack.c.b16 %v521, %v520
      %v614 = vpack.c.b16 %v523, %v522
      %v615 = vpack.c.b16 %v525, %v524
      %v616 = vpack.c.b16 %v527, %v526
      %v617 = vpack.c.b16 %v529, %v528
      %v618 = vpack.c.b16 %v531, %v530
      %v619 = vpack.c.b16 %v533, %v532
      %v620 = vpack.c.b16 %v535, %v534
      %v621 = vpack.c.b16 %v537, %v536
      %v622 = vpack.c.b16 %v539, %v538
      %v623 = vpack.c.b16 %v541, %v540
      %v624 = vpack.c.b16 %v543, %v542
      %v625 = vpack.c.b16 %v545, %v544
      %v626 = vpack.c.b16 %v547, %v546
      %v627 = vpack.c.b16 %v549, %v548
      %v628 = vpack.c.b16 %v551, %v550
      %v629 = vpack.c.b16 %v553, %v552
      %v630 = vpack.c.b16 %v555, %v554
      %v631 = vpack.c.b16 %v557, %v556
      %v632 = vpack.c.b16 %v559, %v558
      %v633 = vpack.c.b16 %v561, %v560
      %v634 = vpack.c.b16 %v563, %v562
      %v635 = vpack.c.b16 %v565, %v564
      %v636 = vpack.c.b16 %v567, %v566
      %v637 = vpack.c.b16 %v569, %v568
      %v638 = vpack.c.b16 %v571, %v570
      %v639 = vpack.c.b16 %v573, %v572
      %v640 = vpack.c.b16 %v575, %v574
      %v641 = vpack.c.b16 %v577, %v576
      %v722 = vunpack.c.l.b16 %v302
      %v723 = vunpack.c.l.b16 %v303
      %v724 = vunpack.c.l.b16 %v304
      %v725 = vunpack.c.l.b16 %v305
      %v726 = vunpack.c.l.b16 %v306
      %v727 = vunpack.c.l.b16 %v307
      %v728 = vunpack.c.l.b16 %v308
      %v729 = vunpack.c.l.b16 %v309
      %v730 = vunpack.c.l.b16 %v310
      %v731 = vunpack.c.l.b16 %v311
      %v732 = vunpack.c.l.b16 %v312
      %v733 = vunpack.c.l.b16 %v313
      %v734 = vunpack.c.l.b16 %v314
      %v735 = vunpack.c.l.b16 %v315
      %v736 = vunpack.c.l.b16 %v316
      %v737 = vunpack.c.l.b16 %v317
      %v738 = vpack.c.b16 %v723, %v722
      %v739 = vpack.c.b16 %v725, %v724
      %v740 = vpack.c.b16 %v727, %v726
      %v741 = vpack.c.b16 %v729, %v728
      %v742 = vpack.c.b16 %v731, %v730
      %v743 = vpack.c.b16 %v733, %v732
      %v744 = vpack.c.b16 %v735, %v734
      %v745 = vpack.c.b16 %v737, %v736
      %754 = vmatpush.bf16.msra.mxu0 %v745
      %755 = vmatpush.bf16.msra.mxu0 %v744
      %756 = vmatpush.bf16.msra.mxu0 %v743
      %757 = vmatpush.bf16.msra.mxu0 %v742
      %758 = vmatpush.bf16.msra.mxu0 %v741
      %759 = vmatpush.bf16.msra.mxu0 %v740
      %760 = vmatpush.bf16.msra.mxu0 %v739
      %761 = vmatpush.bf16.msra.mxu0 %v738
      %762 = vmatmul.bf16.gmra.mxu0 %v578
      %v763 = vpop.f32.mrf.mxu0
      %v764 = vadd.f32 %v320, %v763
      %v765 = vpop.f32.mrf.mxu0
      %v766 = vadd.f32 %v320, %v765
      %767 = vmatmul.bf16.gmra.mxu0 %v579
      %v768 = vpop.f32.mrf.mxu0
      %v769 = vadd.f32 %v320, %v768
      %v770 = vpop.f32.mrf.mxu0
      %v771 = vadd.f32 %v320, %v770
      %772 = vmatmul.bf16.gmra.mxu0 %v580
      %v773 = vpop.f32.mrf.mxu0
      %v774 = vadd.f32 %v320, %v773
      %v775 = vpop.f32.mrf.mxu0
      %v776 = vadd.f32 %v320, %v775
      %777 = vmatmul.bf16.gmra.mxu0 %v581
      %v778 = vpop.f32.mrf.mxu0
      %v779 = vadd.f32 %v320, %v778
      %v780 = vpop.f32.mrf.mxu0
      %v781 = vadd.f32 %v320, %v780
      %782 = vmatmul.bf16.gmra.mxu0 %v582
      %v783 = vpop.f32.mrf.mxu0
      %v784 = vadd.f32 %v320, %v783
      %v785 = vpop.f32.mrf.mxu0
      %v786 = vadd.f32 %v320, %v785
      %787 = vmatmul.bf16.gmra.mxu0 %v583
      %v788 = vpop.f32.mrf.mxu0
      %v789 = vadd.f32 %v320, %v788
      %v790 = vpop.f32.mrf.mxu0
      %v791 = vadd.f32 %v320, %v790
      %792 = vmatmul.bf16.gmra.mxu0 %v584
      %v793 = vpop.f32.mrf.mxu0
      %v794 = vadd.f32 %v320, %v793
      %v795 = vpop.f32.mrf.mxu0
      %v796 = vadd.f32 %v320, %v795
      %797 = vmatmul.bf16.gmra.mxu0 %v585
      %v798 = vpop.f32.mrf.mxu0
      %v799 = vadd.f32 %v320, %v798
      %v800 = vpop.f32.mrf.mxu0
      %v801 = vadd.f32 %v320, %v800
      %802 = vmatmul.bf16.gmra.mxu0 %v586
      %v803 = vpop.f32.mrf.mxu0
      %v804 = vadd.f32 %v320, %v803
      %v805 = vpop.f32.mrf.mxu0
      %v806 = vadd.f32 %v320, %v805
      %807 = vmatmul.bf16.gmra.mxu0 %v587
      %v808 = vpop.f32.mrf.mxu0
      %v809 = vadd.f32 %v320, %v808
      %v810 = vpop.f32.mrf.mxu0
      %v811 = vadd.f32 %v320, %v810
      %812 = vmatmul.bf16.gmra.mxu0 %v588
      %v813 = vpop.f32.mrf.mxu0
      %v814 = vadd.f32 %v320, %v813
      %v815 = vpop.f32.mrf.mxu0
      %v816 = vadd.f32 %v320, %v815
      %817 = vmatmul.bf16.gmra.mxu0 %v589
      %v818 = vpop.f32.mrf.mxu0
      %v819 = vadd.f32 %v320, %v818
      %v820 = vpop.f32.mrf.mxu0
      %v821 = vadd.f32 %v320, %v820
      %822 = vmatmul.bf16.gmra.mxu0 %v590
      %v823 = vpop.f32.mrf.mxu0
      %v824 = vadd.f32 %v320, %v823
      %v825 = vpop.f32.mrf.mxu0
      %v826 = vadd.f32 %v320, %v825
      %827 = vmatmul.bf16.gmra.mxu0 %v591
      %v828 = vpop.f32.mrf.mxu0
      %v829 = vadd.f32 %v320, %v828
      %v830 = vpop.f32.mrf.mxu0
      %v831 = vadd.f32 %v320, %v830
      %832 = vmatmul.bf16.gmra.mxu0 %v592
      %v833 = vpop.f32.mrf.mxu0
      %v834 = vadd.f32 %v320, %v833
      %v835 = vpop.f32.mrf.mxu0
      %v836 = vadd.f32 %v320, %v835
      %837 = vmatmul.bf16.gmra.mxu0 %v593
      %v838 = vpop.f32.mrf.mxu0
      %v839 = vadd.f32 %v320, %v838
      %v840 = vpop.f32.mrf.mxu0
      %v841 = vadd.f32 %v320, %v840
      %842 = vmatmul.bf16.gmra.mxu0 %v594
      %v843 = vpop.f32.mrf.mxu0
      %v844 = vadd.f32 %v320, %v843
      %v845 = vpop.f32.mrf.mxu0
      %v846 = vadd.f32 %v320, %v845
      %847 = vmatmul.bf16.gmra.mxu0 %v595
      %v848 = vpop.f32.mrf.mxu0
      %v849 = vadd.f32 %v320, %v848
      %v850 = vpop.f32.mrf.mxu0
      %v851 = vadd.f32 %v320, %v850
      %852 = vmatmul.bf16.gmra.mxu0 %v596
      %v853 = vpop.f32.mrf.mxu0
      %v854 = vadd.f32 %v320, %v853
      %v855 = vpop.f32.mrf.mxu0
      %v856 = vadd.f32 %v320, %v855
      %857 = vmatmul.bf16.gmra.mxu0 %v597
      %v858 = vpop.f32.mrf.mxu0
      %v859 = vadd.f32 %v320, %v858
      %v860 = vpop.f32.mrf.mxu0
      %v861 = vadd.f32 %v320, %v860
      %862 = vmatmul.bf16.gmra.mxu0 %v598
      %v863 = vpop.f32.mrf.mxu0
      %v864 = vadd.f32 %v320, %v863
      %v865 = vpop.f32.mrf.mxu0
      %v866 = vadd.f32 %v320, %v865
      %867 = vmatmul.bf16.gmra.mxu0 %v599
      %v868 = vpop.f32.mrf.mxu0
      %v869 = vadd.f32 %v320, %v868
      %v870 = vpop.f32.mrf.mxu0
      %v871 = vadd.f32 %v320, %v870
      %872 = vmatmul.bf16.gmra.mxu0 %v600
      %v873 = vpop.f32.mrf.mxu0
      %v874 = vadd.f32 %v320, %v873
      %v875 = vpop.f32.mrf.mxu0
      %v876 = vadd.f32 %v320, %v875
      %877 = vmatmul.bf16.gmra.mxu0 %v601
      %v878 = vpop.f32.mrf.mxu0
      %v879 = vadd.f32 %v320, %v878
      %v880 = vpop.f32.mrf.mxu0
      %v881 = vadd.f32 %v320, %v880
      %882 = vmatmul.bf16.gmra.mxu0 %v602
      %v883 = vpop.f32.mrf.mxu0
      %v884 = vadd.f32 %v320, %v883
      %v885 = vpop.f32.mrf.mxu0
      %v886 = vadd.f32 %v320, %v885
      %887 = vmatmul.bf16.gmra.mxu0 %v603
      %v888 = vpop.f32.mrf.mxu0
      %v889 = vadd.f32 %v320, %v888
      %v890 = vpop.f32.mrf.mxu0
      %v891 = vadd.f32 %v320, %v890
      %892 = vmatmul.bf16.gmra.mxu0 %v604
      %v893 = vpop.f32.mrf.mxu0
      %v894 = vadd.f32 %v320, %v893
      %v895 = vpop.f32.mrf.mxu0
      %v896 = vadd.f32 %v320, %v895
      %897 = vmatmul.bf16.gmra.mxu0 %v605
      %v898 = vpop.f32.mrf.mxu0
      %v899 = vadd.f32 %v320, %v898
      %v900 = vpop.f32.mrf.mxu0
      %v901 = vadd.f32 %v320, %v900
      %902 = vmatmul.bf16.gmra.mxu0 %v606
      %v903 = vpop.f32.mrf.mxu0
      %v904 = vadd.f32 %v320, %v903
      %v905 = vpop.f32.mrf.mxu0
      %v906 = vadd.f32 %v320, %v905
      %907 = vmatmul.bf16.gmra.mxu0 %v607
      %v908 = vpop.f32.mrf.mxu0
      %v909 = vadd.f32 %v320, %v908
      %v910 = vpop.f32.mrf.mxu0
      %v911 = vadd.f32 %v320, %v910
      %912 = vmatmul.bf16.gmra.mxu0 %v608
      %v913 = vpop.f32.mrf.mxu0
      %v914 = vadd.f32 %v320, %v913
      %v915 = vpop.f32.mrf.mxu0
      %v916 = vadd.f32 %v320, %v915
      %917 = vmatmul.bf16.gmra.mxu0 %v609
      %v918 = vpop.f32.mrf.mxu0
      %v919 = vadd.f32 %v320, %v918
      %v920 = vpop.f32.mrf.mxu0
      %v921 = vadd.f32 %v320, %v920
      %922 = vmatmul.bf16.gmra.mxu0 %v610
      %v923 = vpop.f32.mrf.mxu0
      %v924 = vadd.f32 %v320, %v923
      %v925 = vpop.f32.mrf.mxu0
      %v926 = vadd.f32 %v320, %v925
      %927 = vmatmul.bf16.gmra.mxu0 %v611
      %v928 = vpop.f32.mrf.mxu0
      %v929 = vadd.f32 %v320, %v928
      %v930 = vpop.f32.mrf.mxu0
      %v931 = vadd.f32 %v320, %v930
      %932 = vmatmul.bf16.gmra.mxu0 %v612
      %v933 = vpop.f32.mrf.mxu0
      %v934 = vadd.f32 %v320, %v933
      %v935 = vpop.f32.mrf.mxu0
      %v936 = vadd.f32 %v320, %v935
      %937 = vmatmul.bf16.gmra.mxu0 %v613
      %v938 = vpop.f32.mrf.mxu0
      %v939 = vadd.f32 %v320, %v938
      %v940 = vpop.f32.mrf.mxu0
      %v941 = vadd.f32 %v320, %v940
      %942 = vmatmul.bf16.gmra.mxu0 %v614
      %v943 = vpop.f32.mrf.mxu0
      %v944 = vadd.f32 %v320, %v943
      %v945 = vpop.f32.mrf.mxu0
      %v946 = vadd.f32 %v320, %v945
      %947 = vmatmul.bf16.gmra.mxu0 %v615
      %v948 = vpop.f32.mrf.mxu0
      %v949 = vadd.f32 %v320, %v948
      %v950 = vpop.f32.mrf.mxu0
      %v951 = vadd.f32 %v320, %v950
      %952 = vmatmul.bf16.gmra.mxu0 %v616
      %v953 = vpop.f32.mrf.mxu0
      %v954 = vadd.f32 %v320, %v953
      %v955 = vpop.f32.mrf.mxu0
      %v956 = vadd.f32 %v320, %v955
      %957 = vmatmul.bf16.gmra.mxu0 %v617
      %v958 = vpop.f32.mrf.mxu0
      %v959 = vadd.f32 %v320, %v958
      %v960 = vpop.f32.mrf.mxu0
      %v961 = vadd.f32 %v320, %v960
      %962 = vmatmul.bf16.gmra.mxu0 %v618
      %v963 = vpop.f32.mrf.mxu0
      %v964 = vadd.f32 %v320, %v963
      %v965 = vpop.f32.mrf.mxu0
      %v966 = vadd.f32 %v320, %v965
      %967 = vmatmul.bf16.gmra.mxu0 %v619
      %v968 = vpop.f32.mrf.mxu0
      %v969 = vadd.f32 %v320, %v968
      %v970 = vpop.f32.mrf.mxu0
      %v971 = vadd.f32 %v320, %v970
      %972 = vmatmul.bf16.gmra.mxu0 %v620
      %v973 = vpop.f32.mrf.mxu0
      %v974 = vadd.f32 %v320, %v973
      %v975 = vpop.f32.mrf.mxu0
      %v976 = vadd.f32 %v320, %v975
      %977 = vmatmul.bf16.gmra.mxu0 %v621
      %v978 = vpop.f32.mrf.mxu0
      %v979 = vadd.f32 %v320, %v978
      %v980 = vpop.f32.mrf.mxu0
      %v981 = vadd.f32 %v320, %v980
      %982 = vmatmul.bf16.gmra.mxu0 %v622
      %v983 = vpop.f32.mrf.mxu0
      %v984 = vadd.f32 %v320, %v983
      %v985 = vpop.f32.mrf.mxu0
      %v986 = vadd.f32 %v320, %v985
      %987 = vmatmul.bf16.gmra.mxu0 %v623
      %v988 = vpop.f32.mrf.mxu0
      %v989 = vadd.f32 %v320, %v988
      %v990 = vpop.f32.mrf.mxu0
      %v991 = vadd.f32 %v320, %v990
      %992 = vmatmul.bf16.gmra.mxu0 %v624
      %v993 = vpop.f32.mrf.mxu0
      %v994 = vadd.f32 %v320, %v993
      %v995 = vpop.f32.mrf.mxu0
      %v996 = vadd.f32 %v320, %v995
      %997 = vmatmul.bf16.gmra.mxu0 %v625
      %v998 = vpop.f32.mrf.mxu0
      %v999 = vadd.f32 %v320, %v998
      %v1000 = vpop.f32.mrf.mxu0
      %v1001 = vadd.f32 %v320, %v1000
      %1002 = vmatmul.bf16.gmra.mxu0 %v626
      %v1003 = vpop.f32.mrf.mxu0
      %v1004 = vadd.f32 %v320, %v1003
      %v1005 = vpop.f32.mrf.mxu0
      %v1006 = vadd.f32 %v320, %v1005
      %1007 = vmatmul.bf16.gmra.mxu0 %v627
      %v1008 = vpop.f32.mrf.mxu0
      %v1009 = vadd.f32 %v320, %v1008
      %v1010 = vpop.f32.mrf.mxu0
      %v1011 = vadd.f32 %v320, %v1010
      %1012 = vmatmul.bf16.gmra.mxu0 %v628
      %v1013 = vpop.f32.mrf.mxu0
      %v1014 = vadd.f32 %v320, %v1013
      %v1015 = vpop.f32.mrf.mxu0
      %v1016 = vadd.f32 %v320, %v1015
      %1017 = vmatmul.bf16.gmra.mxu0 %v629
      %v1018 = vpop.f32.mrf.mxu0
      %v1019 = vadd.f32 %v320, %v1018
      %v1020 = vpop.f32.mrf.mxu0
      %v1021 = vadd.f32 %v320, %v1020
      %1022 = vmatmul.bf16.gmra.mxu0 %v630
      %v1023 = vpop.f32.mrf.mxu0
      %v1024 = vadd.f32 %v320, %v1023
      %v1025 = vpop.f32.mrf.mxu0
      %v1026 = vadd.f32 %v320, %v1025
      %1027 = vmatmul.bf16.gmra.mxu0 %v631
      %v1028 = vpop.f32.mrf.mxu0
      %v1029 = vadd.f32 %v320, %v1028
      %v1030 = vpop.f32.mrf.mxu0
      %v1031 = vadd.f32 %v320, %v1030
      %1032 = vmatmul.bf16.gmra.mxu0 %v632
      %v1033 = vpop.f32.mrf.mxu0
      %v1034 = vadd.f32 %v320, %v1033
      %v1035 = vpop.f32.mrf.mxu0
      %v1036 = vadd.f32 %v320, %v1035
      %1037 = vmatmul.bf16.gmra.mxu0 %v633
      %v1038 = vpop.f32.mrf.mxu0
      %v1039 = vadd.f32 %v320, %v1038
      %v1040 = vpop.f32.mrf.mxu0
      %v1041 = vadd.f32 %v320, %v1040
      %1042 = vmatmul.bf16.gmra.mxu0 %v634
      %v1043 = vpop.f32.mrf.mxu0
      %v1044 = vadd.f32 %v320, %v1043
      %v1045 = vpop.f32.mrf.mxu0
      %v1046 = vadd.f32 %v320, %v1045
      %1047 = vmatmul.bf16.gmra.mxu0 %v635
      %v1048 = vpop.f32.mrf.mxu0
      %v1049 = vadd.f32 %v320, %v1048
      %v1050 = vpop.f32.mrf.mxu0
      %v1051 = vadd.f32 %v320, %v1050
      %1052 = vmatmul.bf16.gmra.mxu0 %v636
      %v1053 = vpop.f32.mrf.mxu0
      %v1054 = vadd.f32 %v320, %v1053
      %v1055 = vpop.f32.mrf.mxu0
      %v1056 = vadd.f32 %v320, %v1055
      %1057 = vmatmul.bf16.gmra.mxu0 %v637
      %v1058 = vpop.f32.mrf.mxu0
      %v1059 = vadd.f32 %v320, %v1058
      %v1060 = vpop.f32.mrf.mxu0
      %v1061 = vadd.f32 %v320, %v1060
      %1062 = vmatmul.bf16.gmra.mxu0 %v638
      %v1063 = vpop.f32.mrf.mxu0
      %v1064 = vadd.f32 %v320, %v1063
      %v1065 = vpop.f32.mrf.mxu0
      %v1066 = vadd.f32 %v320, %v1065
      %1067 = vmatmul.bf16.gmra.mxu0 %v639
      %v1068 = vpop.f32.mrf.mxu0
      %v1069 = vadd.f32 %v320, %v1068
      %v1070 = vpop.f32.mrf.mxu0
      %v1071 = vadd.f32 %v320, %v1070
      %1072 = vmatmul.bf16.gmra.mxu0 %v640
      %v1073 = vpop.f32.mrf.mxu0
      %v1074 = vadd.f32 %v320, %v1073
      %v1075 = vpop.f32.mrf.mxu0
      %v1076 = vadd.f32 %v320, %v1075
      %1077 = vmatmul.bf16.gmra.mxu0 %v641
      %v1078 = vpop.f32.mrf.mxu0
      %v1079 = vadd.f32 %v320, %v1078
      %v1080 = vpop.f32.mrf.mxu0
      %v1081 = vadd.f32 %v320, %v1080
      %1082 = vdwg.mxu0
      %v1083 = vmul.f32 %v764, 0.2
      %v1084 = vmul.f32 %v766, 0.2
      %v1085 = vmul.f32 %v769, 0.2
      %v1086 = vmul.f32 %v771, 0.2
      %v1087 = vmul.f32 %v774, 0.2
      %v1088 = vmul.f32 %v776, 0.2
      %v1089 = vmul.f32 %v779, 0.2
      %v1090 = vmul.f32 %v781, 0.2
      %v1091 = vmul.f32 %v784, 0.2
      %v1092 = vmul.f32 %v786, 0.2
      %v1093 = vmul.f32 %v789, 0.2
      %v1094 = vmul.f32 %v791, 0.2
      %v1095 = vmul.f32 %v794, 0.2
      %v1096 = vmul.f32 %v796, 0.2
      %v1097 = vmul.f32 %v799, 0.2
      %v1098 = vmul.f32 %v801, 0.2
      %v1099 = vmul.f32 %v804, 0.2
      %v1100 = vmul.f32 %v806, 0.2
      %v1101 = vmul.f32 %v809, 0.2
      %v1102 = vmul.f32 %v811, 0.2
      %v1103 = vmul.f32 %v814, 0.2
      %v1104 = vmul.f32 %v816, 0.2
      %v1105 = vmul.f32 %v819, 0.2
      %v1106 = vmul.f32 %v821, 0.2
      %v1107 = vmul.f32 %v824, 0.2
      %v1108 = vmul.f32 %v826, 0.2
      %v1109 = vmul.f32 %v829, 0.2
      %v1110 = vmul.f32 %v831, 0.2
      %v1111 = vmul.f32 %v834, 0.2
      %v1112 = vmul.f32 %v836, 0.2
      %v1113 = vmul.f32 %v839, 0.2
      %v1114 = vmul.f32 %v841, 0.2
      %v1115 = vmul.f32 %v844, 0.2
      %v1116 = vmul.f32 %v846, 0.2
      %v1117 = vmul.f32 %v849, 0.2
      %v1118 = vmul.f32 %v851, 0.2
      %v1119 = vmul.f32 %v854, 0.2
      %v1120 = vmul.f32 %v856, 0.2
      %v1121 = vmul.f32 %v859, 0.2
      %v1122 = vmul.f32 %v861, 0.2
      %v1123 = vmul.f32 %v864, 0.2
      %v1124 = vmul.f32 %v866, 0.2
      %v1125 = vmul.f32 %v869, 0.2
      %v1126 = vmul.f32 %v871, 0.2
      %v1127 = vmul.f32 %v874, 0.2
      %v1128 = vmul.f32 %v876, 0.2
      %v1129 = vmul.f32 %v879, 0.2
      %v1130 = vmul.f32 %v881, 0.2
      %v1131 = vmul.f32 %v884, 0.2
      %v1132 = vmul.f32 %v886, 0.2
      %v1133 = vmul.f32 %v889, 0.2
      %v1134 = vmul.f32 %v891, 0.2
      %v1135 = vmul.f32 %v894, 0.2
      %v1136 = vmul.f32 %v896, 0.2
      %v1137 = vmul.f32 %v899, 0.2
      %v1138 = vmul.f32 %v901, 0.2
      %v1139 = vmul.f32 %v904, 0.2
      %v1140 = vmul.f32 %v906, 0.2
      %v1141 = vmul.f32 %v909, 0.2
      %v1142 = vmul.f32 %v911, 0.2
      %v1143 = vmul.f32 %v914, 0.2
      %v1144 = vmul.f32 %v916, 0.2
      %v1145 = vmul.f32 %v919, 0.2
      %v1146 = vmul.f32 %v921, 0.2
      %v1147 = vmul.f32 %v924, 0.2
      %v1148 = vmul.f32 %v926, 0.2
      %v1149 = vmul.f32 %v929, 0.2
      %v1150 = vmul.f32 %v931, 0.2
      %v1151 = vmul.f32 %v934, 0.2
      %v1152 = vmul.f32 %v936, 0.2
      %v1153 = vmul.f32 %v939, 0.2
      %v1154 = vmul.f32 %v941, 0.2
      %v1155 = vmul.f32 %v944, 0.2
      %v1156 = vmul.f32 %v946, 0.2
      %v1157 = vmul.f32 %v949, 0.2
      %v1158 = vmul.f32 %v951, 0.2
      %v1159 = vmul.f32 %v954, 0.2
      %v1160 = vmul.f32 %v956, 0.2
      %v1161 = vmul.f32 %v959, 0.2
      %v1162 = vmul.f32 %v961, 0.2
      %v1163 = vmul.f32 %v964, 0.2
      %v1164 = vmul.f32 %v966, 0.2
      %v1165 = vmul.f32 %v969, 0.2
      %v1166 = vmul.f32 %v971, 0.2
      %v1167 = vmul.f32 %v974, 0.2
      %v1168 = vmul.f32 %v976, 0.2
      %v1169 = vmul.f32 %v979, 0.2
      %v1170 = vmul.f32 %v981, 0.2
      %v1171 = vmul.f32 %v984, 0.2
      %v1172 = vmul.f32 %v986, 0.2
      %v1173 = vmul.f32 %v989, 0.2
      %v1174 = vmul.f32 %v991, 0.2
      %v1175 = vmul.f32 %v994, 0.2
      %v1176 = vmul.f32 %v996, 0.2
      %v1177 = vmul.f32 %v999, 0.2
      %v1178 = vmul.f32 %v1001, 0.2
      %v1179 = vmul.f32 %v1004, 0.2
      %v1180 = vmul.f32 %v1006, 0.2
      %v1181 = vmul.f32 %v1009, 0.2
      %v1182 = vmul.f32 %v1011, 0.2
      %v1183 = vmul.f32 %v1014, 0.2
      %v1184 = vmul.f32 %v1016, 0.2
      %v1185 = vmul.f32 %v1019, 0.2
      %v1186 = vmul.f32 %v1021, 0.2
      %v1187 = vmul.f32 %v1024, 0.2
      %v1188 = vmul.f32 %v1026, 0.2
      %v1189 = vmul.f32 %v1029, 0.2
      %v1190 = vmul.f32 %v1031, 0.2
      %v1191 = vmul.f32 %v1034, 0.2
      %v1192 = vmul.f32 %v1036, 0.2
      %v1193 = vmul.f32 %v1039, 0.2
      %v1194 = vmul.f32 %v1041, 0.2
      %v1195 = vmul.f32 %v1044, 0.2
      %v1196 = vmul.f32 %v1046, 0.2
      %v1197 = vmul.f32 %v1049, 0.2
      %v1198 = vmul.f32 %v1051, 0.2
      %v1199 = vmul.f32 %v1054, 0.2
      %v1200 = vmul.f32 %v1056, 0.2
      %v1201 = vmul.f32 %v1059, 0.2
      %v1202 = vmul.f32 %v1061, 0.2
      %v1203 = vmul.f32 %v1064, 0.2
      %v1204 = vmul.f32 %v1066, 0.2
      %v1205 = vmul.f32 %v1069, 0.2
      %v1206 = vmul.f32 %v1071, 0.2
      %v1207 = vmul.f32 %v1074, 0.2
      %v1208 = vmul.f32 %v1076, 0.2
      %v1209 = vmul.f32 %v1079, 0.2
      %v1210 = vmul.f32 %v1081, 0.2
      %v1211 = vmax.f32 %v764, %v1083
      %v1212 = vmax.f32 %v766, %v1084
      %v1213 = vmax.f32 %v769, %v1085
      %v1214 = vmax.f32 %v771, %v1086
      %v1215 = vmax.f32 %v774, %v1087
      %v1216 = vmax.f32 %v776, %v1088
      %v1217 = vmax.f32 %v779, %v1089
      %v1218 = vmax.f32 %v781, %v1090
      %v1219 = vmax.f32 %v784, %v1091
      %v1220 = vmax.f32 %v786, %v1092
      %v1221 = vmax.f32 %v789, %v1093
      %v1222 = vmax.f32 %v791, %v1094
      %v1223 = vmax.f32 %v794, %v1095
      %v1224 = vmax.f32 %v796, %v1096
      %v1225 = vmax.f32 %v799, %v1097
      %v1226 = vmax.f32 %v801, %v1098
      %v1227 = vmax.f32 %v804, %v1099
      %v1228 = vmax.f32 %v806, %v1100
      %v1229 = vmax.f32 %v809, %v1101
      %v1230 = vmax.f32 %v811, %v1102
      %v1231 = vmax.f32 %v814, %v1103
      %v1232 = vmax.f32 %v816, %v1104
      %v1233 = vmax.f32 %v819, %v1105
      %v1234 = vmax.f32 %v821, %v1106
      %v1235 = vmax.f32 %v824, %v1107
      %v1236 = vmax.f32 %v826, %v1108
      %v1237 = vmax.f32 %v829, %v1109
      %v1238 = vmax.f32 %v831, %v1110
      %v1239 = vmax.f32 %v834, %v1111
      %v1240 = vmax.f32 %v836, %v1112
      %v1241 = vmax.f32 %v839, %v1113
      %v1242 = vmax.f32 %v841, %v1114
      %v1243 = vmax.f32 %v844, %v1115
      %v1244 = vmax.f32 %v846, %v1116
      %v1245 = vmax.f32 %v849, %v1117
      %v1246 = vmax.f32 %v851, %v1118
      %v1247 = vmax.f32 %v854, %v1119
      %v1248 = vmax.f32 %v856, %v1120
      %v1249 = vmax.f32 %v859, %v1121
      %v1250 = vmax.f32 %v861, %v1122
      %v1251 = vmax.f32 %v864, %v1123
      %v1252 = vmax.f32 %v866, %v1124
      %v1253 = vmax.f32 %v869, %v1125
      %v1254 = vmax.f32 %v871, %v1126
      %v1255 = vmax.f32 %v874, %v1127
      %v1256 = vmax.f32 %v876, %v1128
      %v1257 = vmax.f32 %v879, %v1129
      %v1258 = vmax.f32 %v881, %v1130
      %v1259 = vmax.f32 %v884, %v1131
      %v1260 = vmax.f32 %v886, %v1132
      %v1261 = vmax.f32 %v889, %v1133
      %v1262 = vmax.f32 %v891, %v1134
      %v1263 = vmax.f32 %v894, %v1135
      %v1264 = vmax.f32 %v896, %v1136
      %v1265 = vmax.f32 %v899, %v1137
      %v1266 = vmax.f32 %v901, %v1138
      %v1267 = vmax.f32 %v904, %v1139
      %v1268 = vmax.f32 %v906, %v1140
      %v1269 = vmax.f32 %v909, %v1141
      %v1270 = vmax.f32 %v911, %v1142
      %v1271 = vmax.f32 %v914, %v1143
      %v1272 = vmax.f32 %v916, %v1144
      %v1273 = vmax.f32 %v919, %v1145
      %v1274 = vmax.f32 %v921, %v1146
      %v1275 = vmax.f32 %v924, %v1147
      %v1276 = vmax.f32 %v926, %v1148
      %v1277 = vmax.f32 %v929, %v1149
      %v1278 = vmax.f32 %v931, %v1150
      %v1279 = vmax.f32 %v934, %v1151
      %v1280 = vmax.f32 %v936, %v1152
      %v1281 = vmax.f32 %v939, %v1153
      %v1282 = vmax.f32 %v941, %v1154
      %v1283 = vmax.f32 %v944, %v1155
      %v1284 = vmax.f32 %v946, %v1156
      %v1285 = vmax.f32 %v949, %v1157
      %v1286 = vmax.f32 %v951, %v1158
      %v1287 = vmax.f32 %v954, %v1159
      %v1288 = vmax.f32 %v956, %v1160
      %v1289 = vmax.f32 %v959, %v1161
      %v1290 = vmax.f32 %v961, %v1162
      %v1291 = vmax.f32 %v964, %v1163
      %v1292 = vmax.f32 %v966, %v1164
      %v1293 = vmax.f32 %v969, %v1165
      %v1294 = vmax.f32 %v971, %v1166
      %v1295 = vmax.f32 %v974, %v1167
      %v1296 = vmax.f32 %v976, %v1168
      %v1297 = vmax.f32 %v979, %v1169
      %v1298 = vmax.f32 %v981, %v1170
      %v1299 = vmax.f32 %v984, %v1171
      %v1300 = vmax.f32 %v986, %v1172
      %v1301 = vmax.f32 %v989, %v1173
      %v1302 = vmax.f32 %v991, %v1174
      %v1303 = vmax.f32 %v994, %v1175
      %v1304 = vmax.f32 %v996, %v1176
      %v1305 = vmax.f32 %v999, %v1177
      %v1306 = vmax.f32 %v1001, %v1178
      %v1307 = vmax.f32 %v1004, %v1179
      %v1308 = vmax.f32 %v1006, %v1180
      %v1309 = vmax.f32 %v1009, %v1181
      %v1310 = vmax.f32 %v1011, %v1182
      %v1311 = vmax.f32 %v1014, %v1183
      %v1312 = vmax.f32 %v1016, %v1184
      %v1313 = vmax.f32 %v1019, %v1185
      %v1314 = vmax.f32 %v1021, %v1186
      %v1315 = vmax.f32 %v1024, %v1187
      %v1316 = vmax.f32 %v1026, %v1188
      %v1317 = vmax.f32 %v1029, %v1189
      %v1318 = vmax.f32 %v1031, %v1190
      %v1319 = vmax.f32 %v1034, %v1191
      %v1320 = vmax.f32 %v1036, %v1192
      %v1321 = vmax.f32 %v1039, %v1193
      %v1322 = vmax.f32 %v1041, %v1194
      %v1323 = vmax.f32 %v1044, %v1195
      %v1324 = vmax.f32 %v1046, %v1196
      %v1325 = vmax.f32 %v1049, %v1197
      %v1326 = vmax.f32 %v1051, %v1198
      %v1327 = vmax.f32 %v1054, %v1199
      %v1328 = vmax.f32 %v1056, %v1200
      %v1329 = vmax.f32 %v1059, %v1201
      %v1330 = vmax.f32 %v1061, %v1202
      %v1331 = vmax.f32 %v1064, %v1203
      %v1332 = vmax.f32 %v1066, %v1204
      %v1333 = vmax.f32 %v1069, %v1205
      %v1334 = vmax.f32 %v1071, %v1206
      %v1335 = vmax.f32 %v1074, %v1207
      %v1336 = vmax.f32 %v1076, %v1208
      %v1337 = vmax.f32 %v1079, %v1209
      %v1338 = vmax.f32 %v1081, %v1210
      %v1339 = vpack.c.bf16 %v1211, %v1211
      %v1340 = vpack.c.bf16 %v1212, %v1212
      %v1341 = vpack.c.bf16 %v1213, %v1213
      %v1342 = vpack.c.bf16 %v1214, %v1214
      %v1343 = vpack.c.bf16 %v1215, %v1215
      %v1344 = vpack.c.bf16 %v1216, %v1216
      %v1345 = vpack.c.bf16 %v1217, %v1217
      %v1346 = vpack.c.bf16 %v1218, %v1218
      %v1347 = vpack.c.bf16 %v1219, %v1219
      %v1348 = vpack.c.bf16 %v1220, %v1220
      %v1349 = vpack.c.bf16 %v1221, %v1221
      %v1350 = vpack.c.bf16 %v1222, %v1222
      %v1351 = vpack.c.bf16 %v1223, %v1223
      %v1352 = vpack.c.bf16 %v1224, %v1224
      %v1353 = vpack.c.bf16 %v1225, %v1225
      %v1354 = vpack.c.bf16 %v1226, %v1226
      %v1355 = vpack.c.bf16 %v1227, %v1227
      %v1356 = vpack.c.bf16 %v1228, %v1228
      %v1357 = vpack.c.bf16 %v1229, %v1229
      %v1358 = vpack.c.bf16 %v1230, %v1230
      %v1359 = vpack.c.bf16 %v1231, %v1231
      %v1360 = vpack.c.bf16 %v1232, %v1232
      %v1361 = vpack.c.bf16 %v1233, %v1233
      %v1362 = vpack.c.bf16 %v1234, %v1234
      %v1363 = vpack.c.bf16 %v1235, %v1235
      %v1364 = vpack.c.bf16 %v1236, %v1236
      %v1365 = vpack.c.bf16 %v1237, %v1237
      %v1366 = vpack.c.bf16 %v1238, %v1238
      %v1367 = vpack.c.bf16 %v1239, %v1239
      %v1368 = vpack.c.bf16 %v1240, %v1240
      %v1369 = vpack.c.bf16 %v1241, %v1241
      %v1370 = vpack.c.bf16 %v1242, %v1242
      %v1371 = vpack.c.bf16 %v1243, %v1243
      %v1372 = vpack.c.bf16 %v1244, %v1244
      %v1373 = vpack.c.bf16 %v1245, %v1245
      %v1374 = vpack.c.bf16 %v1246, %v1246
      %v1375 = vpack.c.bf16 %v1247, %v1247
      %v1376 = vpack.c.bf16 %v1248, %v1248
      %v1377 = vpack.c.bf16 %v1249, %v1249
      %v1378 = vpack.c.bf16 %v1250, %v1250
      %v1379 = vpack.c.bf16 %v1251, %v1251
      %v1380 = vpack.c.bf16 %v1252, %v1252
      %v1381 = vpack.c.bf16 %v1253, %v1253
      %v1382 = vpack.c.bf16 %v1254, %v1254
      %v1383 = vpack.c.bf16 %v1255, %v1255
      %v1384 = vpack.c.bf16 %v1256, %v1256
      %v1385 = vpack.c.bf16 %v1257, %v1257
      %v1386 = vpack.c.bf16 %v1258, %v1258
      %v1387 = vpack.c.bf16 %v1259, %v1259
      %v1388 = vpack.c.bf16 %v1260, %v1260
      %v1389 = vpack.c.bf16 %v1261, %v1261
      %v1390 = vpack.c.bf16 %v1262, %v1262
      %v1391 = vpack.c.bf16 %v1263, %v1263
      %v1392 = vpack.c.bf16 %v1264, %v1264
      %v1393 = vpack.c.bf16 %v1265, %v1265
      %v1394 = vpack.c.bf16 %v1266, %v1266
      %v1395 = vpack.c.bf16 %v1267, %v1267
      %v1396 = vpack.c.bf16 %v1268, %v1268
      %v1397 = vpack.c.bf16 %v1269, %v1269
      %v1398 = vpack.c.bf16 %v1270, %v1270
      %v1399 = vpack.c.bf16 %v1271, %v1271
      %v1400 = vpack.c.bf16 %v1272, %v1272
      %v1401 = vpack.c.bf16 %v1273, %v1273
      %v1402 = vpack.c.bf16 %v1274, %v1274
      %v1403 = vpack.c.bf16 %v1275, %v1275
      %v1404 = vpack.c.bf16 %v1276, %v1276
      %v1405 = vpack.c.bf16 %v1277, %v1277
      %v1406 = vpack.c.bf16 %v1278, %v1278
      %v1407 = vpack.c.bf16 %v1279, %v1279
      %v1408 = vpack.c.bf16 %v1280, %v1280
      %v1409 = vpack.c.bf16 %v1281, %v1281
      %v1410 = vpack.c.bf16 %v1282, %v1282
      %v1411 = vpack.c.bf16 %v1283, %v1283
      %v1412 = vpack.c.bf16 %v1284, %v1284
      %v1413 = vpack.c.bf16 %v1285, %v1285
      %v1414 = vpack.c.bf16 %v1286, %v1286
      %v1415 = vpack.c.bf16 %v1287, %v1287
      %v1416 = vpack.c.bf16 %v1288, %v1288
      %v1417 = vpack.c.bf16 %v1289, %v1289
      %v1418 = vpack.c.bf16 %v1290, %v1290
      %v1419 = vpack.c.bf16 %v1291, %v1291
      %v1420 = vpack.c.bf16 %v1292, %v1292
      %v1421 = vpack.c.bf16 %v1293, %v1293
      %v1422 = vpack.c.bf16 %v1294, %v1294
      %v1423 = vpack.c.bf16 %v1295, %v1295
      %v1424 = vpack.c.bf16 %v1296, %v1296
      %v1425 = vpack.c.bf16 %v1297, %v1297
      %v1426 = vpack.c.bf16 %v1298, %v1298
      %v1427 = vpack.c.bf16 %v1299, %v1299
      %v1428 = vpack.c.bf16 %v1300, %v1300
      %v1429 = vpack.c.bf16 %v1301, %v1301
      %v1430 = vpack.c.bf16 %v1302, %v1302
      %v1431 = vpack.c.bf16 %v1303, %v1303
      %v1432 = vpack.c.bf16 %v1304, %v1304
      %v1433 = vpack.c.bf16 %v1305, %v1305
      %v1434 = vpack.c.bf16 %v1306, %v1306
      %v1435 = vpack.c.bf16 %v1307, %v1307
      %v1436 = vpack.c.bf16 %v1308, %v1308
      %v1437 = vpack.c.bf16 %v1309, %v1309
      %v1438 = vpack.c.bf16 %v1310, %v1310
      %v1439 = vpack.c.bf16 %v1311, %v1311
      %v1440 = vpack.c.bf16 %v1312, %v1312
      %v1441 = vpack.c.bf16 %v1313, %v1313
      %v1442 = vpack.c.bf16 %v1314, %v1314
      %v1443 = vpack.c.bf16 %v1315, %v1315
      %v1444 = vpack.c.bf16 %v1316, %v1316
      %v1445 = vpack.c.bf16 %v1317, %v1317
      %v1446 = vpack.c.bf16 %v1318, %v1318
      %v1447 = vpack.c.bf16 %v1319, %v1319
      %v1448 = vpack.c.bf16 %v1320, %v1320
      %v1449 = vpack.c.bf16 %v1321, %v1321
      %v1450 = vpack.c.bf16 %v1322, %v1322
      %v1451 = vpack.c.bf16 %v1323, %v1323
      %v1452 = vpack.c.bf16 %v1324, %v1324
      %v1453 = vpack.c.bf16 %v1325, %v1325
      %v1454 = vpack.c.bf16 %v1326, %v1326
      %v1455 = vpack.c.bf16 %v1327, %v1327
      %v1456 = vpack.c.bf16 %v1328, %v1328
      %v1457 = vpack.c.bf16 %v1329, %v1329
      %v1458 = vpack.c.bf16 %v1330, %v1330
      %v1459 = vpack.c.bf16 %v1331, %v1331
      %v1460 = vpack.c.bf16 %v1332, %v1332
      %v1461 = vpack.c.bf16 %v1333, %v1333
      %v1462 = vpack.c.bf16 %v1334, %v1334
      %v1463 = vpack.c.bf16 %v1335, %v1335
      %v1464 = vpack.c.bf16 %v1336, %v1336
      %v1465 = vpack.c.bf16 %v1337, %v1337
      %v1466 = vpack.c.bf16 %v1338, %v1338
      %1467 = vst [vmem:[%s172] sm:$0xf] %v1339
      %1468 = vst [vmem:[%s172 + $0x4] sm:$0xf] %v1340
      %1469 = vst [vmem:[%s172 + $0x8] sm:$0xf] %v1341
      %1470 = vst [vmem:[%s172 + $0xc] sm:$0xf] %v1342
      %1471 = vst [vmem:[%s172 + $0x10] sm:$0xf] %v1343
      %1472 = vst [vmem:[%s172 + $0x14] sm:$0xf] %v1344
      %1473 = vst [vmem:[%s172 + $0x18] sm:$0xf] %v1345
      %1474 = vst [vmem:[%s172 + $0x1c] sm:$0xf] %v1346
      %1475 = vst [vmem:[%s172 + $0x20] sm:$0xf] %v1347
      %1476 = vst [vmem:[%s172 + $0x24] sm:$0xf] %v1348
      %1477 = vst [vmem:[%s172 + $0x28] sm:$0xf] %v1349
      %1478 = vst [vmem:[%s172 + $0x2c] sm:$0xf] %v1350
      %1479 = vst [vmem:[%s172 + $0x30] sm:$0xf] %v1351
      %1480 = vst [vmem:[%s172 + $0x34] sm:$0xf] %v1352
      %1481 = vst [vmem:[%s172 + $0x38] sm:$0xf] %v1353
      %1482 = vst [vmem:[%s172 + $0x3c] sm:$0xf] %v1354
      %1483 = vst [vmem:[%s172 + $0x40] sm:$0xf] %v1355
      %1484 = vst [vmem:[%s172 + $0x44] sm:$0xf] %v1356
      %1485 = vst [vmem:[%s172 + $0x48] sm:$0xf] %v1357
      %1486 = vst [vmem:[%s172 + $0x4c] sm:$0xf] %v1358
      %1487 = vst [vmem:[%s172 + $0x50] sm:$0xf] %v1359
      %1488 = vst [vmem:[%s172 + $0x54] sm:$0xf] %v1360
      %1489 = vst [vmem:[%s172 + $0x58] sm:$0xf] %v1361
      %1490 = vst [vmem:[%s172 + $0x5c] sm:$0xf] %v1362
      %1491 = vst [vmem:[%s172 + $0x60] sm:$0xf] %v1363
      %1492 = vst [vmem:[%s172 + $0x64] sm:$0xf] %v1364
      %1493 = vst [vmem:[%s172 + $0x68] sm:$0xf] %v1365
      %1494 = vst [vmem:[%s172 + $0x6c] sm:$0xf] %v1366
      %1495 = vst [vmem:[%s172 + $0x70] sm:$0xf] %v1367
      %1496 = vst [vmem:[%s172 + $0x74] sm:$0xf] %v1368
      %1497 = vst [vmem:[%s172 + $0x78] sm:$0xf] %v1369
      %1498 = vst [vmem:[%s172 + $0x7c] sm:$0xf] %v1370
      %1499 = vst [vmem:[%s172 + $0x80] sm:$0xf] %v1371
      %1500 = vst [vmem:[%s172 + $0x84] sm:$0xf] %v1372
      %1501 = vst [vmem:[%s172 + $0x88] sm:$0xf] %v1373
      %1502 = vst [vmem:[%s172 + $0x8c] sm:$0xf] %v1374
      %1503 = vst [vmem:[%s172 + $0x90] sm:$0xf] %v1375
      %1504 = vst [vmem:[%s172 + $0x94] sm:$0xf] %v1376
      %1505 = vst [vmem:[%s172 + $0x98] sm:$0xf] %v1377
      %1506 = vst [vmem:[%s172 + $0x9c] sm:$0xf] %v1378
      %1507 = vst [vmem:[%s172 + $0xa0] sm:$0xf] %v1379
      %1508 = vst [vmem:[%s172 + $0xa4] sm:$0xf] %v1380
      %1509 = vst [vmem:[%s172 + $0xa8] sm:$0xf] %v1381
      %1510 = vst [vmem:[%s172 + $0xac] sm:$0xf] %v1382
      %1511 = vst [vmem:[%s172 + $0xb0] sm:$0xf] %v1383
      %1512 = vst [vmem:[%s172 + $0xb4] sm:$0xf] %v1384
      %1513 = vst [vmem:[%s172 + $0xb8] sm:$0xf] %v1385
      %1514 = vst [vmem:[%s172 + $0xbc] sm:$0xf] %v1386
      %1515 = vst [vmem:[%s172 + $0xc0] sm:$0xf] %v1387
      %1516 = vst [vmem:[%s172 + $0xc4] sm:$0xf] %v1388
      %1517 = vst [vmem:[%s172 + $0xc8] sm:$0xf] %v1389
      %1518 = vst [vmem:[%s172 + $0xcc] sm:$0xf] %v1390
      %1519 = vst [vmem:[%s172 + $0xd0] sm:$0xf] %v1391
      %1520 = vst [vmem:[%s172 + $0xd4] sm:$0xf] %v1392
      %1521 = vst [vmem:[%s172 + $0xd8] sm:$0xf] %v1393
      %1522 = vst [vmem:[%s172 + $0xdc] sm:$0xf] %v1394
      %1523 = vst [vmem:[%s172 + $0xe0] sm:$0xf] %v1395
      %1524 = vst [vmem:[%s172 + $0xe4] sm:$0xf] %v1396
      %1525 = vst [vmem:[%s172 + $0xe8] sm:$0xf] %v1397
      %1526 = vst [vmem:[%s172 + $0xec] sm:$0xf] %v1398
      %1527 = vst [vmem:[%s172 + $0xf0] sm:$0xf] %v1399
      %1528 = vst [vmem:[%s172 + $0xf4] sm:$0xf] %v1400
      %1529 = vst [vmem:[%s172 + $0xf8] sm:$0xf] %v1401
      %1530 = vst [vmem:[%s172 + $0xfc] sm:$0xf] %v1402
      %1531 = vst [vmem:[%s172 + $0x100] sm:$0xf] %v1403
      %1532 = vst [vmem:[%s172 + $0x104] sm:$0xf] %v1404
      %1533 = vst [vmem:[%s172 + $0x108] sm:$0xf] %v1405
      %1534 = vst [vmem:[%s172 + $0x10c] sm:$0xf] %v1406
      %1535 = vst [vmem:[%s172 + $0x110] sm:$0xf] %v1407
      %1536 = vst [vmem:[%s172 + $0x114] sm:$0xf] %v1408
      %1537 = vst [vmem:[%s172 + $0x118] sm:$0xf] %v1409
      %1538 = vst [vmem:[%s172 + $0x11c] sm:$0xf] %v1410
      %1539 = vst [vmem:[%s172 + $0x120] sm:$0xf] %v1411
      %1540 = vst [vmem:[%s172 + $0x124] sm:$0xf] %v1412
      %1541 = vst [vmem:[%s172 + $0x128] sm:$0xf] %v1413
      %1542 = vst [vmem:[%s172 + $0x12c] sm:$0xf] %v1414
      %1543 = vst [vmem:[%s172 + $0x130] sm:$0xf] %v1415
      %1544 = vst [vmem:[%s172 + $0x134] sm:$0xf] %v1416
      %1545 = vst [vmem:[%s172 + $0x138] sm:$0xf] %v1417
      %1546 = vst [vmem:[%s172 + $0x13c] sm:$0xf] %v1418
      %1547 = vst [vmem:[%s172 + $0x140] sm:$0xf] %v1419
      %1548 = vst [vmem:[%s172 + $0x144] sm:$0xf] %v1420
      %1549 = vst [vmem:[%s172 + $0x148] sm:$0xf] %v1421
      %1550 = vst [vmem:[%s172 + $0x14c] sm:$0xf] %v1422
      %1551 = vst [vmem:[%s172 + $0x150] sm:$0xf] %v1423
      %1552 = vst [vmem:[%s172 + $0x154] sm:$0xf] %v1424
      %1553 = vst [vmem:[%s172 + $0x158] sm:$0xf] %v1425
      %1554 = vst [vmem:[%s172 + $0x15c] sm:$0xf] %v1426
      %1555 = vst [vmem:[%s172 + $0x160] sm:$0xf] %v1427
      %1556 = vst [vmem:[%s172 + $0x164] sm:$0xf] %v1428
      %1557 = vst [vmem:[%s172 + $0x168] sm:$0xf] %v1429
      %1558 = vst [vmem:[%s172 + $0x16c] sm:$0xf] %v1430
      %1559 = vst [vmem:[%s172 + $0x170] sm:$0xf] %v1431
      %1560 = vst [vmem:[%s172 + $0x174] sm:$0xf] %v1432
      %1561 = vst [vmem:[%s172 + $0x178] sm:$0xf] %v1433
      %1562 = vst [vmem:[%s172 + $0x17c] sm:$0xf] %v1434
      %1563 = vst [vmem:[%s172 + $0x180] sm:$0xf] %v1435
      %1564 = vst [vmem:[%s172 + $0x184] sm:$0xf] %v1436
      %1565 = vst [vmem:[%s172 + $0x188] sm:$0xf] %v1437
      %1566 = vst [vmem:[%s172 + $0x18c] sm:$0xf] %v1438
      %1567 = vst [vmem:[%s172 + $0x190] sm:$0xf] %v1439
      %1568 = vst [vmem:[%s172 + $0x194] sm:$0xf] %v1440
      %1569 = vst [vmem:[%s172 + $0x198] sm:$0xf] %v1441
      %1570 = vst [vmem:[%s172 + $0x19c] sm:$0xf] %v1442
      %1571 = vst [vmem:[%s172 + $0x1a0] sm:$0xf] %v1443
      %1572 = vst [vmem:[%s172 + $0x1a4] sm:$0xf] %v1444
      %1573 = vst [vmem:[%s172 + $0x1a8] sm:$0xf] %v1445
      %1574 = vst [vmem:[%s172 + $0x1ac] sm:$0xf] %v1446
      %1575 = vst [vmem:[%s172 + $0x1b0] sm:$0xf] %v1447
      %1576 = vst [vmem:[%s172 + $0x1b4] sm:$0xf] %v1448
      %1577 = vst [vmem:[%s172 + $0x1b8] sm:$0xf] %v1449
      %1578 = vst [vmem:[%s172 + $0x1bc] sm:$0xf] %v1450
      %1579 = vst [vmem:[%s172 + $0x1c0] sm:$0xf] %v1451
      %1580 = vst [vmem:[%s172 + $0x1c4] sm:$0xf] %v1452
      %1581 = vst [vmem:[%s172 + $0x1c8] sm:$0xf] %v1453
      %1582 = vst [vmem:[%s172 + $0x1cc] sm:$0xf] %v1454
      %1583 = vst [vmem:[%s172 + $0x1d0] sm:$0xf] %v1455
      %1584 = vst [vmem:[%s172 + $0x1d4] sm:$0xf] %v1456
      %1585 = vst [vmem:[%s172 + $0x1d8] sm:$0xf] %v1457
      %1586 = vst [vmem:[%s172 + $0x1dc] sm:$0xf] %v1458
      %1587 = vst [vmem:[%s172 + $0x1e0] sm:$0xf] %v1459
      %1588 = vst [vmem:[%s172 + $0x1e4] sm:$0xf] %v1460
      %1589 = vst [vmem:[%s172 + $0x1e8] sm:$0xf] %v1461
      %1590 = vst [vmem:[%s172 + $0x1ec] sm:$0xf] %v1462
      %1591 = vst [vmem:[%s172 + $0x1f0] sm:$0xf] %v1463
      %1592 = vst [vmem:[%s172 + $0x1f4] sm:$0xf] %v1464
      %1593 = vst [vmem:[%s172 + $0x1f8] sm:$0xf] %v1465
      %1594 = vst [vmem:[%s172 + $0x1fc] sm:$0xf] %v1466
      %s1595 = smul.u32 128, %s14
      %p1596 = scmp.lt.s32.totalorder %s1595, 255
      %s1597 = scalar_select %p1596, %s1595, 255
      %s1598 = smul.addr %s1597, 4
      %s1599 = scalar_lea.vmem %s3, %s1598
      // Predicated region
      $region33: #{_lambda_.5} parent=31 // pred_check
        %p1600 = pneg %p100
      $region34: #{_lambda_.5} parent=31 // pred_check_branch
        %1602 = sbr.rel (%p1600) target = $region36
      $region35: #{_lambda_.5} parent=31 // pred_region
        %s1603 = smul.u32 128, %s14
      $region36: #{_lambda_.5} parent=31 // pred_fallthru
        _
    $region32: #{_lambda_.5} parent=5 // pred_fallthru
      _
    %p1604 = scmp.le.s32.totalorder 2, %s9
    // Predicated region
    $region37: #{_lambda_.5} parent=5 // pred_check
      %p1605 = pneg %p1604
    $region38: #{_lambda_.5} parent=5 // pred_check_branch
      %1607 = sbr.rel (%p1605) target = $region40
    $region39: #{_lambda_.5} parent=5 // pred_region
      %s1608 = ssub.s32 %s9, 2
      // Predicated region
      $region41: #{_lambda_.5} parent=39 // pred_check
        %p1609 = pneg %p106
      $region42: #{_lambda_.5} parent=39 // pred_check_branch
        %1611 = sbr.rel (%p1609) target = $region44
      $region43: #{_lambda_.5} parent=39 // pred_region
        %s1612 = smul.u32 128, %s15
        %p1613 = scmp.lt.s32.totalorder %s1612, 255
        %s1614 = scalar_select %p1613, %s1612, 255
        %s1615 = smul.addr %s1614, 4
        %s1616 = scalar_lea.vmem %s3, %s1615
      $region44: #{_lambda_.5} parent=39 // pred_fallthru
        _
    $region40: #{_lambda_.5} parent=5 // pred_fallthru
      _
  $region6: #{_lambda_.5} parent=0 // loop_footer
    %s13 = sadd.s32 1, %s9
  $region7: #{_lambda_.5} parent=0 // loop_footer_branch
    %8 = sbr.rel target = $region3
  $region8: #{_lambda_.5} parent=0 // loop_exit
    _

// kernel: _lambda_.6
$region0: #{_lambda_.6}
  #allocation0 [shape = 'u32[]', space=smem, size = 0x4, offset = 0x4, fixed_abs, tag = 'smem constant byte address 0x4 - core index']
  #allocation1 [shape = 'u32[72,128]{1,0:T(1,128)}', space=vmem, size = 0x9000, scoped, tag = 'internal scratch']
  #allocation2 [shape = 'f32[1,128]{1,0:T(1,128)}', space=vmem, size = 0x200, scoped, tag = 'scratch operand']
  #allocation3 [shape = 'f32[1,128]{1,0:T(1,128)}', space=vmem, size = 0x200, scoped, tag = 'scratch operand']
  %s0 = inlined_call_operand.vmem [shape: bf16[512,128], index: 0, kind: input, shape index: {}]
  %s1 = inlined_call_operand.vmem [shape: bf16[128,128], index: 1, kind: input, shape index: {}]
  %s2 = inlined_call_operand.vmem [shape: f32[1,128], index: 2, kind: input, shape index: {}]
  %s3 = inlined_call_operand.vmem [shape: f32[1,128], index: 3, kind: input, shape index: {}]
  %s4 = inlined_call_operand.vmem [shape: bf16[512,128], index: 4, kind: output, shape index: {}]
  %s5 = sld [smem:[#allocation0]]
  $region61: #{_lambda_.6} parent=0
    _
  %s7 = ssub.s32 1, %s5
  %s8 = scalar_select 0, %s7, %s5
  loop: start=0, step=1, limit=6
  $region2: #{_lambda_.6} parent=0 // loop_pre_header
    _
  $region3: #{_lambda_.6} parent=0 // loop_header
    %s10 = sphi 0, %s14
    %p11 = scmp.ge.s32.totalorder %s10, 6
    %s17 = sphi 0, %s29
    %s18 = sphi 0, %s25
    %s19 = sphi 0, %s17
    %s20 = sphi 0, %s18
    %s21 = sphi 0, %s19
    %s22 = sphi 0, %s20
    %s32 = sphi 0, %s34
    %s35 = sphi 0, %s32
    %s36 = sphi 0, %s35
    %s52 = sphi 0, %s36
    %s56 = sphi 0, %s56
    %s58 = sphi 0, %s56
    %s59 = sphi 0, %s58
    %s73 = sphi 0, %s59
    %s77 = sphi 0, %s77
    %s79 = sphi 0, %s77
    %s80 = sphi 0, %s79
    %s94 = sphi 0, %s80
    %s98 = sphi 0, %s98
    %s100 = sphi 0, %s98
    %s101 = sphi 0, %s100
    %s115 = sphi 0, %s101
    %s121 = sphi 0, %s123
    %s124 = sphi 0, %s121
    %s125 = sphi 0, %s124
    %s141 = sphi 0, %s125
  $region4: #{_lambda_.6} parent=0 // loop_header_branch
    %13 = sbr.rel (%p11) target = $region8
  $region5: #{_lambda_.6} parent=0 // loop_body
    %s15 = ssub.s32 %s10, 1
    %s16 = ssub.s32 %s10, 2
    %s23 = sadd.s32 1, %s18
    %p24 = scmp.ge.s32.totalorder %s23, 2
    %s25 = scalar_select %p24, 0, %s23
    %s26 = sadd.s32 1, %s17
    %s27 = scalar_select %p24, %s26, %s17
    %p28 = scmp.ge.s32.totalorder %s27, 2
    %s29 = scalar_select %p28, 0, %s27
    %s30 = ssub.s32 %s18, %s25
    %p31 = scmp.eq.s32.totalorder %s30, 0
    %s33 = sadd.s32 %s32, 1
    %s34 = scalar_select %p31, %s32, %s33
    %p37 = pneg %p31
    %p38 = scmp.eq.s32.totalorder %s10, 3
    %p39 = por %p37, %p38
    %p40 = scmp.ne.s32.totalorder %s32, %s35
    %p41 = scmp.eq.s32.totalorder %s10, 0
    %p42 = por %p40, %p41
    %p43 = scmp.ne.s32.totalorder %s32, %s35
    %p44 = scmp.eq.s32.totalorder %s15, 3
    %p45 = por %p43, %p44
    %p46 = scmp.ne.s32.totalorder %s35, %s36
    %p47 = scmp.eq.s32.totalorder %s15, 0
    %p48 = por %p46, %p47
    %p49 = scmp.ne.s32.totalorder %s35, %s36
    %p50 = scmp.eq.s32.totalorder %s16, 3
    %p51 = por %p49, %p50
    %p53 = scmp.ne.s32.totalorder %s36, %s52
    %p54 = scmp.eq.s32.totalorder %s16, 0
    %p55 = por %p53, %p54
    %s57 = sadd.s32 %s56, 1
    %p60 = scmp.eq.s32.totalorder %s10, 3
    %p61 = scmp.ne.s32.totalorder %s56, %s58
    %p62 = scmp.eq.s32.totalorder %s10, 0
    %p63 = por %p61, %p62
    %p64 = scmp.ne.s32.totalorder %s56, %s58
    %p65 = scmp.eq.s32.totalorder %s15, 3
    %p66 = por %p64, %p65
    %p67 = scmp.ne.s32.totalorder %s58, %s59
    %p68 = scmp.eq.s32.totalorder %s15, 0
    %p69 = por %p67, %p68
    %p70 = scmp.ne.s32.totalorder %s58, %s59
    %p71 = scmp.eq.s32.totalorder %s16, 3
    %p72 = por %p70, %p71
    %p74 = scmp.ne.s32.totalorder %s59, %s73
    %p75 = scmp.eq.s32.totalorder %s16, 0
    %p76 = por %p74, %p75
    %s78 = sadd.s32 %s77, 1
    %p81 = scmp.eq.s32.totalorder %s10, 3
    %p82 = scmp.ne.s32.totalorder %s77, %s79
    %p83 = scmp.eq.s32.totalorder %s10, 0
    %p84 = por %p82, %p83
    %p85 = scmp.ne.s32.totalorder %s77, %s79
    %p86 = scmp.eq.s32.totalorder %s15, 3
    %p87 = por %p85, %p86
    %p88 = scmp.ne.s32.totalorder %s79, %s80
    %p89 = scmp.eq.s32.totalorder %s15, 0
    %p90 = por %p88, %p89
    %p91 = scmp.ne.s32.totalorder %s79, %s80
    %p92 = scmp.eq.s32.totalorder %s16, 3
    %p93 = por %p91, %p92
    %p95 = scmp.ne.s32.totalorder %s80, %s94
    %p96 = scmp.eq.s32.totalorder %s16, 0
    %p97 = por %p95, %p96
    %s99 = sadd.s32 %s98, 1
    %p102 = scmp.eq.s32.totalorder %s10, 3
    %p103 = scmp.ne.s32.totalorder %s98, %s100
    %p104 = scmp.eq.s32.totalorder %s10, 0
    %p105 = por %p103, %p104
    %p106 = scmp.ne.s32.totalorder %s98, %s100
    %p107 = scmp.eq.s32.totalorder %s15, 3
    %p108 = por %p106, %p107
    %p109 = scmp.ne.s32.totalorder %s100, %s101
    %p110 = scmp.eq.s32.totalorder %s15, 0
    %p111 = por %p109, %p110
    %p112 = scmp.ne.s32.totalorder %s100, %s101
    %p113 = scmp.eq.s32.totalorder %s16, 3
    %p114 = por %p112, %p113
    %p116 = scmp.ne.s32.totalorder %s101, %s115
    %p117 = scmp.eq.s32.totalorder %s16, 0
    %p118 = por %p116, %p117
    %s119 = ssub.s32 %s18, %s25
    %p120 = scmp.eq.s32.totalorder %s119, 0
    %s122 = sadd.s32 %s121, 1
    %s123 = scalar_select %p120, %s121, %s122
    %p126 = pneg %p120
    %p127 = scmp.eq.s32.totalorder %s10, 3
    %p128 = por %p126, %p127
    %p129 = scmp.ne.s32.totalorder %s121, %s124
    %p130 = scmp.eq.s32.totalorder %s10, 0
    %p131 = por %p129, %p130
    %p132 = scmp.ne.s32.totalorder %s121, %s124
    %p133 = scmp.eq.s32.totalorder %s15, 3
    %p134 = por %p132, %p133
    %p135 = scmp.ne.s32.totalorder %s124, %s125
    %p136 = scmp.eq.s32.totalorder %s15, 0
    %p137 = por %p135, %p136
    %p138 = scmp.ne.s32.totalorder %s124, %s125
    %p139 = scmp.eq.s32.totalorder %s16, 3
    %p140 = por %p138, %p139
    %p142 = scmp.ne.s32.totalorder %s125, %s141
    %p143 = scmp.eq.s32.totalorder %s16, 0
    %p144 = por %p142, %p143
    %p145 = scmp.le.s32.totalorder 1, %s10
    %p146 = scmp.lt.s32.totalorder %s10, 5
    %p147 = pnand %p145, %p146
    %p148 = pneg %p147
    // Predicated region
    $region9: #{_lambda_.6} parent=5 // pred_check
      _
    $region10: #{_lambda_.6} parent=5 // pred_check_branch
      %150 = sbr.rel (%p147) target = $region12
    $region11: #{_lambda_.6} parent=5 // pred_region
      %s151 = ssub.s32 %s10, 1
      // Predicated region
      $region13: #{_lambda_.6} parent=11 // pred_check
        %p152 = pneg %p69
      $region14: #{_lambda_.6} parent=11 // pred_check_branch
        %154 = sbr.rel (%p152) target = $region16
      $region15: #{_lambda_.6} parent=11 // pred_region
        _
      $region16: #{_lambda_.6} parent=11 // pred_fallthru
        _
      // Predicated region
      $region17: #{_lambda_.6} parent=11 // pred_check
        %p155 = pneg %p90
      $region18: #{_lambda_.6} parent=11 // pred_check_branch
        %157 = sbr.rel (%p155) target = $region20
      $region19: #{_lambda_.6} parent=11 // pred_region
        _
      $region20: #{_lambda_.6} parent=11 // pred_fallthru
        _
      // Predicated region
      $region21: #{_lambda_.6} parent=11 // pred_check
        %p158 = pneg %p111
      $region22: #{_lambda_.6} parent=11 // pred_check_branch
        %160 = sbr.rel (%p158) target = $region24
      $region23: #{_lambda_.6} parent=11 // pred_region
        _
      $region24: #{_lambda_.6} parent=11 // pred_fallthru
        _
    $region12: #{_lambda_.6} parent=5 // pred_fallthru
      _
    %p161 = scmp.lt.s32.totalorder %s10, 4
    // Predicated region
    $region25: #{_lambda_.6} parent=5 // pred_check
      %p162 = pneg %p161
    $region26: #{_lambda_.6} parent=5 // pred_check_branch
      %164 = sbr.rel (%p162) target = $region28
    $region27: #{_lambda_.6} parent=5 // pred_region
      // Predicated region
      $region29: #{_lambda_.6} parent=27 // pred_check
        %p165 = pneg %p42
      $region30: #{_lambda_.6} parent=27 // pred_check_branch
        %167 = sbr.rel (%p165) target = $region32
      $region31: #{_lambda_.6} parent=27 // pred_region
        %s168 = smul.u32 32, %s18
        %p169 = scmp.lt.s32.totalorder %s168, 63
        %s170 = scalar_select %p169, %s168, 63
        %s171 = smul.addr %s170, 4
        %s172 = scalar_lea.vmem %s0, %s171
        %s173 = smul.u32 32, %s18
      $region32: #{_lambda_.6} parent=27 // pred_fallthru
        _
    $region28: #{_lambda_.6} parent=5 // pred_fallthru
      _
    %p174 = scmp.le.s32.totalorder 1, %s10
    %p175 = scmp.lt.s32.totalorder %s10, 5
    %p176 = pnand %p174, %p175
    %p177 = pneg %p176
    // Predicated region
    $region33: #{_lambda_.6} parent=5 // pred_check
      _
    $region34: #{_lambda_.6} parent=5 // pred_check_branch
      %179 = sbr.rel (%p176) target = $region36
    $region35: #{_lambda_.6} parent=5 // pred_region
      %s180 = ssub.s32 %s10, 1
      %s181 = smul.u32 32, %s20
      %p182 = scmp.lt.s32.totalorder %s181, 63
      %s183 = scalar_select %p182, %s181, 63
      %s184 = smul.addr %s183, 4
      %s185 = scalar_lea.vmem %s0, %s184
      %p186 = pneg %p48
      %p187 = pneg %p45
      %p188 = pneg %p69
      %p189 = pneg %p66
      %p190 = pneg %p90
      %p191 = pneg %p87
      %p192 = pneg %p111
      %p193 = pneg %p108
      %p194 = pneg %p137
      %p195 = pneg %p134
      %s196 = smul.u32 32, %s20
      %p197 = scmp.lt.s32.totalorder %s196, 63
      %s198 = scalar_select %p197, %s196, 63
      %s199 = smul.addr %s198, 4
      %s200 = scalar_lea.vmem %s4, %s199
      %s201 = smul.u32 32, %s20
      %p202 = scmp.lt.s32.totalorder %s201, 63
      %s203 = scalar_select %p202, %s201, 63
      %s204 = smul.addr %s203, 4
      %s205 = scalar_lea.vmem %s0, %s204
      %s206 = smul.u32 32, %s20
      %s207 = smul.u32 32, %s20
      %p208 = scmp.lt.s32.totalorder %s207, 63
      %s209 = scalar_select %p208, %s207, 63
      %s210 = smul.addr %s209, 4
      %s211 = scalar_lea.vmem %s4, %s210
      %s212 = smul.u32 32, %s20
      %v214 = vld [vmem:[%s205] sm:$0xf]
      %v215 = vld [vmem:[%s205 + $0x4] sm:$0xf]
      %v216 = vld [vmem:[%s205 + $0x8] sm:$0xf]
      %v217 = vld [vmem:[%s205 + $0xc] sm:$0xf]
      %v218 = vld [vmem:[%s205 + $0x10] sm:$0xf]
      %v219 = vld [vmem:[%s205 + $0x14] sm:$0xf]
      %v220 = vld [vmem:[%s205 + $0x18] sm:$0xf]
      %v221 = vld [vmem:[%s205 + $0x1c] sm:$0xf]
      %v222 = vld [vmem:[%s205 + $0x20] sm:$0xf]
      %v223 = vld [vmem:[%s205 + $0x24] sm:$0xf]
      %v224 = vld [vmem:[%s205 + $0x28] sm:$0xf]
      %v225 = vld [vmem:[%s205 + $0x2c] sm:$0xf]
      %v226 = vld [vmem:[%s205 + $0x30] sm:$0xf]
      %v227 = vld [vmem:[%s205 + $0x34] sm:$0xf]
      %v228 = vld [vmem:[%s205 + $0x38] sm:$0xf]
      %v229 = vld [vmem:[%s205 + $0x3c] sm:$0xf]
      %v230 = vld [vmem:[%s205 + $0x40] sm:$0xf]
      %v231 = vld [vmem:[%s205 + $0x44] sm:$0xf]
      %v232 = vld [vmem:[%s205 + $0x48] sm:$0xf]
      %v233 = vld [vmem:[%s205 + $0x4c] sm:$0xf]
      %v234 = vld [vmem:[%s205 + $0x50] sm:$0xf]
      %v235 = vld [vmem:[%s205 + $0x54] sm:$0xf]
      %v236 = vld [vmem:[%s205 + $0x58] sm:$0xf]
      %v237 = vld [vmem:[%s205 + $0x5c] sm:$0xf]
      %v238 = vld [vmem:[%s205 + $0x60] sm:$0xf]
      %v239 = vld [vmem:[%s205 + $0x64] sm:$0xf]
      %v240 = vld [vmem:[%s205 + $0x68] sm:$0xf]
      %v241 = vld [vmem:[%s205 + $0x6c] sm:$0xf]
      %v242 = vld [vmem:[%s205 + $0x70] sm:$0xf]
      %v243 = vld [vmem:[%s205 + $0x74] sm:$0xf]
      %v244 = vld [vmem:[%s205 + $0x78] sm:$0xf]
      %v245 = vld [vmem:[%s205 + $0x7c] sm:$0xf]
      %v246 = vld [vmem:[%s1] sm:$0xf]
      %v247 = vld [vmem:[%s1 + $0x4] sm:$0xf]
      %v248 = vld [vmem:[%s1 + $0x8] sm:$0xf]
      %v249 = vld [vmem:[%s1 + $0xc] sm:$0xf]
      %v250 = vld [vmem:[%s1 + $0x10] sm:$0xf]
      %v251 = vld [vmem:[%s1 + $0x14] sm:$0xf]
      %v252 = vld [vmem:[%s1 + $0x18] sm:$0xf]
      %v253 = vld [vmem:[%s1 + $0x1c] sm:$0xf]
      %v254 = vld [vmem:[%s1 + $0x20] sm:$0xf]
      %v255 = vld [vmem:[%s1 + $0x24] sm:$0xf]
      %v256 = vld [vmem:[%s1 + $0x28] sm:$0xf]
      %v257 = vld [vmem:[%s1 + $0x2c] sm:$0xf]
      %v258 = vld [vmem:[%s1 + $0x30] sm:$0xf]
      %v259 = vld [vmem:[%s1 + $0x34] sm:$0xf]
      %v260 = vld [vmem:[%s1 + $0x38] sm:$0xf]
      %v261 = vld [vmem:[%s1 + $0x3c] sm:$0xf]
      %v294 = vunpack.c.l.b16 %v214
      %v295 = vunpack.c.l.b16 %v215
      %v296 = vunpack.c.l.b16 %v216
      %v297 = vunpack.c.l.b16 %v217
      %v298 = vunpack.c.l.b16 %v218
      %v299 = vunpack.c.l.b16 %v219
      %v300 = vunpack.c.l.b16 %v220
      %v301 = vunpack.c.l.b16 %v221
      %v302 = vunpack.c.l.b16 %v222
      %v303 = vunpack.c.l.b16 %v223
      %v304 = vunpack.c.l.b16 %v224
      %v305 = vunpack.c.l.b16 %v225
      %v306 = vunpack.c.l.b16 %v226
      %v307 = vunpack.c.l.b16 %v227
      %v308 = vunpack.c.l.b16 %v228
      %v309 = vunpack.c.l.b16 %v229
      %v310 = vunpack.c.l.b16 %v230
      %v311 = vunpack.c.l.b16 %v231
      %v312 = vunpack.c.l.b16 %v232
      %v313 = vunpack.c.l.b16 %v233
      %v314 = vunpack.c.l.b16 %v234
      %v315 = vunpack.c.l.b16 %v235
      %v316 = vunpack.c.l.b16 %v236
      %v317 = vunpack.c.l.b16 %v237
      %v318 = vunpack.c.l.b16 %v238
      %v319 = vunpack.c.l.b16 %v239
      %v320 = vunpack.c.l.b16 %v240
      %v321 = vunpack.c.l.b16 %v241
      %v322 = vunpack.c.l.b16 %v242
      %v323 = vunpack.c.l.b16 %v243
      %v324 = vunpack.c.l.b16 %v244
      %v325 = vunpack.c.l.b16 %v245
      %v326 = vpack.c.b16 %v295, %v294
      %v327 = vpack.c.b16 %v297, %v296
      %v328 = vpack.c.b16 %v299, %v298
      %v329 = vpack.c.b16 %v301, %v300
      %v330 = vpack.c.b16 %v303, %v302
      %v331 = vpack.c.b16 %v305, %v304
      %v332 = vpack.c.b16 %v307, %v306
      %v333 = vpack.c.b16 %v309, %v308
      %v334 = vpack.c.b16 %v311, %v310
      %v335 = vpack.c.b16 %v313, %v312
      %v336 = vpack.c.b16 %v315, %v314
      %v337 = vpack.c.b16 %v317, %v316
      %v338 = vpack.c.b16 %v319, %v318
      %v339 = vpack.c.b16 %v321, %v320
      %v340 = vpack.c.b16 %v323, %v322
      %v341 = vpack.c.b16 %v325, %v324
      %v374 = vunpack.c.l.b16 %v246
      %v375 = vunpack.c.l.b16 %v247
      %v376 = vunpack.c.l.b16 %v248
      %v377 = vunpack.c.l.b16 %v249
      %v378 = vunpack.c.l.b16 %v250
      %v379 = vunpack.c.l.b16 %v251
      %v380 = vunpack.c.l.b16 %v252
      %v381 = vunpack.c.l.b16 %v253
      %v382 = vunpack.c.l.b16 %v254
      %v383 = vunpack.c.l.b16 %v255
      %v384 = vunpack.c.l.b16 %v256
      %v385 = vunpack.c.l.b16 %v257
      %v386 = vunpack.c.l.b16 %v258
      %v387 = vunpack.c.l.b16 %v259
      %v388 = vunpack.c.l.b16 %v260
      %v389 = vunpack.c.l.b16 %v261
      %v390 = vpack.c.b16 %v375, %v374
      %v391 = vpack.c.b16 %v377, %v376
      %v392 = vpack.c.b16 %v379, %v378
      %v393 = vpack.c.b16 %v381, %v380
      %v394 = vpack.c.b16 %v383, %v382
      %v395 = vpack.c.b16 %v385, %v384
      %v396 = vpack.c.b16 %v387, %v386
      %v397 = vpack.c.b16 %v389, %v388
      %406 = vmatpush.bf16.msra.mxu0 %v397
      %407 = vmatpush.bf16.msra.mxu0 %v396
      %408 = vmatpush.bf16.msra.mxu0 %v395
      %409 = vmatpush.bf16.msra.mxu0 %v394
      %410 = vmatpush.bf16.msra.mxu0 %v393
      %411 = vmatpush.bf16.msra.mxu0 %v392
      %412 = vmatpush.bf16.msra.mxu0 %v391
      %413 = vmatpush.bf16.msra.mxu0 %v390
      %414 = vmatmul.bf16.gmra.mxu0 %v326
      %v415 = vpop.f32.mrf.mxu0
      %v416 = vadd.f32 0.0, %v415
      %v417 = vpop.f32.mrf.mxu0
      %v418 = vadd.f32 0.0, %v417
      %419 = vmatmul.bf16.gmra.mxu0 %v327
      %v420 = vpop.f32.mrf.mxu0
      %v421 = vadd.f32 0.0, %v420
      %v422 = vpop.f32.mrf.mxu0
      %v423 = vadd.f32 0.0, %v422
      %424 = vmatmul.bf16.gmra.mxu0 %v328
      %v425 = vpop.f32.mrf.mxu0
      %v426 = vadd.f32 0.0, %v425
      %v427 = vpop.f32.mrf.mxu0
      %v428 = vadd.f32 0.0, %v427
      %429 = vmatmul.bf16.gmra.mxu0 %v329
      %v430 = vpop.f32.mrf.mxu0
      %v431 = vadd.f32 0.0, %v430
      %v432 = vpop.f32.mrf.mxu0
      %v433 = vadd.f32 0.0, %v432
      %434 = vmatmul.bf16.gmra.mxu0 %v330
      %v435 = vpop.f32.mrf.mxu0
      %v436 = vadd.f32 0.0, %v435
      %v437 = vpop.f32.mrf.mxu0
      %v438 = vadd.f32 0.0, %v437
      %439 = vmatmul.bf16.gmra.mxu0 %v331
      %v440 = vpop.f32.mrf.mxu0
      %v441 = vadd.f32 0.0, %v440
      %v442 = vpop.f32.mrf.mxu0
      %v443 = vadd.f32 0.0, %v442
      %444 = vmatmul.bf16.gmra.mxu0 %v332
      %v445 = vpop.f32.mrf.mxu0
      %v446 = vadd.f32 0.0, %v445
      %v447 = vpop.f32.mrf.mxu0
      %v448 = vadd.f32 0.0, %v447
      %449 = vmatmul.bf16.gmra.mxu0 %v333
      %v450 = vpop.f32.mrf.mxu0
      %v451 = vadd.f32 0.0, %v450
      %v452 = vpop.f32.mrf.mxu0
      %v453 = vadd.f32 0.0, %v452
      %454 = vmatmul.bf16.gmra.mxu0 %v334
      %v455 = vpop.f32.mrf.mxu0
      %v456 = vadd.f32 0.0, %v455
      %v457 = vpop.f32.mrf.mxu0
      %v458 = vadd.f32 0.0, %v457
      %459 = vmatmul.bf16.gmra.mxu0 %v335
      %v460 = vpop.f32.mrf.mxu0
      %v461 = vadd.f32 0.0, %v460
      %v462 = vpop.f32.mrf.mxu0
      %v463 = vadd.f32 0.0, %v462
      %464 = vmatmul.bf16.gmra.mxu0 %v336
      %v465 = vpop.f32.mrf.mxu0
      %v466 = vadd.f32 0.0, %v465
      %v467 = vpop.f32.mrf.mxu0
      %v468 = vadd.f32 0.0, %v467
      %469 = vmatmul.bf16.gmra.mxu0 %v337
      %v470 = vpop.f32.mrf.mxu0
      %v471 = vadd.f32 0.0, %v470
      %v472 = vpop.f32.mrf.mxu0
      %v473 = vadd.f32 0.0, %v472
      %474 = vmatmul.bf16.gmra.mxu0 %v338
      %v475 = vpop.f32.mrf.mxu0
      %v476 = vadd.f32 0.0, %v475
      %v477 = vpop.f32.mrf.mxu0
      %v478 = vadd.f32 0.0, %v477
      %479 = vmatmul.bf16.gmra.mxu0 %v339
      %v480 = vpop.f32.mrf.mxu0
      %v481 = vadd.f32 0.0, %v480
      %v482 = vpop.f32.mrf.mxu0
      %v483 = vadd.f32 0.0, %v482
      %484 = vmatmul.bf16.gmra.mxu0 %v340
      %v485 = vpop.f32.mrf.mxu0
      %v486 = vadd.f32 0.0, %v485
      %v487 = vpop.f32.mrf.mxu0
      %v488 = vadd.f32 0.0, %v487
      %489 = vmatmul.bf16.gmra.mxu0 %v341
      %v490 = vpop.f32.mrf.mxu0
      %v491 = vadd.f32 0.0, %v490
      %v492 = vpop.f32.mrf.mxu0
      %v493 = vadd.f32 0.0, %v492
      %494 = vdwg.mxu0
      %p495 = scmp.eq.s32.totalorder %s19, 0
      %p496 = scmp.eq.s32.totalorder %s20, 0
      %p497 = pnand %p495, %p496
      %p498 = pneg %p497
      // Predicated region
      $region37: #{_lambda_.6} parent=35 // pred_check
        _
      $region38: #{_lambda_.6} parent=35 // pred_check_branch
        %500 = sbr.rel (%p497) target = $region40
      $region39: #{_lambda_.6} parent=35 // pred_region
        %501 = vst [vmem:[#allocation2] sm:$0x1] 0.0
        %502 = vst [vmem:[#allocation3] sm:$0x1] 0.0
      $region40: #{_lambda_.6} parent=35 // pred_fallthru
        _
      // Predicated region
      $region41: #{_lambda_.6} parent=35 // pred_check
        %p503 = pneg %p495
      $region42: #{_lambda_.6} parent=35 // pred_check_branch
        %505 = sbr.rel (%p503) target = $region44
      $region43: #{_lambda_.6} parent=35 // pred_region
        %v506 = vld [vmem:[#allocation2] sm:$0x1]
        %v507 = vadd.f32 %v416, %v418
        %v508 = vadd.f32 %v507, %v421
        %v509 = vadd.f32 %v508, %v423
        %v510 = vadd.f32 %v509, %v426
        %v511 = vadd.f32 %v510, %v428
        %v512 = vadd.f32 %v511, %v431
        %v513 = vadd.f32 %v512, %v433
        %v514 = vadd.f32 %v513, %v436
        %v515 = vadd.f32 %v514, %v438
        %v516 = vadd.f32 %v515, %v441
        %v517 = vadd.f32 %v516, %v443
        %v518 = vadd.f32 %v517, %v446
        %v519 = vadd.f32 %v518, %v448
        %v520 = vadd.f32 %v519, %v451
        %v521 = vadd.f32 %v520, %v453
        %v522 = vadd.f32 %v521, %v456
        %v523 = vadd.f32 %v522, %v458
        %v524 = vadd.f32 %v523, %v461
        %v525 = vadd.f32 %v524, %v463
        %v526 = vadd.f32 %v525, %v466
        %v527 = vadd.f32 %v526, %v468
        %v528 = vadd.f32 %v527, %v471
        %v529 = vadd.f32 %v528, %v473
        %v530 = vadd.f32 %v529, %v476
        %v531 = vadd.f32 %v530, %v478
        %v532 = vadd.f32 %v531, %v481
        %v533 = vadd.f32 %v532, %v483
        %v534 = vadd.f32 %v533, %v486
        %v535 = vadd.f32 %v534, %v488
        %v536 = vadd.f32 %v535, %v491
        %v537 = vadd.f32 %v536, %v493
        %v538 = vrot.slane %v537, 4
        %v539 = vadd.f32 %v537, %v538
        %v540 = vrot.slane %v539, 2
        %v541 = vadd.f32 %v539, %v540
        %v542 = vrot.slane %v541, 1
        %v543 = vadd.f32 %v541, %v542
        %v544 = vadd.f32 %v506, %v543
        %545 = vst [vmem:[#allocation2] sm:$0x1] %v544
        %v546 = vld [vmem:[#allocation3] sm:$0x1]
        %v547 = vmul.f32 %v416, %v416
        %v548 = vmul.f32 %v418, %v418
        %v549 = vmul.f32 %v421, %v421
        %v550 = vmul.f32 %v423, %v423
        %v551 = vmul.f32 %v426, %v426
        %v552 = vmul.f32 %v428, %v428
        %v553 = vmul.f32 %v431, %v431
        %v554 = vmul.f32 %v433, %v433
        %v555 = vmul.f32 %v436, %v436
        %v556 = vmul.f32 %v438, %v438
        %v557 = vmul.f32 %v441, %v441
        %v558 = vmul.f32 %v443, %v443
        %v559 = vmul.f32 %v446, %v446
        %v560 = vmul.f32 %v448, %v448
        %v561 = vmul.f32 %v451, %v451
        %v562 = vmul.f32 %v453, %v453
        %v563 = vmul.f32 %v456, %v456
        %v564 = vmul.f32 %v458, %v458
        %v565 = vmul.f32 %v461, %v461
        %v566 = vmul.f32 %v463, %v463
        %v567 = vmul.f32 %v466, %v466
        %v568 = vmul.f32 %v468, %v468
        %v569 = vmul.f32 %v471, %v471
        %v570 = vmul.f32 %v473, %v473
        %v571 = vmul.f32 %v476, %v476
        %v572 = vmul.f32 %v478, %v478
        %v573 = vmul.f32 %v481, %v481
        %v574 = vmul.f32 %v483, %v483
        %v575 = vmul.f32 %v486, %v486
        %v576 = vmul.f32 %v488, %v488
        %v577 = vmul.f32 %v491, %v491
        %v578 = vmul.f32 %v493, %v493
        %v579 = vadd.f32 %v547, %v548
        %v580 = vadd.f32 %v579, %v549
        %v581 = vadd.f32 %v580, %v550
        %v582 = vadd.f32 %v581, %v551
        %v583 = vadd.f32 %v582, %v552
        %v584 = vadd.f32 %v583, %v553
        %v585 = vadd.f32 %v584, %v554
        %v586 = vadd.f32 %v585, %v555
        %v587 = vadd.f32 %v586, %v556
        %v588 = vadd.f32 %v587, %v557
        %v589 = vadd.f32 %v588, %v558
        %v590 = vadd.f32 %v589, %v559
        %v591 = vadd.f32 %v590, %v560
        %v592 = vadd.f32 %v591, %v561
        %v593 = vadd.f32 %v592, %v562
        %v594 = vadd.f32 %v593, %v563
        %v595 = vadd.f32 %v594, %v564
        %v596 = vadd.f32 %v595, %v565
        %v597 = vadd.f32 %v596, %v566
        %v598 = vadd.f32 %v597, %v567
        %v599 = vadd.f32 %v598, %v568
        %v600 = vadd.f32 %v599, %v569
        %v601 = vadd.f32 %v600, %v570
        %v602 = vadd.f32 %v601, %v571
        %v603 = vadd.f32 %v602, %v572
        %v604 = vadd.f32 %v603, %v573
        %v605 = vadd.f32 %v604, %v574
        %v606 = vadd.f32 %v605, %v575
        %v607 = vadd.f32 %v606, %v576
        %v608 = vadd.f32 %v607, %v577
        %v609 = vadd.f32 %v608, %v578
        %v610 = vrot.slane %v609, 4
        %v611 = vadd.f32 %v609, %v610
        %v612 = vrot.slane %v611, 2
        %v613 = vadd.f32 %v611, %v612
        %v614 = vrot.slane %v613, 1
        %v615 = vadd.f32 %v613, %v614
        %v616 = vadd.f32 %v546, %v615
        %617 = vst [vmem:[#allocation3] sm:$0x1] %v616
        %618 = vst [vmem:[%s211] sm:$0xf] 0
        %619 = vst [vmem:[%s211 + $0x4] sm:$0xf] 0
        %620 = vst [vmem:[%s211 + $0x8] sm:$0xf] 0
        %621 = vst [vmem:[%s211 + $0xc] sm:$0xf] 0
        %622 = vst [vmem:[%s211 + $0x10] sm:$0xf] 0
        %623 = vst [vmem:[%s211 + $0x14] sm:$0xf] 0
        %624 = vst [vmem:[%s211 + $0x18] sm:$0xf] 0
        %625 = vst [vmem:[%s211 + $0x1c] sm:$0xf] 0
        %626 = vst [vmem:[%s211 + $0x20] sm:$0xf] 0
        %627 = vst [vmem:[%s211 + $0x24] sm:$0xf] 0
        %628 = vst [vmem:[%s211 + $0x28] sm:$0xf] 0
        %629 = vst [vmem:[%s211 + $0x2c] sm:$0xf] 0
        %630 = vst [vmem:[%s211 + $0x30] sm:$0xf] 0
        %631 = vst [vmem:[%s211 + $0x34] sm:$0xf] 0
        %632 = vst [vmem:[%s211 + $0x38] sm:$0xf] 0
        %633 = vst [vmem:[%s211 + $0x3c] sm:$0xf] 0
        %634 = vst [vmem:[%s211 + $0x40] sm:$0xf] 0
        %635 = vst [vmem:[%s211 + $0x44] sm:$0xf] 0
        %636 = vst [vmem:[%s211 + $0x48] sm:$0xf] 0
        %637 = vst [vmem:[%s211 + $0x4c] sm:$0xf] 0
        %638 = vst [vmem:[%s211 + $0x50] sm:$0xf] 0
        %639 = vst [vmem:[%s211 + $0x54] sm:$0xf] 0
        %640 = vst [vmem:[%s211 + $0x58] sm:$0xf] 0
        %641 = vst [vmem:[%s211 + $0x5c] sm:$0xf] 0
        %642 = vst [vmem:[%s211 + $0x60] sm:$0xf] 0
        %643 = vst [vmem:[%s211 + $0x64] sm:$0xf] 0
        %644 = vst [vmem:[%s211 + $0x68] sm:$0xf] 0
        %645 = vst [vmem:[%s211 + $0x6c] sm:$0xf] 0
        %646 = vst [vmem:[%s211 + $0x70] sm:$0xf] 0
        %647 = vst [vmem:[%s211 + $0x74] sm:$0xf] 0
        %648 = vst [vmem:[%s211 + $0x78] sm:$0xf] 0
        %649 = vst [vmem:[%s211 + $0x7c] sm:$0xf] 0
      $region44: #{_lambda_.6} parent=35 // pred_fallthru
        _
      %p650 = scmp.eq.s32.totalorder %s19, 1
      // Predicated region
      $region45: #{_lambda_.6} parent=35 // pred_check
        %p651 = pneg %p650
      $region46: #{_lambda_.6} parent=35 // pred_check_branch
        %653 = sbr.rel (%p651) target = $region48
      $region47: #{_lambda_.6} parent=35 // pred_region
        %v654 = vld [vmem:[#allocation2] sm:$0x1]
        %v655 = vmul.f32 %v654, 0.001953125
        %v656 = vld [vmem:[#allocation3] sm:$0x1]
        %v657 = vmul.f32 %v656, 0.001953125
        %v658 = vmul.f32 %v655, %v655
        %v659 = vsub.f32 %v657, %v658
        %v660 = vadd.f32 %v659, 1e-05
        %v661 = vrsqrt.pop %v660
        %v662 = vmul.f32 %v661, %v660
        %v663 = vmul.f32 %v662, %v661
        %v664 = vmul.f32 0.5, %v663
        %v665 = vsub.f32 1.5, %v664
        %v666 = vmul.f32 %v661, %v665
        %vm667 = vweird.f32 %v660
        %vm668 = vweird.f32 %v661
        %vm669 = vmor %vm667, %vm668
        %v670 = vsel %vm669, %v661, %v666
        %v671 = vld [vmem:[%s2] sm:$0x1]
        %v672 = vmul.f32 %v671, %v670
        %v673 = vld [vmem:[%s3] sm:$0x1]
        %v674 = vmul.f32 %v655, %v672
        %v675 = vsub.f32 %v673, %v674
        %v677 = vperm.slane %v672, 0
        %v679 = vmul.f32 %v416, %v677
        %v680 = vmul.f32 %v418, %v677
        %v681 = vmul.f32 %v421, %v677
        %v682 = vmul.f32 %v423, %v677
        %v683 = vmul.f32 %v426, %v677
        %v684 = vmul.f32 %v428, %v677
        %v685 = vmul.f32 %v431, %v677
        %v686 = vmul.f32 %v433, %v677
        %v687 = vmul.f32 %v436, %v677
        %v688 = vmul.f32 %v438, %v677
        %v689 = vmul.f32 %v441, %v677
        %v690 = vmul.f32 %v443, %v677
        %v691 = vmul.f32 %v446, %v677
        %v692 = vmul.f32 %v448, %v677
        %v693 = vmul.f32 %v451, %v677
        %v694 = vmul.f32 %v453, %v677
        %v695 = vmul.f32 %v456, %v677
        %v696 = vmul.f32 %v458, %v677
        %v697 = vmul.f32 %v461, %v677
        %v698 = vmul.f32 %v463, %v677
        %v699 = vmul.f32 %v466, %v677
        %v700 = vmul.f32 %v468, %v677
        %v701 = vmul.f32 %v471, %v677
        %v702 = vmul.f32 %v473, %v677
        %v703 = vmul.f32 %v476, %v677
        %v704 = vmul.f32 %v478, %v677
        %v705 = vmul.f32 %v481, %v677
        %v706 = vmul.f32 %v483, %v677
        %v707 = vmul.f32 %v486, %v677
        %v708 = vmul.f32 %v488, %v677
        %v709 = vmul.f32 %v491, %v677
        %v710 = vmul.f32 %v493, %v677
        %v712 = vperm.slane %v675, 0
        %v714 = vadd.f32 %v679, %v712
        %v715 = vadd.f32 %v680, %v712
        %v716 = vadd.f32 %v681, %v712
        %v717 = vadd.f32 %v682, %v712
        %v718 = vadd.f32 %v683, %v712
        %v719 = vadd.f32 %v684, %v712
        %v720 = vadd.f32 %v685, %v712
        %v721 = vadd.f32 %v686, %v712
        %v722 = vadd.f32 %v687, %v712
        %v723 = vadd.f32 %v688, %v712
        %v724 = vadd.f32 %v689, %v712
        %v725 = vadd.f32 %v690, %v712
        %v726 = vadd.f32 %v691, %v712
        %v727 = vadd.f32 %v692, %v712
        %v728 = vadd.f32 %v693, %v712
        %v729 = vadd.f32 %v694, %v712
        %v730 = vadd.f32 %v695, %v712
        %v731 = vadd.f32 %v696, %v712
        %v732 = vadd.f32 %v697, %v712
        %v733 = vadd.f32 %v698, %v712
        %v734 = vadd.f32 %v699, %v712
        %v735 = vadd.f32 %v700, %v712
        %v736 = vadd.f32 %v701, %v712
        %v737 = vadd.f32 %v702, %v712
        %v738 = vadd.f32 %v703, %v712
        %v739 = vadd.f32 %v704, %v712
        %v740 = vadd.f32 %v705, %v712
        %v741 = vadd.f32 %v706, %v712
        %v742 = vadd.f32 %v707, %v712
        %v743 = vadd.f32 %v708, %v712
        %v744 = vadd.f32 %v709, %v712
        %v745 = vadd.f32 %v710, %v712
        %v746 = vmul.f32 %v714, 0.2
        %v747 = vmul.f32 %v715, 0.2
        %v748 = vmul.f32 %v716, 0.2
        %v749 = vmul.f32 %v717, 0.2
        %v750 = vmul.f32 %v718, 0.2
        %v751 = vmul.f32 %v719, 0.2
        %v752 = vmul.f32 %v720, 0.2
        %v753 = vmul.f32 %v721, 0.2
        %v754 = vmul.f32 %v722, 0.2
        %v755 = vmul.f32 %v723, 0.2
        %v756 = vmul.f32 %v724, 0.2
        %v757 = vmul.f32 %v725, 0.2
        %v758 = vmul.f32 %v726, 0.2
        %v759 = vmul.f32 %v727, 0.2
        %v760 = vmul.f32 %v728, 0.2
        %v761 = vmul.f32 %v729, 0.2
        %v762 = vmul.f32 %v730, 0.2
        %v763 = vmul.f32 %v731, 0.2
        %v764 = vmul.f32 %v732, 0.2
        %v765 = vmul.f32 %v733, 0.2
        %v766 = vmul.f32 %v734, 0.2
        %v767 = vmul.f32 %v735, 0.2
        %v768 = vmul.f32 %v736, 0.2
        %v769 = vmul.f32 %v737, 0.2
        %v770 = vmul.f32 %v738, 0.2
        %v771 = vmul.f32 %v739, 0.2
        %v772 = vmul.f32 %v740, 0.2
        %v773 = vmul.f32 %v741, 0.2
        %v774 = vmul.f32 %v742, 0.2
        %v775 = vmul.f32 %v743, 0.2
        %v776 = vmul.f32 %v744, 0.2
        %v777 = vmul.f32 %v745, 0.2
        %v778 = vmax.f32 %v714, %v746
        %v779 = vmax.f32 %v715, %v747
        %v780 = vmax.f32 %v716, %v748
        %v781 = vmax.f32 %v717, %v749
        %v782 = vmax.f32 %v718, %v750
        %v783 = vmax.f32 %v719, %v751
        %v784 = vmax.f32 %v720, %v752
        %v785 = vmax.f32 %v721, %v753
        %v786 = vmax.f32 %v722, %v754
        %v787 = vmax.f32 %v723, %v755
        %v788 = vmax.f32 %v724, %v756
        %v789 = vmax.f32 %v725, %v757
        %v790 = vmax.f32 %v726, %v758
        %v791 = vmax.f32 %v727, %v759
        %v792 = vmax.f32 %v728, %v760
        %v793 = vmax.f32 %v729, %v761
        %v794 = vmax.f32 %v730, %v762
        %v795 = vmax.f32 %v731, %v763
        %v796 = vmax.f32 %v732, %v764
        %v797 = vmax.f32 %v733, %v765
        %v798 = vmax.f32 %v734, %v766
        %v799 = vmax.f32 %v735, %v767
        %v800 = vmax.f32 %v736, %v768
        %v801 = vmax.f32 %v737, %v769
        %v802 = vmax.f32 %v738, %v770
        %v803 = vmax.f32 %v739, %v771
        %v804 = vmax.f32 %v740, %v772
        %v805 = vmax.f32 %v741, %v773
        %v806 = vmax.f32 %v742, %v774
        %v807 = vmax.f32 %v743, %v775
        %v808 = vmax.f32 %v744, %v776
        %v809 = vmax.f32 %v745, %v777
        %v810 = vpack.c.bf16 %v778, %v778
        %v811 = vpack.c.bf16 %v779, %v779
        %v812 = vpack.c.bf16 %v780, %v780
        %v813 = vpack.c.bf16 %v781, %v781
        %v814 = vpack.c.bf16 %v782, %v782
        %v815 = vpack.c.bf16 %v783, %v783
        %v816 = vpack.c.bf16 %v784, %v784
        %v817 = vpack.c.bf16 %v785, %v785
        %v818 = vpack.c.bf16 %v786, %v786
        %v819 = vpack.c.bf16 %v787, %v787
        %v820 = vpack.c.bf16 %v788, %v788
        %v821 = vpack.c.bf16 %v789, %v789
        %v822 = vpack.c.bf16 %v790, %v790
        %v823 = vpack.c.bf16 %v791, %v791
        %v824 = vpack.c.bf16 %v792, %v792
        %v825 = vpack.c.bf16 %v793, %v793
        %v826 = vpack.c.bf16 %v794, %v794
        %v827 = vpack.c.bf16 %v795, %v795
        %v828 = vpack.c.bf16 %v796, %v796
        %v829 = vpack.c.bf16 %v797, %v797
        %v830 = vpack.c.bf16 %v798, %v798
        %v831 = vpack.c.bf16 %v799, %v799
        %v832 = vpack.c.bf16 %v800, %v800
        %v833 = vpack.c.bf16 %v801, %v801
        %v834 = vpack.c.bf16 %v802, %v802
        %v835 = vpack.c.bf16 %v803, %v803
        %v836 = vpack.c.bf16 %v804, %v804
        %v837 = vpack.c.bf16 %v805, %v805
        %v838 = vpack.c.bf16 %v806, %v806
        %v839 = vpack.c.bf16 %v807, %v807
        %v840 = vpack.c.bf16 %v808, %v808
        %v841 = vpack.c.bf16 %v809, %v809
        %842 = vst [vmem:[%s211] sm:$0xf] %v810
        %843 = vst [vmem:[%s211 + $0x4] sm:$0xf] %v811
        %844 = vst [vmem:[%s211 + $0x8] sm:$0xf] %v812
        %845 = vst [vmem:[%s211 + $0xc] sm:$0xf] %v813
        %846 = vst [vmem:[%s211 + $0x10] sm:$0xf] %v814
        %847 = vst [vmem:[%s211 + $0x14] sm:$0xf] %v815
        %848 = vst [vmem:[%s211 + $0x18] sm:$0xf] %v816
        %849 = vst [vmem:[%s211 + $0x1c] sm:$0xf] %v817
        %850 = vst [vmem:[%s211 + $0x20] sm:$0xf] %v818
        %851 = vst [vmem:[%s211 + $0x24] sm:$0xf] %v819
        %852 = vst [vmem:[%s211 + $0x28] sm:$0xf] %v820
        %853 = vst [vmem:[%s211 + $0x2c] sm:$0xf] %v821
        %854 = vst [vmem:[%s211 + $0x30] sm:$0xf] %v822
        %855 = vst [vmem:[%s211 + $0x34] sm:$0xf] %v823
        %856 = vst [vmem:[%s211 + $0x38] sm:$0xf] %v824
        %857 = vst [vmem:[%s211 + $0x3c] sm:$0xf] %v825
        %858 = vst [vmem:[%s211 + $0x40] sm:$0xf] %v826
        %859 = vst [vmem:[%s211 + $0x44] sm:$0xf] %v827
        %860 = vst [vmem:[%s211 + $0x48] sm:$0xf] %v828
        %861 = vst [vmem:[%s211 + $0x4c] sm:$0xf] %v829
        %862 = vst [vmem:[%s211 + $0x50] sm:$0xf] %v830
        %863 = vst [vmem:[%s211 + $0x54] sm:$0xf] %v831
        %864 = vst [vmem:[%s211 + $0x58] sm:$0xf] %v832
        %865 = vst [vmem:[%s211 + $0x5c] sm:$0xf] %v833
        %866 = vst [vmem:[%s211 + $0x60] sm:$0xf] %v834
        %867 = vst [vmem:[%s211 + $0x64] sm:$0xf] %v835
        %868 = vst [vmem:[%s211 + $0x68] sm:$0xf] %v836
        %869 = vst [vmem:[%s211 + $0x6c] sm:$0xf] %v837
        %870 = vst [vmem:[%s211 + $0x70] sm:$0xf] %v838
        %871 = vst [vmem:[%s211 + $0x74] sm:$0xf] %v839
        %872 = vst [vmem:[%s211 + $0x78] sm:$0xf] %v840
        %873 = vst [vmem:[%s211 + $0x7c] sm:$0xf] %v841
      $region48: #{_lambda_.6} parent=35 // pred_fallthru
        _
      %s874 = smul.u32 32, %s20
      %p875 = scmp.lt.s32.totalorder %s874, 63
      %s876 = scalar_select %p875, %s874, 63
      %s877 = smul.addr %s876, 4
      %s878 = scalar_lea.vmem %s4, %s877
      // Predicated region
      $region49: #{_lambda_.6} parent=35 // pred_check
        %p879 = pneg %p134
      $region50: #{_lambda_.6} parent=35 // pred_check_branch
        %881 = sbr.rel (%p879) target = $region52
      $region51: #{_lambda_.6} parent=35 // pred_region
        %s882 = smul.u32 32, %s20
      $region52: #{_lambda_.6} parent=35 // pred_fallthru
        _
    $region36: #{_lambda_.6} parent=5 // pred_fallthru
      _
    %p883 = scmp.le.s32.totalorder 2, %s10
    // Predicated region
    $region53: #{_lambda_.6} parent=5 // pred_check
      %p884 = pneg %p883
    $region54: #{_lambda_.6} parent=5 // pred_check_branch
      %886 = sbr.rel (%p884) target = $region56
    $region55: #{_lambda_.6} parent=5 // pred_region
      %s887 = ssub.s32 %s10, 2
      // Predicated region
      $region57: #{_lambda_.6} parent=55 // pred_check
        %p888 = pneg %p140
      $region58: #{_lambda_.6} parent=55 // pred_check_branch
        %890 = sbr.rel (%p888) target = $region60
      $region59: #{_lambda_.6} parent=55 // pred_region
        %s891 = smul.u32 32, %s22
        %p892 = scmp.lt.s32.totalorder %s891, 63
        %s893 = scalar_select %p892, %s891, 63
        %s894 = smul.addr %s893, 4
        %s895 = scalar_lea.vmem %s4, %s894
      $region60: #{_lambda_.6} parent=55 // pred_fallthru
        _
    $region56: #{_lambda_.6} parent=5 // pred_fallthru
      _
  $region6: #{_lambda_.6} parent=0 // loop_footer
    %s14 = sadd.s32 1, %s10
  $region7: #{_lambda_.6} parent=0 // loop_footer_branch
    %9 = sbr.rel target = $region3
  $region8: #{_lambda_.6} parent=0 // loop_exit
    _

// kernel: _lambda_.7
$region0: #{_lambda_.7}
  #allocation0 [shape = 'u32[]', space=smem, size = 0x4, offset = 0x4, fixed_abs, tag = 'smem constant byte address 0x4 - core index']
  #allocation1 [shape = 'u32[72,128]{1,0:T(1,128)}', space=vmem, size = 0x9000, scoped, tag = 'internal scratch']
  #allocation2 [shape = 'f32[1,128]{1,0:T(1,128)}', space=vmem, size = 0x200, scoped, tag = 'scratch operand']
  #allocation3 [shape = 'f32[1,128]{1,0:T(1,128)}', space=vmem, size = 0x200, scoped, tag = 'scratch operand']
  %s0 = inlined_call_operand.vmem [shape: bf16[128,256], index: 0, kind: input, shape index: {}]
  %s1 = inlined_call_operand.vmem [shape: bf16[256,128], index: 1, kind: input, shape index: {}]
  %s2 = inlined_call_operand.vmem [shape: f32[1,128], index: 2, kind: input, shape index: {}]
  %s3 = inlined_call_operand.vmem [shape: f32[1,128], index: 3, kind: input, shape index: {}]
  %s4 = inlined_call_operand.vmem [shape: bf16[128,128], index: 4, kind: output, shape index: {}]
  %s5 = sld [smem:[#allocation0]]
  $region61: #{_lambda_.7} parent=0
    _
  %s7 = ssub.s32 1, %s5
  %s8 = scalar_select 0, %s7, %s5
  loop: start=0, step=1, limit=4
  $region2: #{_lambda_.7} parent=0 // loop_pre_header
    _
  $region3: #{_lambda_.7} parent=0 // loop_header
    %s10 = sphi 0, %s14
    %p11 = scmp.ge.s32.totalorder %s10, 4
    %s17 = sphi 0, %s29
    %s18 = sphi 0, %s25
    %s19 = sphi 0, %s17
    %s20 = sphi 0, %s18
    %s21 = sphi 0, %s19
    %s22 = sphi 0, %s20
    %s32 = sphi 0, %s34
    %s35 = sphi 0, %s32
    %s36 = sphi 0, %s35
    %s52 = sphi 0, %s36
    %s56 = sphi 0, %s56
    %s58 = sphi 0, %s56
    %s59 = sphi 0, %s58
    %s73 = sphi 0, %s59
    %s77 = sphi 0, %s77
    %s79 = sphi 0, %s77
    %s80 = sphi 0, %s79
    %s94 = sphi 0, %s80
    %s98 = sphi 0, %s98
    %s100 = sphi 0, %s98
    %s101 = sphi 0, %s100
    %s115 = sphi 0, %s101
    %s121 = sphi 0, %s123
    %s124 = sphi 0, %s121
    %s125 = sphi 0, %s124
    %s141 = sphi 0, %s125
  $region4: #{_lambda_.7} parent=0 // loop_header_branch
    %13 = sbr.rel (%p11) target = $region8
  $region5: #{_lambda_.7} parent=0 // loop_body
    %s15 = ssub.s32 %s10, 1
    %s16 = ssub.s32 %s10, 2
    %s23 = sadd.s32 1, %s18
    %p24 = scmp.ge.s32.totalorder %s23, 1
    %s25 = scalar_select %p24, 0, %s23
    %s26 = sadd.s32 1, %s17
    %s27 = scalar_select %p24, %s26, %s17
    %p28 = scmp.ge.s32.totalorder %s27, 2
    %s29 = scalar_select %p28, 0, %s27
    %s30 = ssub.s32 %s18, %s25
    %p31 = scmp.eq.s32.totalorder %s30, 0
    %s33 = sadd.s32 %s32, 1
    %s34 = scalar_select %p31, %s32, %s33
    %p37 = pneg %p31
    %p38 = scmp.eq.s32.totalorder %s10, 1
    %p39 = por %p37, %p38
    %p40 = scmp.ne.s32.totalorder %s32, %s35
    %p41 = scmp.eq.s32.totalorder %s10, 0
    %p42 = por %p40, %p41
    %p43 = scmp.ne.s32.totalorder %s32, %s35
    %p44 = scmp.eq.s32.totalorder %s15, 1
    %p45 = por %p43, %p44
    %p46 = scmp.ne.s32.totalorder %s35, %s36
    %p47 = scmp.eq.s32.totalorder %s15, 0
    %p48 = por %p46, %p47
    %p49 = scmp.ne.s32.totalorder %s35, %s36
    %p50 = scmp.eq.s32.totalorder %s16, 1
    %p51 = por %p49, %p50
    %p53 = scmp.ne.s32.totalorder %s36, %s52
    %p54 = scmp.eq.s32.totalorder %s16, 0
    %p55 = por %p53, %p54
    %s57 = sadd.s32 %s56, 1
    %p60 = scmp.eq.s32.totalorder %s10, 1
    %p61 = scmp.ne.s32.totalorder %s56, %s58
    %p62 = scmp.eq.s32.totalorder %s10, 0
    %p63 = por %p61, %p62
    %p64 = scmp.ne.s32.totalorder %s56, %s58
    %p65 = scmp.eq.s32.totalorder %s15, 1
    %p66 = por %p64, %p65
    %p67 = scmp.ne.s32.totalorder %s58, %s59
    %p68 = scmp.eq.s32.totalorder %s15, 0
    %p69 = por %p67, %p68
    %p70 = scmp.ne.s32.totalorder %s58, %s59
    %p71 = scmp.eq.s32.totalorder %s16, 1
    %p72 = por %p70, %p71
    %p74 = scmp.ne.s32.totalorder %s59, %s73
    %p75 = scmp.eq.s32.totalorder %s16, 0
    %p76 = por %p74, %p75
    %s78 = sadd.s32 %s77, 1
    %p81 = scmp.eq.s32.totalorder %s10, 1
    %p82 = scmp.ne.s32.totalorder %s77, %s79
    %p83 = scmp.eq.s32.totalorder %s10, 0
    %p84 = por %p82, %p83
    %p85 = scmp.ne.s32.totalorder %s77, %s79
    %p86 = scmp.eq.s32.totalorder %s15, 1
    %p87 = por %p85, %p86
    %p88 = scmp.ne.s32.totalorder %s79, %s80
    %p89 = scmp.eq.s32.totalorder %s15, 0
    %p90 = por %p88, %p89
    %p91 = scmp.ne.s32.totalorder %s79, %s80
    %p92 = scmp.eq.s32.totalorder %s16, 1
    %p93 = por %p91, %p92
    %p95 = scmp.ne.s32.totalorder %s80, %s94
    %p96 = scmp.eq.s32.totalorder %s16, 0
    %p97 = por %p95, %p96
    %s99 = sadd.s32 %s98, 1
    %p102 = scmp.eq.s32.totalorder %s10, 1
    %p103 = scmp.ne.s32.totalorder %s98, %s100
    %p104 = scmp.eq.s32.totalorder %s10, 0
    %p105 = por %p103, %p104
    %p106 = scmp.ne.s32.totalorder %s98, %s100
    %p107 = scmp.eq.s32.totalorder %s15, 1
    %p108 = por %p106, %p107
    %p109 = scmp.ne.s32.totalorder %s100, %s101
    %p110 = scmp.eq.s32.totalorder %s15, 0
    %p111 = por %p109, %p110
    %p112 = scmp.ne.s32.totalorder %s100, %s101
    %p113 = scmp.eq.s32.totalorder %s16, 1
    %p114 = por %p112, %p113
    %p116 = scmp.ne.s32.totalorder %s101, %s115
    %p117 = scmp.eq.s32.totalorder %s16, 0
    %p118 = por %p116, %p117
    %s119 = ssub.s32 %s18, %s25
    %p120 = scmp.eq.s32.totalorder %s119, 0
    %s122 = sadd.s32 %s121, 1
    %s123 = scalar_select %p120, %s121, %s122
    %p126 = pneg %p120
    %p127 = scmp.eq.s32.totalorder %s10, 1
    %p128 = por %p126, %p127
    %p129 = scmp.ne.s32.totalorder %s121, %s124
    %p130 = scmp.eq.s32.totalorder %s10, 0
    %p131 = por %p129, %p130
    %p132 = scmp.ne.s32.totalorder %s121, %s124
    %p133 = scmp.eq.s32.totalorder %s15, 1
    %p134 = por %p132, %p133
    %p135 = scmp.ne.s32.totalorder %s124, %s125
    %p136 = scmp.eq.s32.totalorder %s15, 0
    %p137 = por %p135, %p136
    %p138 = scmp.ne.s32.totalorder %s124, %s125
    %p139 = scmp.eq.s32.totalorder %s16, 1
    %p140 = por %p138, %p139
    %p142 = scmp.ne.s32.totalorder %s125, %s141
    %p143 = scmp.eq.s32.totalorder %s16, 0
    %p144 = por %p142, %p143
    %p145 = scmp.le.s32.totalorder 1, %s10
    %p146 = scmp.lt.s32.totalorder %s10, 3
    %p147 = pnand %p145, %p146
    %p148 = pneg %p147
    // Predicated region
    $region9: #{_lambda_.7} parent=5 // pred_check
      _
    $region10: #{_lambda_.7} parent=5 // pred_check_branch
      %150 = sbr.rel (%p147) target = $region12
    $region11: #{_lambda_.7} parent=5 // pred_region
      %s151 = ssub.s32 %s10, 1
      // Predicated region
      $region13: #{_lambda_.7} parent=11 // pred_check
        %p152 = pneg %p48
      $region14: #{_lambda_.7} parent=11 // pred_check_branch
        %154 = sbr.rel (%p152) target = $region16
      $region15: #{_lambda_.7} parent=11 // pred_region
        %s155 = smul.u32 16, %s20
        %p156 = scmp.lt.s32.totalorder %s155, 15
        %s157 = scalar_select %p156, %s155, 15
        %s158 = smul.addr %s157, 2
        %s159 = smul.addr %s158, 4
        %s160 = scalar_lea.vmem %s0, %s159
        %s161 = smul.u32 16, %s20
      $region16: #{_lambda_.7} parent=11 // pred_fallthru
        _
      // Predicated region
      $region17: #{_lambda_.7} parent=11 // pred_check
        %p162 = pneg %p69
      $region18: #{_lambda_.7} parent=11 // pred_check_branch
        %164 = sbr.rel (%p162) target = $region20
      $region19: #{_lambda_.7} parent=11 // pred_region
        _
      $region20: #{_lambda_.7} parent=11 // pred_fallthru
        _
      // Predicated region
      $region21: #{_lambda_.7} parent=11 // pred_check
        %p165 = pneg %p90
      $region22: #{_lambda_.7} parent=11 // pred_check_branch
        %167 = sbr.rel (%p165) target = $region24
      $region23: #{_lambda_.7} parent=11 // pred_region
        _
      $region24: #{_lambda_.7} parent=11 // pred_fallthru
        _
      // Predicated region
      $region25: #{_lambda_.7} parent=11 // pred_check
        %p168 = pneg %p111
      $region26: #{_lambda_.7} parent=11 // pred_check_branch
        %170 = sbr.rel (%p168) target = $region28
      $region27: #{_lambda_.7} parent=11 // pred_region
        _
      $region28: #{_lambda_.7} parent=11 // pred_fallthru
        _
    $region12: #{_lambda_.7} parent=5 // pred_fallthru
      _
    %p171 = scmp.lt.s32.totalorder %s10, 2
    // Predicated region
    $region29: #{_lambda_.7} parent=5 // pred_check
      %p172 = pneg %p171
    $region30: #{_lambda_.7} parent=5 // pred_check_branch
      %174 = sbr.rel (%p172) target = $region32
    $region31: #{_lambda_.7} parent=5 // pred_region
      _
    $region32: #{_lambda_.7} parent=5 // pred_fallthru
      _
    %p175 = scmp.le.s32.totalorder 1, %s10
    %p176 = scmp.lt.s32.totalorder %s10, 3
    %p177 = pnand %p175, %p176
    %p178 = pneg %p177
    // Predicated region
    $region33: #{_lambda_.7} parent=5 // pred_check
      _
    $region34: #{_lambda_.7} parent=5 // pred_check_branch
      %180 = sbr.rel (%p177) target = $region36
    $region35: #{_lambda_.7} parent=5 // pred_region
      %s181 = ssub.s32 %s10, 1
      %s182 = smul.u32 16, %s20
      %p183 = scmp.lt.s32.totalorder %s182, 15
      %s184 = scalar_select %p183, %s182, 15
      %s185 = smul.addr %s184, 2
      %s186 = smul.addr %s185, 4
      %s187 = scalar_lea.vmem %s0, %s186
      %p188 = pneg %p48
      %p189 = pneg %p45
      %p190 = pneg %p69
      %p191 = pneg %p66
      %p192 = pneg %p90
      %p193 = pneg %p87
      %p194 = pneg %p111
      %p195 = pneg %p108
      %p196 = pneg %p137
      %p197 = pneg %p134
      %s198 = smul.u32 16, %s20
      %p199 = scmp.lt.s32.totalorder %s198, 15
      %s200 = scalar_select %p199, %s198, 15
      %s201 = smul.addr %s200, 4
      %s202 = scalar_lea.vmem %s4, %s201
      %s203 = smul.u32 16, %s20
      %p204 = scmp.lt.s32.totalorder %s203, 15
      %s205 = scalar_select %p204, %s203, 15
      %s206 = smul.addr %s205, 2
      %s207 = smul.addr %s206, 4
      %s208 = scalar_lea.vmem %s0, %s207
      %s209 = smul.u32 16, %s20
      %s210 = smul.u32 16, %s20
      %p211 = scmp.lt.s32.totalorder %s210, 15
      %s212 = scalar_select %p211, %s210, 15
      %s213 = smul.addr %s212, 4
      %s214 = scalar_lea.vmem %s4, %s213
      %s215 = smul.u32 16, %s20
      %v217 = vld [vmem:[%s208] sm:$0xff]
      %v218 = vld [vmem:[%s208 + $0x8] sm:$0xff]
      %v219 = vld [vmem:[%s208 + $0x10] sm:$0xff]
      %v220 = vld [vmem:[%s208 + $0x18] sm:$0xff]
      %v221 = vld [vmem:[%s208 + $0x20] sm:$0xff]
      %v222 = vld [vmem:[%s208 + $0x28] sm:$0xff]
      %v223 = vld [vmem:[%s208 + $0x30] sm:$0xff]
      %v224 = vld [vmem:[%s208 + $0x38] sm:$0xff]
      %v225 = vld [vmem:[%s208 + $0x40] sm:$0xff]
      %v226 = vld [vmem:[%s208 + $0x48] sm:$0xff]
      %v227 = vld [vmem:[%s208 + $0x50] sm:$0xff]
      %v228 = vld [vmem:[%s208 + $0x58] sm:$0xff]
      %v229 = vld [vmem:[%s208 + $0x60] sm:$0xff]
      %v230 = vld [vmem:[%s208 + $0x68] sm:$0xff]
      %v231 = vld [vmem:[%s208 + $0x70] sm:$0xff]
      %v232 = vld [vmem:[%s208 + $0x78] sm:$0xff]
      %v233 = vld [vmem:[%s1] sm:$0xf]
      %v234 = vld [vmem:[%s1 + $0x4] sm:$0xf]
      %v235 = vld [vmem:[%s1 + $0x8] sm:$0xf]
      %v236 = vld [vmem:[%s1 + $0xc] sm:$0xf]
      %v237 = vld [vmem:[%s1 + $0x10] sm:$0xf]
      %v238 = vld [vmem:[%s1 + $0x14] sm:$0xf]
      %v239 = vld [vmem:[%s1 + $0x18] sm:$0xf]
      %v240 = vld [vmem:[%s1 + $0x1c] sm:$0xf]
      %v241 = vld [vmem:[%s1 + $0x20] sm:$0xf]
      %v242 = vld [vmem:[%s1 + $0x24] sm:$0xf]
      %v243 = vld [vmem:[%s1 + $0x28] sm:$0xf]
      %v244 = vld [vmem:[%s1 + $0x2c] sm:$0xf]
      %v245 = vld [vmem:[%s1 + $0x30] sm:$0xf]
      %v246 = vld [vmem:[%s1 + $0x34] sm:$0xf]
      %v247 = vld [vmem:[%s1 + $0x38] sm:$0xf]
      %v248 = vld [vmem:[%s1 + $0x3c] sm:$0xf]
      %v249 = vld [vmem:[%s1 + $0x40] sm:$0xf]
      %v250 = vld [vmem:[%s1 + $0x44] sm:$0xf]
      %v251 = vld [vmem:[%s1 + $0x48] sm:$0xf]
      %v252 = vld [vmem:[%s1 + $0x4c] sm:$0xf]
      %v253 = vld [vmem:[%s1 + $0x50] sm:$0xf]
      %v254 = vld [vmem:[%s1 + $0x54] sm:$0xf]
      %v255 = vld [vmem:[%s1 + $0x58] sm:$0xf]
      %v256 = vld [vmem:[%s1 + $0x5c] sm:$0xf]
      %v257 = vld [vmem:[%s1 + $0x60] sm:$0xf]
      %v258 = vld [vmem:[%s1 + $0x64] sm:$0xf]
      %v259 = vld [vmem:[%s1 + $0x68] sm:$0xf]
      %v260 = vld [vmem:[%s1 + $0x6c] sm:$0xf]
      %v261 = vld [vmem:[%s1 + $0x70] sm:$0xf]
      %v262 = vld [vmem:[%s1 + $0x74] sm:$0xf]
      %v263 = vld [vmem:[%s1 + $0x78] sm:$0xf]
      %v264 = vld [vmem:[%s1 + $0x7c] sm:$0xf]
      %v281 = vunpack.c.l.b16 %v217
      %v282 = vunpack.c.h.b16 %v217
      %v283 = vunpack.c.l.b16 %v218
      %v284 = vunpack.c.h.b16 %v218
      %v285 = vunpack.c.l.b16 %v219
      %v286 = vunpack.c.h.b16 %v219
      %v287 = vunpack.c.l.b16 %v220
      %v288 = vunpack.c.h.b16 %v220
      %v289 = vunpack.c.l.b16 %v221
      %v290 = vunpack.c.h.b16 %v221
      %v291 = vunpack.c.l.b16 %v222
      %v292 = vunpack.c.h.b16 %v222
      %v293 = vunpack.c.l.b16 %v223
      %v294 = vunpack.c.h.b16 %v223
      %v295 = vunpack.c.l.b16 %v224
      %v296 = vunpack.c.h.b16 %v224
      %v297 = vunpack.c.l.b16 %v225
      %v298 = vunpack.c.h.b16 %v225
      %v299 = vunpack.c.l.b16 %v226
      %v300 = vunpack.c.h.b16 %v226
      %v301 = vunpack.c.l.b16 %v227
      %v302 = vunpack.c.h.b16 %v227
      %v303 = vunpack.c.l.b16 %v228
      %v304 = vunpack.c.h.b16 %v228
      %v305 = vunpack.c.l.b16 %v229
      %v306 = vunpack.c.h.b16 %v229
      %v307 = vunpack.c.l.b16 %v230
      %v308 = vunpack.c.h.b16 %v230
      %v309 = vunpack.c.l.b16 %v231
      %v310 = vunpack.c.h.b16 %v231
      %v311 = vunpack.c.l.b16 %v232
      %v312 = vunpack.c.h.b16 %v232
      %v313 = vpack.c.b16 %v283, %v281
      %v314 = vpack.c.b16 %v284, %v282
      %v315 = vpack.c.b16 %v287, %v285
      %v316 = vpack.c.b16 %v288, %v286
      %v317 = vpack.c.b16 %v291, %v289
      %v318 = vpack.c.b16 %v292, %v290
      %v319 = vpack.c.b16 %v295, %v293
      %v320 = vpack.c.b16 %v296, %v294
      %v321 = vpack.c.b16 %v299, %v297
      %v322 = vpack.c.b16 %v300, %v298
      %v323 = vpack.c.b16 %v303, %v301
      %v324 = vpack.c.b16 %v304, %v302
      %v325 = vpack.c.b16 %v307, %v305
      %v326 = vpack.c.b16 %v308, %v306
      %v327 = vpack.c.b16 %v311, %v309
      %v328 = vpack.c.b16 %v312, %v310
      %v377 = vunpack.c.l.b16 %v233
      %v378 = vunpack.c.l.b16 %v234
      %v379 = vunpack.c.l.b16 %v235
      %v380 = vunpack.c.l.b16 %v236
      %v381 = vunpack.c.l.b16 %v237
      %v382 = vunpack.c.l.b16 %v238
      %v383 = vunpack.c.l.b16 %v239
      %v384 = vunpack.c.l.b16 %v240
      %v385 = vunpack.c.l.b16 %v241
      %v386 = vunpack.c.l.b16 %v242
      %v387 = vunpack.c.l.b16 %v243
      %v388 = vunpack.c.l.b16 %v244
      %v389 = vunpack.c.l.b16 %v245
      %v390 = vunpack.c.l.b16 %v246
      %v391 = vunpack.c.l.b16 %v247
      %v392 = vunpack.c.l.b16 %v248
      %v393 = vunpack.c.l.b16 %v249
      %v394 = vunpack.c.l.b16 %v250
      %v395 = vunpack.c.l.b16 %v251
      %v396 = vunpack.c.l.b16 %v252
      %v397 = vunpack.c.l.b16 %v253
      %v398 = vunpack.c.l.b16 %v254
      %v399 = vunpack.c.l.b16 %v255
      %v400 = vunpack.c.l.b16 %v256
      %v401 = vunpack.c.l.b16 %v257
      %v402 = vunpack.c.l.b16 %v258
      %v403 = vunpack.c.l.b16 %v259
      %v404 = vunpack.c.l.b16 %v260
      %v405 = vunpack.c.l.b16 %v261
      %v406 = vunpack.c.l.b16 %v262
      %v407 = vunpack.c.l.b16 %v263
      %v408 = vunpack.c.l.b16 %v264
      %v409 = vpack.c.b16 %v378, %v377
      %v410 = vpack.c.b16 %v380, %v379
      %v411 = vpack.c.b16 %v382, %v381
      %v412 = vpack.c.b16 %v384, %v383
      %v413 = vpack.c.b16 %v386, %v385
      %v414 = vpack.c.b16 %v388, %v387
      %v415 = vpack.c.b16 %v390, %v389
      %v416 = vpack.c.b16 %v392, %v391
      %v417 = vpack.c.b16 %v394, %v393
      %v418 = vpack.c.b16 %v396, %v395
      %v419 = vpack.c.b16 %v398, %v397
      %v420 = vpack.c.b16 %v400, %v399
      %v421 = vpack.c.b16 %v402, %v401
      %v422 = vpack.c.b16 %v404, %v403
      %v423 = vpack.c.b16 %v406, %v405
      %v424 = vpack.c.b16 %v408, %v407
      %441 = vmatpush.bf16.msra.mxu0 %v416
      %442 = vmatpush.bf16.msra.mxu0 %v415
      %443 = vmatpush.bf16.msra.mxu0 %v414
      %444 = vmatpush.bf16.msra.mxu0 %v413
      %445 = vmatpush.bf16.msra.mxu0 %v412
      %446 = vmatpush.bf16.msra.mxu0 %v411
      %447 = vmatpush.bf16.msra.mxu0 %v410
      %448 = vmatpush.bf16.msra.mxu0 %v409
      %449 = vmatmul.bf16.gmra.mxu0 %v313
      %v450 = vpop.f32.mrf.mxu0
      %v451 = vadd.f32 0.0, %v450
      %v452 = vpop.f32.mrf.mxu0
      %v453 = vadd.f32 0.0, %v452
      %454 = vmatmul.bf16.gmra.mxu0 %v315
      %v455 = vpop.f32.mrf.mxu0
      %v456 = vadd.f32 0.0, %v455
      %v457 = vpop.f32.mrf.mxu0
      %v458 = vadd.f32 0.0, %v457
      %459 = vmatmul.bf16.gmra.mxu0 %v317
      %v460 = vpop.f32.mrf.mxu0
      %v461 = vadd.f32 0.0, %v460
      %v462 = vpop.f32.mrf.mxu0
      %v463 = vadd.f32 0.0, %v462
      %464 = vmatmul.bf16.gmra.mxu0 %v319
      %v465 = vpop.f32.mrf.mxu0
      %v466 = vadd.f32 0.0, %v465
      %v467 = vpop.f32.mrf.mxu0
      %v468 = vadd.f32 0.0, %v467
      %469 = vmatmul.bf16.gmra.mxu0 %v321
      %v470 = vpop.f32.mrf.mxu0
      %v471 = vadd.f32 0.0, %v470
      %v472 = vpop.f32.mrf.mxu0
      %v473 = vadd.f32 0.0, %v472
      %474 = vmatmul.bf16.gmra.mxu0 %v323
      %v475 = vpop.f32.mrf.mxu0
      %v476 = vadd.f32 0.0, %v475
      %v477 = vpop.f32.mrf.mxu0
      %v478 = vadd.f32 0.0, %v477
      %479 = vmatmul.bf16.gmra.mxu0 %v325
      %v480 = vpop.f32.mrf.mxu0
      %v481 = vadd.f32 0.0, %v480
      %v482 = vpop.f32.mrf.mxu0
      %v483 = vadd.f32 0.0, %v482
      %484 = vmatmul.bf16.gmra.mxu0 %v327
      %v485 = vpop.f32.mrf.mxu0
      %v486 = vadd.f32 0.0, %v485
      %v487 = vpop.f32.mrf.mxu0
      %v488 = vadd.f32 0.0, %v487
      %489 = vdwg.mxu0
      %490 = vmatpush.bf16.msra.mxu0 %v424
      %491 = vmatpush.bf16.msra.mxu0 %v423
      %492 = vmatpush.bf16.msra.mxu0 %v422
      %493 = vmatpush.bf16.msra.mxu0 %v421
      %494 = vmatpush.bf16.msra.mxu0 %v420
      %495 = vmatpush.bf16.msra.mxu0 %v419
      %496 = vmatpush.bf16.msra.mxu0 %v418
      %497 = vmatpush.bf16.msra.mxu0 %v417
      %498 = vmatmul.bf16.gmra.mxu0 %v314
      %v499 = vpop.f32.mrf.mxu0
      %v500 = vadd.f32 %v451, %v499
      %v501 = vpop.f32.mrf.mxu0
      %v502 = vadd.f32 %v453, %v501
      %503 = vmatmul.bf16.gmra.mxu0 %v316
      %v504 = vpop.f32.mrf.mxu0
      %v505 = vadd.f32 %v456, %v504
      %v506 = vpop.f32.mrf.mxu0
      %v507 = vadd.f32 %v458, %v506
      %508 = vmatmul.bf16.gmra.mxu0 %v318
      %v509 = vpop.f32.mrf.mxu0
      %v510 = vadd.f32 %v461, %v509
      %v511 = vpop.f32.mrf.mxu0
      %v512 = vadd.f32 %v463, %v511
      %513 = vmatmul.bf16.gmra.mxu0 %v320
      %v514 = vpop.f32.mrf.mxu0
      %v515 = vadd.f32 %v466, %v514
      %v516 = vpop.f32.mrf.mxu0
      %v517 = vadd.f32 %v468, %v516
      %518 = vmatmul.bf16.gmra.mxu0 %v322
      %v519 = vpop.f32.mrf.mxu0
      %v520 = vadd.f32 %v471, %v519
      %v521 = vpop.f32.mrf.mxu0
      %v522 = vadd.f32 %v473, %v521
      %523 = vmatmul.bf16.gmra.mxu0 %v324
      %v524 = vpop.f32.mrf.mxu0
      %v525 = vadd.f32 %v476, %v524
      %v526 = vpop.f32.mrf.mxu0
      %v527 = vadd.f32 %v478, %v526
      %528 = vmatmul.bf16.gmra.mxu0 %v326
      %v529 = vpop.f32.mrf.mxu0
      %v530 = vadd.f32 %v481, %v529
      %v531 = vpop.f32.mrf.mxu0
      %v532 = vadd.f32 %v483, %v531
      %533 = vmatmul.bf16.gmra.mxu0 %v328
      %v534 = vpop.f32.mrf.mxu0
      %v535 = vadd.f32 %v486, %v534
      %v536 = vpop.f32.mrf.mxu0
      %v537 = vadd.f32 %v488, %v536
      %538 = vdwg.mxu0
      %p539 = scmp.eq.s32.totalorder %s19, 0
      %p540 = scmp.eq.s32.totalorder %s20, 0
      %p541 = pnand %p539, %p540
      %p542 = pneg %p541
      // Predicated region
      $region37: #{_lambda_.7} parent=35 // pred_check
        _
      $region38: #{_lambda_.7} parent=35 // pred_check_branch
        %544 = sbr.rel (%p541) target = $region40
      $region39: #{_lambda_.7} parent=35 // pred_region
        %545 = vst [vmem:[#allocation2] sm:$0x1] 0.0
        %546 = vst [vmem:[#allocation3] sm:$0x1] 0.0
      $region40: #{_lambda_.7} parent=35 // pred_fallthru
        _
      // Predicated region
      $region41: #{_lambda_.7} parent=35 // pred_check
        %p547 = pneg %p539
      $region42: #{_lambda_.7} parent=35 // pred_check_branch
        %549 = sbr.rel (%p547) target = $region44
      $region43: #{_lambda_.7} parent=35 // pred_region
        %v550 = vld [vmem:[#allocation2] sm:$0x1]
        %v551 = vadd.f32 %v500, %v502
        %v552 = vadd.f32 %v551, %v505
        %v553 = vadd.f32 %v552, %v507
        %v554 = vadd.f32 %v553, %v510
        %v555 = vadd.f32 %v554, %v512
        %v556 = vadd.f32 %v555, %v515
        %v557 = vadd.f32 %v556, %v517
        %v558 = vadd.f32 %v557, %v520
        %v559 = vadd.f32 %v558, %v522
        %v560 = vadd.f32 %v559, %v525
        %v561 = vadd.f32 %v560, %v527
        %v562 = vadd.f32 %v561, %v530
        %v563 = vadd.f32 %v562, %v532
        %v564 = vadd.f32 %v563, %v535
        %v565 = vadd.f32 %v564, %v537
        %v566 = vrot.slane %v565, 4
        %v567 = vadd.f32 %v565, %v566
        %v568 = vrot.slane %v567, 2
        %v569 = vadd.f32 %v567, %v568
        %v570 = vrot.slane %v569, 1
        %v571 = vadd.f32 %v569, %v570
        %v572 = vadd.f32 %v550, %v571
        %573 = vst [vmem:[#allocation2] sm:$0x1] %v572
        %v574 = vld [vmem:[#allocation3] sm:$0x1]
        %v575 = vmul.f32 %v500, %v500
        %v576 = vmul.f32 %v502, %v502
        %v577 = vmul.f32 %v505, %v505
        %v578 = vmul.f32 %v507, %v507
        %v579 = vmul.f32 %v510, %v510
        %v580 = vmul.f32 %v512, %v512
        %v581 = vmul.f32 %v515, %v515
        %v582 = vmul.f32 %v517, %v517
        %v583 = vmul.f32 %v520, %v520
        %v584 = vmul.f32 %v522, %v522
        %v585 = vmul.f32 %v525, %v525
        %v586 = vmul.f32 %v527, %v527
        %v587 = vmul.f32 %v530, %v530
        %v588 = vmul.f32 %v532, %v532
        %v589 = vmul.f32 %v535, %v535
        %v590 = vmul.f32 %v537, %v537
        %v591 = vadd.f32 %v575, %v576
        %v592 = vadd.f32 %v591, %v577
        %v593 = vadd.f32 %v592, %v578
        %v594 = vadd.f32 %v593, %v579
        %v595 = vadd.f32 %v594, %v580
        %v596 = vadd.f32 %v595, %v581
        %v597 = vadd.f32 %v596, %v582
        %v598 = vadd.f32 %v597, %v583
        %v599 = vadd.f32 %v598, %v584
        %v600 = vadd.f32 %v599, %v585
        %v601 = vadd.f32 %v600, %v586
        %v602 = vadd.f32 %v601, %v587
        %v603 = vadd.f32 %v602, %v588
        %v604 = vadd.f32 %v603, %v589
        %v605 = vadd.f32 %v604, %v590
        %v606 = vrot.slane %v605, 4
        %v607 = vadd.f32 %v605, %v606
        %v608 = vrot.slane %v607, 2
        %v609 = vadd.f32 %v607, %v608
        %v610 = vrot.slane %v609, 1
        %v611 = vadd.f32 %v609, %v610
        %v612 = vadd.f32 %v574, %v611
        %613 = vst [vmem:[#allocation3] sm:$0x1] %v612
        %614 = vst [vmem:[%s214] sm:$0xf] 0
        %615 = vst [vmem:[%s214 + $0x4] sm:$0xf] 0
        %616 = vst [vmem:[%s214 + $0x8] sm:$0xf] 0
        %617 = vst [vmem:[%s214 + $0xc] sm:$0xf] 0
        %618 = vst [vmem:[%s214 + $0x10] sm:$0xf] 0
        %619 = vst [vmem:[%s214 + $0x14] sm:$0xf] 0
        %620 = vst [vmem:[%s214 + $0x18] sm:$0xf] 0
        %621 = vst [vmem:[%s214 + $0x1c] sm:$0xf] 0
        %622 = vst [vmem:[%s214 + $0x20] sm:$0xf] 0
        %623 = vst [vmem:[%s214 + $0x24] sm:$0xf] 0
        %624 = vst [vmem:[%s214 + $0x28] sm:$0xf] 0
        %625 = vst [vmem:[%s214 + $0x2c] sm:$0xf] 0
        %626 = vst [vmem:[%s214 + $0x30] sm:$0xf] 0
        %627 = vst [vmem:[%s214 + $0x34] sm:$0xf] 0
        %628 = vst [vmem:[%s214 + $0x38] sm:$0xf] 0
        %629 = vst [vmem:[%s214 + $0x3c] sm:$0xf] 0
      $region44: #{_lambda_.7} parent=35 // pred_fallthru
        _
      %p630 = scmp.eq.s32.totalorder %s19, 1
      // Predicated region
      $region45: #{_lambda_.7} parent=35 // pred_check
        %p631 = pneg %p630
      $region46: #{_lambda_.7} parent=35 // pred_check_branch
        %633 = sbr.rel (%p631) target = $region48
      $region47: #{_lambda_.7} parent=35 // pred_region
        %v634 = vld [vmem:[#allocation2] sm:$0x1]
        %v635 = vmul.f32 %v634, 0.0078125
        %v636 = vld [vmem:[#allocation3] sm:$0x1]
        %v637 = vmul.f32 %v636, 0.0078125
        %v638 = vmul.f32 %v635, %v635
        %v639 = vsub.f32 %v637, %v638
        %v640 = vadd.f32 %v639, 1e-05
        %v641 = vrsqrt.pop %v640
        %v642 = vmul.f32 %v641, %v640
        %v643 = vmul.f32 %v642, %v641
        %v644 = vmul.f32 0.5, %v643
        %v645 = vsub.f32 1.5, %v644
        %v646 = vmul.f32 %v641, %v645
        %vm647 = vweird.f32 %v640
        %vm648 = vweird.f32 %v641
        %vm649 = vmor %vm647, %vm648
        %v650 = vsel %vm649, %v641, %v646
        %v651 = vld [vmem:[%s2] sm:$0x1]
        %v652 = vmul.f32 %v651, %v650
        %v653 = vld [vmem:[%s3] sm:$0x1]
        %v654 = vmul.f32 %v635, %v652
        %v655 = vsub.f32 %v653, %v654
        %v657 = vperm.slane %v652, 0
        %v659 = vmul.f32 %v500, %v657
        %v660 = vmul.f32 %v502, %v657
        %v661 = vmul.f32 %v505, %v657
        %v662 = vmul.f32 %v507, %v657
        %v663 = vmul.f32 %v510, %v657
        %v664 = vmul.f32 %v512, %v657
        %v665 = vmul.f32 %v515, %v657
        %v666 = vmul.f32 %v517, %v657
        %v667 = vmul.f32 %v520, %v657
        %v668 = vmul.f32 %v522, %v657
        %v669 = vmul.f32 %v525, %v657
        %v670 = vmul.f32 %v527, %v657
        %v671 = vmul.f32 %v530, %v657
        %v672 = vmul.f32 %v532, %v657
        %v673 = vmul.f32 %v535, %v657
        %v674 = vmul.f32 %v537, %v657
        %v676 = vperm.slane %v655, 0
        %v678 = vadd.f32 %v659, %v676
        %v679 = vadd.f32 %v660, %v676
        %v680 = vadd.f32 %v661, %v676
        %v681 = vadd.f32 %v662, %v676
        %v682 = vadd.f32 %v663, %v676
        %v683 = vadd.f32 %v664, %v676
        %v684 = vadd.f32 %v665, %v676
        %v685 = vadd.f32 %v666, %v676
        %v686 = vadd.f32 %v667, %v676
        %v687 = vadd.f32 %v668, %v676
        %v688 = vadd.f32 %v669, %v676
        %v689 = vadd.f32 %v670, %v676
        %v690 = vadd.f32 %v671, %v676
        %v691 = vadd.f32 %v672, %v676
        %v692 = vadd.f32 %v673, %v676
        %v693 = vadd.f32 %v674, %v676
        %v694 = vmul.f32 %v678, 0.2
        %v695 = vmul.f32 %v679, 0.2
        %v696 = vmul.f32 %v680, 0.2
        %v697 = vmul.f32 %v681, 0.2
        %v698 = vmul.f32 %v682, 0.2
        %v699 = vmul.f32 %v683, 0.2
        %v700 = vmul.f32 %v684, 0.2
        %v701 = vmul.f32 %v685, 0.2
        %v702 = vmul.f32 %v686, 0.2
        %v703 = vmul.f32 %v687, 0.2
        %v704 = vmul.f32 %v688, 0.2
        %v705 = vmul.f32 %v689, 0.2
        %v706 = vmul.f32 %v690, 0.2
        %v707 = vmul.f32 %v691, 0.2
        %v708 = vmul.f32 %v692, 0.2
        %v709 = vmul.f32 %v693, 0.2
        %v710 = vmax.f32 %v678, %v694
        %v711 = vmax.f32 %v679, %v695
        %v712 = vmax.f32 %v680, %v696
        %v713 = vmax.f32 %v681, %v697
        %v714 = vmax.f32 %v682, %v698
        %v715 = vmax.f32 %v683, %v699
        %v716 = vmax.f32 %v684, %v700
        %v717 = vmax.f32 %v685, %v701
        %v718 = vmax.f32 %v686, %v702
        %v719 = vmax.f32 %v687, %v703
        %v720 = vmax.f32 %v688, %v704
        %v721 = vmax.f32 %v689, %v705
        %v722 = vmax.f32 %v690, %v706
        %v723 = vmax.f32 %v691, %v707
        %v724 = vmax.f32 %v692, %v708
        %v725 = vmax.f32 %v693, %v709
        %v726 = vpack.c.bf16 %v710, %v710
        %v727 = vpack.c.bf16 %v711, %v711
        %v728 = vpack.c.bf16 %v712, %v712
        %v729 = vpack.c.bf16 %v713, %v713
        %v730 = vpack.c.bf16 %v714, %v714
        %v731 = vpack.c.bf16 %v715, %v715
        %v732 = vpack.c.bf16 %v716, %v716
        %v733 = vpack.c.bf16 %v717, %v717
        %v734 = vpack.c.bf16 %v718, %v718
        %v735 = vpack.c.bf16 %v719, %v719
        %v736 = vpack.c.bf16 %v720, %v720
        %v737 = vpack.c.bf16 %v721, %v721
        %v738 = vpack.c.bf16 %v722, %v722
        %v739 = vpack.c.bf16 %v723, %v723
        %v740 = vpack.c.bf16 %v724, %v724
        %v741 = vpack.c.bf16 %v725, %v725
        %742 = vst [vmem:[%s214] sm:$0xf] %v726
        %743 = vst [vmem:[%s214 + $0x4] sm:$0xf] %v727
        %744 = vst [vmem:[%s214 + $0x8] sm:$0xf] %v728
        %745 = vst [vmem:[%s214 + $0xc] sm:$0xf] %v729
        %746 = vst [vmem:[%s214 + $0x10] sm:$0xf] %v730
        %747 = vst [vmem:[%s214 + $0x14] sm:$0xf] %v731
        %748 = vst [vmem:[%s214 + $0x18] sm:$0xf] %v732
        %749 = vst [vmem:[%s214 + $0x1c] sm:$0xf] %v733
        %750 = vst [vmem:[%s214 + $0x20] sm:$0xf] %v734
        %751 = vst [vmem:[%s214 + $0x24] sm:$0xf] %v735
        %752 = vst [vmem:[%s214 + $0x28] sm:$0xf] %v736
        %753 = vst [vmem:[%s214 + $0x2c] sm:$0xf] %v737
        %754 = vst [vmem:[%s214 + $0x30] sm:$0xf] %v738
        %755 = vst [vmem:[%s214 + $0x34] sm:$0xf] %v739
        %756 = vst [vmem:[%s214 + $0x38] sm:$0xf] %v740
        %757 = vst [vmem:[%s214 + $0x3c] sm:$0xf] %v741
      $region48: #{_lambda_.7} parent=35 // pred_fallthru
        _
      %s758 = smul.u32 16, %s20
      %p759 = scmp.lt.s32.totalorder %s758, 15
      %s760 = scalar_select %p759, %s758, 15
      %s761 = smul.addr %s760, 4
      %s762 = scalar_lea.vmem %s4, %s761
      // Predicated region
      $region49: #{_lambda_.7} parent=35 // pred_check
        %p763 = pneg %p134
      $region50: #{_lambda_.7} parent=35 // pred_check_branch
        %765 = sbr.rel (%p763) target = $region52
      $region51: #{_lambda_.7} parent=35 // pred_region
        %s766 = smul.u32 16, %s20
      $region52: #{_lambda_.7} parent=35 // pred_fallthru
        _
      // Predicated region
      $region53: #{_lambda_.7} parent=35 // pred_check
        %p767 = pneg %p134
      $region54: #{_lambda_.7} parent=35 // pred_check_branch
        %769 = sbr.rel (%p767) target = $region56
      $region55: #{_lambda_.7} parent=35 // pred_region
        %s770 = smul.u32 16, %s20
        %p771 = scmp.lt.s32.totalorder %s770, 15
        %s772 = scalar_select %p771, %s770, 15
        %s773 = smul.addr %s772, 4
        %s774 = scalar_lea.vmem %s4, %s773
      $region56: #{_lambda_.7} parent=35 // pred_fallthru
        _
    $region36: #{_lambda_.7} parent=5 // pred_fallthru
      _
    %p775 = scmp.le.s32.totalorder 2, %s10
    // Predicated region
    $region57: #{_lambda_.7} parent=5 // pred_check
      %p776 = pneg %p775
    $region58: #{_lambda_.7} parent=5 // pred_check_branch
      %778 = sbr.rel (%p776) target = $region60
    $region59: #{_lambda_.7} parent=5 // pred_region
      %s779 = ssub.s32 %s10, 2
    $region60: #{_lambda_.7} parent=5 // pred_fallthru
      _
  $region6: #{_lambda_.7} parent=0 // loop_footer
    %s14 = sadd.s32 1, %s10
  $region7: #{_lambda_.7} parent=0 // loop_footer_branch
    %9 = sbr.rel target = $region3
  $region8: #{_lambda_.7} parent=0 // loop_exit
    _

// kernel: _lambda_.8
$region0: #{_lambda_.8}
  #allocation0 [shape = 'u32[]', space=smem, size = 0x4, offset = 0x4, fixed_abs, tag = 'smem constant byte address 0x4 - core index']
  #allocation1 [shape = 'u32[72,128]{1,0:T(1,128)}', space=vmem, size = 0x9000, scoped, tag = 'internal scratch']
  #allocation2 [shape = 'f32[1,128]{1,0:T(1,128)}', space=vmem, size = 0x200, scoped, tag = 'scratch operand']
  #allocation3 [shape = 'f32[1,128]{1,0:T(1,128)}', space=vmem, size = 0x200, scoped, tag = 'scratch operand']
  %s0 = inlined_call_operand.vmem [shape: bf16[32,512], index: 0, kind: input, shape index: {}]
  %s1 = inlined_call_operand.vmem [shape: bf16[512,128], index: 1, kind: input, shape index: {}]
  %s2 = inlined_call_operand.vmem [shape: f32[1,128], index: 2, kind: input, shape index: {}]
  %s3 = inlined_call_operand.vmem [shape: f32[1,128], index: 3, kind: input, shape index: {}]
  %s4 = inlined_call_operand.vmem [shape: bf16[32,128], index: 4, kind: output, shape index: {}]
  %s5 = sld [smem:[#allocation0]]
  $region61: #{_lambda_.8} parent=0
    _
  %s7 = ssub.s32 1, %s5
  %s8 = scalar_select 0, %s7, %s5
  loop: start=0, step=1, limit=4
  $region2: #{_lambda_.8} parent=0 // loop_pre_header
    _
  $region3: #{_lambda_.8} parent=0 // loop_header
    %s10 = sphi 0, %s14
    %p11 = scmp.ge.s32.totalorder %s10, 4
    %s17 = sphi 0, %s29
    %s18 = sphi 0, %s25
    %s19 = sphi 0, %s17
    %s20 = sphi 0, %s18
    %s21 = sphi 0, %s19
    %s22 = sphi 0, %s20
    %s32 = sphi 0, %s34
    %s35 = sphi 0, %s32
    %s36 = sphi 0, %s35
    %s52 = sphi 0, %s36
    %s56 = sphi 0, %s56
    %s58 = sphi 0, %s56
    %s59 = sphi 0, %s58
    %s73 = sphi 0, %s59
    %s77 = sphi 0, %s77
    %s79 = sphi 0, %s77
    %s80 = sphi 0, %s79
    %s94 = sphi 0, %s80
    %s98 = sphi 0, %s98
    %s100 = sphi 0, %s98
    %s101 = sphi 0, %s100
    %s115 = sphi 0, %s101
    %s121 = sphi 0, %s123
    %s124 = sphi 0, %s121
    %s125 = sphi 0, %s124
    %s141 = sphi 0, %s125
  $region4: #{_lambda_.8} parent=0 // loop_header_branch
    %13 = sbr.rel (%p11) target = $region8
  $region5: #{_lambda_.8} parent=0 // loop_body
    %s15 = ssub.s32 %s10, 1
    %s16 = ssub.s32 %s10, 2
    %s23 = sadd.s32 1, %s18
    %p24 = scmp.ge.s32.totalorder %s23, 1
    %s25 = scalar_select %p24, 0, %s23
    %s26 = sadd.s32 1, %s17
    %s27 = scalar_select %p24, %s26, %s17
    %p28 = scmp.ge.s32.totalorder %s27, 2
    %s29 = scalar_select %p28, 0, %s27
    %s30 = ssub.s32 %s18, %s25
    %p31 = scmp.eq.s32.totalorder %s30, 0
    %s33 = sadd.s32 %s32, 1
    %s34 = scalar_select %p31, %s32, %s33
    %p37 = pneg %p31
    %p38 = scmp.eq.s32.totalorder %s10, 1
    %p39 = por %p37, %p38
    %p40 = scmp.ne.s32.totalorder %s32, %s35
    %p41 = scmp.eq.s32.totalorder %s10, 0
    %p42 = por %p40, %p41
    %p43 = scmp.ne.s32.totalorder %s32, %s35
    %p44 = scmp.eq.s32.totalorder %s15, 1
    %p45 = por %p43, %p44
    %p46 = scmp.ne.s32.totalorder %s35, %s36
    %p47 = scmp.eq.s32.totalorder %s15, 0
    %p48 = por %p46, %p47
    %p49 = scmp.ne.s32.totalorder %s35, %s36
    %p50 = scmp.eq.s32.totalorder %s16, 1
    %p51 = por %p49, %p50
    %p53 = scmp.ne.s32.totalorder %s36, %s52
    %p54 = scmp.eq.s32.totalorder %s16, 0
    %p55 = por %p53, %p54
    %s57 = sadd.s32 %s56, 1
    %p60 = scmp.eq.s32.totalorder %s10, 1
    %p61 = scmp.ne.s32.totalorder %s56, %s58
    %p62 = scmp.eq.s32.totalorder %s10, 0
    %p63 = por %p61, %p62
    %p64 = scmp.ne.s32.totalorder %s56, %s58
    %p65 = scmp.eq.s32.totalorder %s15, 1
    %p66 = por %p64, %p65
    %p67 = scmp.ne.s32.totalorder %s58, %s59
    %p68 = scmp.eq.s32.totalorder %s15, 0
    %p69 = por %p67, %p68
    %p70 = scmp.ne.s32.totalorder %s58, %s59
    %p71 = scmp.eq.s32.totalorder %s16, 1
    %p72 = por %p70, %p71
    %p74 = scmp.ne.s32.totalorder %s59, %s73
    %p75 = scmp.eq.s32.totalorder %s16, 0
    %p76 = por %p74, %p75
    %s78 = sadd.s32 %s77, 1
    %p81 = scmp.eq.s32.totalorder %s10, 1
    %p82 = scmp.ne.s32.totalorder %s77, %s79
    %p83 = scmp.eq.s32.totalorder %s10, 0
    %p84 = por %p82, %p83
    %p85 = scmp.ne.s32.totalorder %s77, %s79
    %p86 = scmp.eq.s32.totalorder %s15, 1
    %p87 = por %p85, %p86
    %p88 = scmp.ne.s32.totalorder %s79, %s80
    %p89 = scmp.eq.s32.totalorder %s15, 0
    %p90 = por %p88, %p89
    %p91 = scmp.ne.s32.totalorder %s79, %s80
    %p92 = scmp.eq.s32.totalorder %s16, 1
    %p93 = por %p91, %p92
    %p95 = scmp.ne.s32.totalorder %s80, %s94
    %p96 = scmp.eq.s32.totalorder %s16, 0
    %p97 = por %p95, %p96
    %s99 = sadd.s32 %s98, 1
    %p102 = scmp.eq.s32.totalorder %s10, 1
    %p103 = scmp.ne.s32.totalorder %s98, %s100
    %p104 = scmp.eq.s32.totalorder %s10, 0
    %p105 = por %p103, %p104
    %p106 = scmp.ne.s32.totalorder %s98, %s100
    %p107 = scmp.eq.s32.totalorder %s15, 1
    %p108 = por %p106, %p107
    %p109 = scmp.ne.s32.totalorder %s100, %s101
    %p110 = scmp.eq.s32.totalorder %s15, 0
    %p111 = por %p109, %p110
    %p112 = scmp.ne.s32.totalorder %s100, %s101
    %p113 = scmp.eq.s32.totalorder %s16, 1
    %p114 = por %p112, %p113
    %p116 = scmp.ne.s32.totalorder %s101, %s115
    %p117 = scmp.eq.s32.totalorder %s16, 0
    %p118 = por %p116, %p117
    %s119 = ssub.s32 %s18, %s25
    %p120 = scmp.eq.s32.totalorder %s119, 0
    %s122 = sadd.s32 %s121, 1
    %s123 = scalar_select %p120, %s121, %s122
    %p126 = pneg %p120
    %p127 = scmp.eq.s32.totalorder %s10, 1
    %p128 = por %p126, %p127
    %p129 = scmp.ne.s32.totalorder %s121, %s124
    %p130 = scmp.eq.s32.totalorder %s10, 0
    %p131 = por %p129, %p130
    %p132 = scmp.ne.s32.totalorder %s121, %s124
    %p133 = scmp.eq.s32.totalorder %s15, 1
    %p134 = por %p132, %p133
    %p135 = scmp.ne.s32.totalorder %s124, %s125
    %p136 = scmp.eq.s32.totalorder %s15, 0
    %p137 = por %p135, %p136
    %p138 = scmp.ne.s32.totalorder %s124, %s125
    %p139 = scmp.eq.s32.totalorder %s16, 1
    %p140 = por %p138, %p139
    %p142 = scmp.ne.s32.totalorder %s125, %s141
    %p143 = scmp.eq.s32.totalorder %s16, 0
    %p144 = por %p142, %p143
    %p145 = scmp.le.s32.totalorder 1, %s10
    %p146 = scmp.lt.s32.totalorder %s10, 3
    %p147 = pnand %p145, %p146
    %p148 = pneg %p147
    // Predicated region
    $region9: #{_lambda_.8} parent=5 // pred_check
      _
    $region10: #{_lambda_.8} parent=5 // pred_check_branch
      %150 = sbr.rel (%p147) target = $region12
    $region11: #{_lambda_.8} parent=5 // pred_region
      %s151 = ssub.s32 %s10, 1
      // Predicated region
      $region13: #{_lambda_.8} parent=11 // pred_check
        %p152 = pneg %p48
      $region14: #{_lambda_.8} parent=11 // pred_check_branch
        %154 = sbr.rel (%p152) target = $region16
      $region15: #{_lambda_.8} parent=11 // pred_region
        %s155 = smul.u32 4, %s20
        %p156 = scmp.lt.s32.totalorder %s155, 3
        %s157 = scalar_select %p156, %s155, 3
        %s158 = smul.addr %s157, 4
        %s159 = smul.addr %s158, 4
        %s160 = scalar_lea.vmem %s0, %s159
        %s161 = smul.u32 4, %s20
      $region16: #{_lambda_.8} parent=11 // pred_fallthru
        _
      // Predicated region
      $region17: #{_lambda_.8} parent=11 // pred_check
        %p162 = pneg %p69
      $region18: #{_lambda_.8} parent=11 // pred_check_branch
        %164 = sbr.rel (%p162) target = $region20
      $region19: #{_lambda_.8} parent=11 // pred_region
        _
      $region20: #{_lambda_.8} parent=11 // pred_fallthru
        _
      // Predicated region
      $region21: #{_lambda_.8} parent=11 // pred_check
        %p165 = pneg %p90
      $region22: #{_lambda_.8} parent=11 // pred_check_branch
        %167 = sbr.rel (%p165) target = $region24
      $region23: #{_lambda_.8} parent=11 // pred_region
        _
      $region24: #{_lambda_.8} parent=11 // pred_fallthru
        _
      // Predicated region
      $region25: #{_lambda_.8} parent=11 // pred_check
        %p168 = pneg %p111
      $region26: #{_lambda_.8} parent=11 // pred_check_branch
        %170 = sbr.rel (%p168) target = $region28
      $region27: #{_lambda_.8} parent=11 // pred_region
        _
      $region28: #{_lambda_.8} parent=11 // pred_fallthru
        _
    $region12: #{_lambda_.8} parent=5 // pred_fallthru
      _
    %p171 = scmp.lt.s32.totalorder %s10, 2
    // Predicated region
    $region29: #{_lambda_.8} parent=5 // pred_check
      %p172 = pneg %p171
    $region30: #{_lambda_.8} parent=5 // pred_check_branch
      %174 = sbr.rel (%p172) target = $region32
    $region31: #{_lambda_.8} parent=5 // pred_region
      _
    $region32: #{_lambda_.8} parent=5 // pred_fallthru
      _
    %p175 = scmp.le.s32.totalorder 1, %s10
    %p176 = scmp.lt.s32.totalorder %s10, 3
    %p177 = pnand %p175, %p176
    %p178 = pneg %p177
    // Predicated region
    $region33: #{_lambda_.8} parent=5 // pred_check
      _
    $region34: #{_lambda_.8} parent=5 // pred_check_branch
      %180 = sbr.rel (%p177) target = $region36
    $region35: #{_lambda_.8} parent=5 // pred_region
      %s181 = ssub.s32 %s10, 1
      %s182 = smul.u32 4, %s20
      %p183 = scmp.lt.s32.totalorder %s182, 3
      %s184 = scalar_select %p183, %s182, 3
      %s185 = smul.addr %s184, 4
      %s186 = smul.addr %s185, 4
      %s187 = scalar_lea.vmem %s0, %s186
      %p188 = pneg %p48
      %p189 = pneg %p45
      %p190 = pneg %p69
      %p191 = pneg %p66
      %p192 = pneg %p90
      %p193 = pneg %p87
      %p194 = pneg %p111
      %p195 = pneg %p108
      %p196 = pneg %p137
      %p197 = pneg %p134
      %s198 = smul.u32 4, %s20
      %p199 = scmp.lt.s32.totalorder %s198, 3
      %s200 = scalar_select %p199, %s198, 3
      %s201 = smul.addr %s200, 4
      %s202 = scalar_lea.vmem %s4, %s201
      %s203 = smul.u32 4, %s20
      %p204 = scmp.lt.s32.totalorder %s203, 3
      %s205 = scalar_select %p204, %s203, 3
      %s206 = smul.addr %s205, 4
      %s207 = smul.addr %s206, 4
      %s208 = scalar_lea.vmem %s0, %s207
      %s209 = smul.u32 4, %s20
      %s210 = smul.u32 4, %s20
      %p211 = scmp.lt.s32.totalorder %s210, 3
      %s212 = scalar_select %p211, %s210, 3
      %s213 = smul.addr %s212, 4
      %s214 = scalar_lea.vmem %s4, %s213
      %s215 = smul.u32 4, %s20
      %v217 = vld [vmem:[%s208] sm:$0xff]
      %v218 = vld [vmem:[%s208 + $0x8] sm:$0xff]
      %v219 = vld [vmem:[%s208 + $0x10] sm:$0xff]
      %v220 = vld [vmem:[%s208 + $0x18] sm:$0xff]
      %v221 = vld [vmem:[%s208 + $0x20] sm:$0xff]
      %v222 = vld [vmem:[%s208 + $0x28] sm:$0xff]
      %v223 = vld [vmem:[%s208 + $0x30] sm:$0xff]
      %v224 = vld [vmem:[%s208 + $0x38] sm:$0xff]
      %v225 = vld [vmem:[%s1] sm:$0xf]
      %v226 = vld [vmem:[%s1 + $0x4] sm:$0xf]
      %v227 = vld [vmem:[%s1 + $0x8] sm:$0xf]
      %v228 = vld [vmem:[%s1 + $0xc] sm:$0xf]
      %v229 = vld [vmem:[%s1 + $0x10] sm:$0xf]
      %v230 = vld [vmem:[%s1 + $0x14] sm:$0xf]
      %v231 = vld [vmem:[%s1 + $0x18] sm:$0xf]
      %v232 = vld [vmem:[%s1 + $0x1c] sm:$0xf]
      %v233 = vld [vmem:[%s1 + $0x20] sm:$0xf]
      %v234 = vld [vmem:[%s1 + $0x24] sm:$0xf]
      %v235 = vld [vmem:[%s1 + $0x28] sm:$0xf]
      %v236 = vld [vmem:[%s1 + $0x2c] sm:$0xf]
      %v237 = vld [vmem:[%s1 + $0x30] sm:$0xf]
      %v238 = vld [vmem:[%s1 + $0x34] sm:$0xf]
      %v239 = vld [vmem:[%s1 + $0x38] sm:$0xf]
      %v240 = vld [vmem:[%s1 + $0x3c] sm:$0xf]
      %v241 = vld [vmem:[%s1 + $0x40] sm:$0xf]
      %v242 = vld [vmem:[%s1 + $0x44] sm:$0xf]
      %v243 = vld [vmem:[%s1 + $0x48] sm:$0xf]
      %v244 = vld [vmem:[%s1 + $0x4c] sm:$0xf]
      %v245 = vld [vmem:[%s1 + $0x50] sm:$0xf]
      %v246 = vld [vmem:[%s1 + $0x54] sm:$0xf]
      %v247 = vld [vmem:[%s1 + $0x58] sm:$0xf]
      %v248 = vld [vmem:[%s1 + $0x5c] sm:$0xf]
      %v249 = vld [vmem:[%s1 + $0x60] sm:$0xf]
      %v250 = vld [vmem:[%s1 + $0x64] sm:$0xf]
      %v251 = vld [vmem:[%s1 + $0x68] sm:$0xf]
      %v252 = vld [vmem:[%s1 + $0x6c] sm:$0xf]
      %v253 = vld [vmem:[%s1 + $0x70] sm:$0xf]
      %v254 = vld [vmem:[%s1 + $0x74] sm:$0xf]
      %v255 = vld [vmem:[%s1 + $0x78] sm:$0xf]
      %v256 = vld [vmem:[%s1 + $0x7c] sm:$0xf]
      %v257 = vld [vmem:[%s1 + $0x80] sm:$0xf]
      %v258 = vld [vmem:[%s1 + $0x84] sm:$0xf]
      %v259 = vld [vmem:[%s1 + $0x88] sm:$0xf]
      %v260 = vld [vmem:[%s1 + $0x8c] sm:$0xf]
      %v261 = vld [vmem:[%s1 + $0x90] sm:$0xf]
      %v262 = vld [vmem:[%s1 + $0x94] sm:$0xf]
      %v263 = vld [vmem:[%s1 + $0x98] sm:$0xf]
      %v264 = vld [vmem:[%s1 + $0x9c] sm:$0xf]
      %v265 = vld [vmem:[%s1 + $0xa0] sm:$0xf]
      %v266 = vld [vmem:[%s1 + $0xa4] sm:$0xf]
      %v267 = vld [vmem:[%s1 + $0xa8] sm:$0xf]
      %v268 = vld [vmem:[%s1 + $0xac] sm:$0xf]
      %v269 = vld [vmem:[%s1 + $0xb0] sm:$0xf]
      %v270 = vld [vmem:[%s1 + $0xb4] sm:$0xf]
      %v271 = vld [vmem:[%s1 + $0xb8] sm:$0xf]
      %v272 = vld [vmem:[%s1 + $0xbc] sm:$0xf]
      %v273 = vld [vmem:[%s1 + $0xc0] sm:$0xf]
      %v274 = vld [vmem:[%s1 + $0xc4] sm:$0xf]
      %v275 = vld [vmem:[%s1 + $0xc8] sm:$0xf]
      %v276 = vld [vmem:[%s1 + $0xcc] sm:$0xf]
      %v277 = vld [vmem:[%s1 + $0xd0] sm:$0xf]
      %v278 = vld [vmem:[%s1 + $0xd4] sm:$0xf]
      %v279 = vld [vmem:[%s1 + $0xd8] sm:$0xf]
      %v280 = vld [vmem:[%s1 + $0xdc] sm:$0xf]
      %v281 = vld [vmem:[%s1 + $0xe0] sm:$0xf]
      %v282 = vld [vmem:[%s1 + $0xe4] sm:$0xf]
      %v283 = vld [vmem:[%s1 + $0xe8] sm:$0xf]
      %v284 = vld [vmem:[%s1 + $0xec] sm:$0xf]
      %v285 = vld [vmem:[%s1 + $0xf0] sm:$0xf]
      %v286 = vld [vmem:[%s1 + $0xf4] sm:$0xf]
      %v287 = vld [vmem:[%s1 + $0xf8] sm:$0xf]
      %v288 = vld [vmem:[%s1 + $0xfc] sm:$0xf]
      %v297 = vunpack.c.l.b16 %v217
      %v298 = vunpack.c.h.b16 %v217
      %v299 = vunpack.c.l.b16 %v218
      %v300 = vunpack.c.h.b16 %v218
      %v301 = vunpack.c.l.b16 %v219
      %v302 = vunpack.c.h.b16 %v219
      %v303 = vunpack.c.l.b16 %v220
      %v304 = vunpack.c.h.b16 %v220
      %v305 = vunpack.c.l.b16 %v221
      %v306 = vunpack.c.h.b16 %v221
      %v307 = vunpack.c.l.b16 %v222
      %v308 = vunpack.c.h.b16 %v222
      %v309 = vunpack.c.l.b16 %v223
      %v310 = vunpack.c.h.b16 %v223
      %v311 = vunpack.c.l.b16 %v224
      %v312 = vunpack.c.h.b16 %v224
      %v313 = vpack.c.b16 %v301, %v297
      %v314 = vpack.c.b16 %v302, %v298
      %v315 = vpack.c.b16 %v303, %v299
      %v316 = vpack.c.b16 %v304, %v300
      %v317 = vpack.c.b16 %v309, %v305
      %v318 = vpack.c.b16 %v310, %v306
      %v319 = vpack.c.b16 %v311, %v307
      %v320 = vpack.c.b16 %v312, %v308
      %v393 = vunpack.c.l.b16 %v225
      %v394 = vunpack.c.l.b16 %v226
      %v395 = vunpack.c.l.b16 %v227
      %v396 = vunpack.c.l.b16 %v228
      %v397 = vunpack.c.l.b16 %v229
      %v398 = vunpack.c.l.b16 %v230
      %v399 = vunpack.c.l.b16 %v231
      %v400 = vunpack.c.l.b16 %v232
      %v401 = vunpack.c.l.b16 %v233
      %v402 = vunpack.c.l.b16 %v234
      %v403 = vunpack.c.l.b16 %v235
      %v404 = vunpack.c.l.b16 %v236
      %v405 = vunpack.c.l.b16 %v237
      %v406 = vunpack.c.l.b16 %v238
      %v407 = vunpack.c.l.b16 %v239
      %v408 = vunpack.c.l.b16 %v240
      %v409 = vunpack.c.l.b16 %v241
      %v410 = vunpack.c.l.b16 %v242
      %v411 = vunpack.c.l.b16 %v243
      %v412 = vunpack.c.l.b16 %v244
      %v413 = vunpack.c.l.b16 %v245
      %v414 = vunpack.c.l.b16 %v246
      %v415 = vunpack.c.l.b16 %v247
      %v416 = vunpack.c.l.b16 %v248
      %v417 = vunpack.c.l.b16 %v249
      %v418 = vunpack.c.l.b16 %v250
      %v419 = vunpack.c.l.b16 %v251
      %v420 = vunpack.c.l.b16 %v252
      %v421 = vunpack.c.l.b16 %v253
      %v422 = vunpack.c.l.b16 %v254
      %v423 = vunpack.c.l.b16 %v255
      %v424 = vunpack.c.l.b16 %v256
      %v425 = vunpack.c.l.b16 %v257
      %v426 = vunpack.c.l.b16 %v258
      %v427 = vunpack.c.l.b16 %v259
      %v428 = vunpack.c.l.b16 %v260
      %v429 = vunpack.c.l.b16 %v261
      %v430 = vunpack.c.l.b16 %v262
      %v431 = vunpack.c.l.b16 %v263
      %v432 = vunpack.c.l.b16 %v264
      %v433 = vunpack.c.l.b16 %v265
      %v434 = vunpack.c.l.b16 %v266
      %v435 = vunpack.c.l.b16 %v267
      %v436 = vunpack.c.l.b16 %v268
      %v437 = vunpack.c.l.b16 %v269
      %v438 = vunpack.c.l.b16 %v270
      %v439 = vunpack.c.l.b16 %v271
      %v440 = vunpack.c.l.b16 %v272
      %v441 = vunpack.c.l.b16 %v273
      %v442 = vunpack.c.l.b16 %v274
      %v443 = vunpack.c.l.b16 %v275
      %v444 = vunpack.c.l.b16 %v276
      %v445 = vunpack.c.l.b16 %v277
      %v446 = vunpack.c.l.b16 %v278
      %v447 = vunpack.c.l.b16 %v279
      %v448 = vunpack.c.l.b16 %v280
      %v449 = vunpack.c.l.b16 %v281
      %v450 = vunpack.c.l.b16 %v282
      %v451 = vunpack.c.l.b16 %v283
      %v452 = vunpack.c.l.b16 %v284
      %v453 = vunpack.c.l.b16 %v285
      %v454 = vunpack.c.l.b16 %v286
      %v455 = vunpack.c.l.b16 %v287
      %v456 = vunpack.c.l.b16 %v288
      %v457 = vpack.c.b16 %v394, %v393
      %v458 = vpack.c.b16 %v396, %v395
      %v459 = vpack.c.b16 %v398, %v397
      %v460 = vpack.c.b16 %v400, %v399
      %v461 = vpack.c.b16 %v402, %v401
      %v462 = vpack.c.b16 %v404, %v403
      %v463 = vpack.c.b16 %v406, %v405
      %v464 = vpack.c.b16 %v408, %v407
      %v465 = vpack.c.b16 %v410, %v409
      %v466 = vpack.c.b16 %v412, %v411
      %v467 = vpack.c.b16 %v414, %v413
      %v468 = vpack.c.b16 %v416, %v415
      %v469 = vpack.c.b16 %v418, %v417
      %v470 = vpack.c.b16 %v420, %v419
      %v471 = vpack.c.b16 %v422, %v421
      %v472 = vpack.c.b16 %v424, %v423
      %v473 = vpack.c.b16 %v426, %v425
      %v474 = vpack.c.b16 %v428, %v427
      %v475 = vpack.c.b16 %v430, %v429
      %v476 = vpack.c.b16 %v432, %v431
      %v477 = vpack.c.b16 %v434, %v433
      %v478 = vpack.c.b16 %v436, %v435
      %v479 = vpack.c.b16 %v438, %v437
      %v480 = vpack.c.b16 %v440, %v439
      %v481 = vpack.c.b16 %v442, %v441
      %v482 = vpack.c.b16 %v444, %v443
      %v483 = vpack.c.b16 %v446, %v445
      %v484 = vpack.c.b16 %v448, %v447
      %v485 = vpack.c.b16 %v450, %v449
      %v486 = vpack.c.b16 %v452, %v451
      %v487 = vpack.c.b16 %v454, %v453
      %v488 = vpack.c.b16 %v456, %v455
      %521 = vmatpush.bf16.msra.mxu0 %v464
      %522 = vmatpush.bf16.msra.mxu0 %v463
      %523 = vmatpush.bf16.msra.mxu0 %v462
      %524 = vmatpush.bf16.msra.mxu0 %v461
      %525 = vmatpush.bf16.msra.mxu0 %v460
      %526 = vmatpush.bf16.msra.mxu0 %v459
      %527 = vmatpush.bf16.msra.mxu0 %v458
      %528 = vmatpush.bf16.msra.mxu0 %v457
      %529 = vmatmul.bf16.gmra.mxu0 %v313
      %v530 = vpop.f32.mrf.mxu0
      %v531 = vadd.f32 0.0, %v530
      %v532 = vpop.f32.mrf.mxu0
      %v533 = vadd.f32 0.0, %v532
      %534 = vmatmul.bf16.gmra.mxu0 %v317
      %v535 = vpop.f32.mrf.mxu0
      %v536 = vadd.f32 0.0, %v535
      %v537 = vpop.f32.mrf.mxu0
      %v538 = vadd.f32 0.0, %v537
      %539 = vdwg.mxu0
      %540 = vmatpush.bf16.msra.mxu0 %v472
      %541 = vmatpush.bf16.msra.mxu0 %v471
      %542 = vmatpush.bf16.msra.mxu0 %v470
      %543 = vmatpush.bf16.msra.mxu0 %v469
      %544 = vmatpush.bf16.msra.mxu0 %v468
      %545 = vmatpush.bf16.msra.mxu0 %v467
      %546 = vmatpush.bf16.msra.mxu0 %v466
      %547 = vmatpush.bf16.msra.mxu0 %v465
      %548 = vmatmul.bf16.gmra.mxu0 %v314
      %v549 = vpop.f32.mrf.mxu0
      %v550 = vadd.f32 %v531, %v549
      %v551 = vpop.f32.mrf.mxu0
      %v552 = vadd.f32 %v533, %v551
      %553 = vmatmul.bf16.gmra.mxu0 %v318
      %v554 = vpop.f32.mrf.mxu0
      %v555 = vadd.f32 %v536, %v554
      %v556 = vpop.f32.mrf.mxu0
      %v557 = vadd.f32 %v538, %v556
      %558 = vdwg.mxu0
      %559 = vmatpush.bf16.msra.mxu0 %v480
      %560 = vmatpush.bf16.msra.mxu0 %v479
      %561 = vmatpush.bf16.msra.mxu0 %v478
      %562 = vmatpush.bf16.msra.mxu0 %v477
      %563 = vmatpush.bf16.msra.mxu0 %v476
      %564 = vmatpush.bf16.msra.mxu0 %v475
      %565 = vmatpush.bf16.msra.mxu0 %v474
      %566 = vmatpush.bf16.msra.mxu0 %v473
      %567 = vmatmul.bf16.gmra.mxu0 %v315
      %v568 = vpop.f32.mrf.mxu0
      %v569 = vadd.f32 %v550, %v568
      %v570 = vpop.f32.mrf.mxu0
      %v571 = vadd.f32 %v552, %v570
      %572 = vmatmul.bf16.gmra.mxu0 %v319
      %v573 = vpop.f32.mrf.mxu0
      %v574 = vadd.f32 %v555, %v573
      %v575 = vpop.f32.mrf.mxu0
      %v576 = vadd.f32 %v557, %v575
      %577 = vdwg.mxu0
      %578 = vmatpush.bf16.msra.mxu0 %v488
      %579 = vmatpush.bf16.msra.mxu0 %v487
      %580 = vmatpush.bf16.msra.mxu0 %v486
      %581 = vmatpush.bf16.msra.mxu0 %v485
      %582 = vmatpush.bf16.msra.mxu0 %v484
      %583 = vmatpush.bf16.msra.mxu0 %v483
      %584 = vmatpush.bf16.msra.mxu0 %v482
      %585 = vmatpush.bf16.msra.mxu0 %v481
      %586 = vmatmul.bf16.gmra.mxu0 %v316
      %v587 = vpop.f32.mrf.mxu0
      %v588 = vadd.f32 %v569, %v587
      %v589 = vpop.f32.mrf.mxu0
      %v590 = vadd.f32 %v571, %v589
      %591 = vmatmul.bf16.gmra.mxu0 %v320
      %v592 = vpop.f32.mrf.mxu0
      %v593 = vadd.f32 %v574, %v592
      %v594 = vpop.f32.mrf.mxu0
      %v595 = vadd.f32 %v576, %v594
      %596 = vdwg.mxu0
      %p597 = scmp.eq.s32.totalorder %s19, 0
      %p598 = scmp.eq.s32.totalorder %s20, 0
      %p599 = pnand %p597, %p598
      %p600 = pneg %p599
      // Predicated region
      $region37: #{_lambda_.8} parent=35 // pred_check
        _
      $region38: #{_lambda_.8} parent=35 // pred_check_branch
        %602 = sbr.rel (%p599) target = $region40
      $region39: #{_lambda_.8} parent=35 // pred_region
        %603 = vst [vmem:[#allocation2] sm:$0x1] 0.0
        %604 = vst [vmem:[#allocation3] sm:$0x1] 0.0
      $region40: #{_lambda_.8} parent=35 // pred_fallthru
        _
      // Predicated region
      $region41: #{_lambda_.8} parent=35 // pred_check
        %p605 = pneg %p597
      $region42: #{_lambda_.8} parent=35 // pred_check_branch
        %607 = sbr.rel (%p605) target = $region44
      $region43: #{_lambda_.8} parent=35 // pred_region
        %v608 = vld [vmem:[#allocation2] sm:$0x1]
        %v609 = vadd.f32 %v588, %v590
        %v610 = vadd.f32 %v609, %v593
        %v611 = vadd.f32 %v610, %v595
        %v612 = vrot.slane %v611, 4
        %v613 = vadd.f32 %v611, %v612
        %v614 = vrot.slane %v613, 2
        %v615 = vadd.f32 %v613, %v614
        %v616 = vrot.slane %v615, 1
        %v617 = vadd.f32 %v615, %v616
        %v618 = vadd.f32 %v608, %v617
        %619 = vst [vmem:[#allocation2] sm:$0x1] %v618
        %v620 = vld [vmem:[#allocation3] sm:$0x1]
        %v621 = vmul.f32 %v588, %v588
        %v622 = vmul.f32 %v590, %v590
        %v623 = vmul.f32 %v593, %v593
        %v624 = vmul.f32 %v595, %v595
        %v625 = vadd.f32 %v621, %v622
        %v626 = vadd.f32 %v625, %v623
        %v627 = vadd.f32 %v626, %v624
        %v628 = vrot.slane %v627, 4
        %v629 = vadd.f32 %v627, %v628
        %v630 = vrot.slane %v629, 2
        %v631 = vadd.f32 %v629, %v630
        %v632 = vrot.slane %v631, 1
        %v633 = vadd.f32 %v631, %v632
        %v634 = vadd.f32 %v620, %v633
        %635 = vst [vmem:[#allocation3] sm:$0x1] %v634
        %636 = vst [vmem:[%s214] sm:$0xf] 0
        %637 = vst [vmem:[%s214 + $0x4] sm:$0xf] 0
        %638 = vst [vmem:[%s214 + $0x8] sm:$0xf] 0
        %639 = vst [vmem:[%s214 + $0xc] sm:$0xf] 0
      $region44: #{_lambda_.8} parent=35 // pred_fallthru
        _
      %p640 = scmp.eq.s32.totalorder %s19, 1
      // Predicated region
      $region45: #{_lambda_.8} parent=35 // pred_check
        %p641 = pneg %p640
      $region46: #{_lambda_.8} parent=35 // pred_check_branch
        %643 = sbr.rel (%p641) target = $region48
      $region47: #{_lambda_.8} parent=35 // pred_region
        %v644 = vld [vmem:[#allocation2] sm:$0x1]
        %v645 = vmul.f32 %v644, 0.03125
        %v646 = vld [vmem:[#allocation3] sm:$0x1]
        %v647 = vmul.f32 %v646, 0.03125
        %v648 = vmul.f32 %v645, %v645
        %v649 = vsub.f32 %v647, %v648
        %v650 = vadd.f32 %v649, 1e-05
        %v651 = vrsqrt.pop %v650
        %v652 = vmul.f32 %v651, %v650
        %v653 = vmul.f32 %v652, %v651
        %v654 = vmul.f32 0.5, %v653
        %v655 = vsub.f32 1.5, %v654
        %v656 = vmul.f32 %v651, %v655
        %vm657 = vweird.f32 %v650
        %vm658 = vweird.f32 %v651
        %vm659 = vmor %vm657, %vm658
        %v660 = vsel %vm659, %v651, %v656
        %v661 = vld [vmem:[%s2] sm:$0x1]
        %v662 = vmul.f32 %v661, %v660
        %v663 = vld [vmem:[%s3] sm:$0x1]
        %v664 = vmul.f32 %v645, %v662
        %v665 = vsub.f32 %v663, %v664
        %v667 = vperm.slane %v662, 0
        %v669 = vmul.f32 %v588, %v667
        %v670 = vmul.f32 %v590, %v667
        %v671 = vmul.f32 %v593, %v667
        %v672 = vmul.f32 %v595, %v667
        %v674 = vperm.slane %v665, 0
        %v676 = vadd.f32 %v669, %v674
        %v677 = vadd.f32 %v670, %v674
        %v678 = vadd.f32 %v671, %v674
        %v679 = vadd.f32 %v672, %v674
        %v680 = vmul.f32 %v676, 0.2
        %v681 = vmul.f32 %v677, 0.2
        %v682 = vmul.f32 %v678, 0.2
        %v683 = vmul.f32 %v679, 0.2
        %v684 = vmax.f32 %v676, %v680
        %v685 = vmax.f32 %v677, %v681
        %v686 = vmax.f32 %v678, %v682
        %v687 = vmax.f32 %v679, %v683
        %v688 = vpack.c.bf16 %v684, %v684
        %v689 = vpack.c.bf16 %v685, %v685
        %v690 = vpack.c.bf16 %v686, %v686
        %v691 = vpack.c.bf16 %v687, %v687
        %692 = vst [vmem:[%s214] sm:$0xf] %v688
        %693 = vst [vmem:[%s214 + $0x4] sm:$0xf] %v689
        %694 = vst [vmem:[%s214 + $0x8] sm:$0xf] %v690
        %695 = vst [vmem:[%s214 + $0xc] sm:$0xf] %v691
      $region48: #{_lambda_.8} parent=35 // pred_fallthru
        _
      %s696 = smul.u32 4, %s20
      %p697 = scmp.lt.s32.totalorder %s696, 3
      %s698 = scalar_select %p697, %s696, 3
      %s699 = smul.addr %s698, 4
      %s700 = scalar_lea.vmem %s4, %s699
      // Predicated region
      $region49: #{_lambda_.8} parent=35 // pred_check
        %p701 = pneg %p134
      $region50: #{_lambda_.8} parent=35 // pred_check_branch
        %703 = sbr.rel (%p701) target = $region52
      $region51: #{_lambda_.8} parent=35 // pred_region
        %s704 = smul.u32 4, %s20
      $region52: #{_lambda_.8} parent=35 // pred_fallthru
        _
      // Predicated region
      $region53: #{_lambda_.8} parent=35 // pred_check
        %p705 = pneg %p134
      $region54: #{_lambda_.8} parent=35 // pred_check_branch
        %707 = sbr.rel (%p705) target = $region56
      $region55: #{_lambda_.8} parent=35 // pred_region
        %s708 = smul.u32 4, %s20
        %p709 = scmp.lt.s32.totalorder %s708, 3
        %s710 = scalar_select %p709, %s708, 3
        %s711 = smul.addr %s710, 4
        %s712 = scalar_lea.vmem %s4, %s711
      $region56: #{_lambda_.8} parent=35 // pred_fallthru
        _
    $region36: #{_lambda_.8} parent=5 // pred_fallthru
      _
    %p713 = scmp.le.s32.totalorder 2, %s10
    // Predicated region
    $region57: #{_lambda_.8} parent=5 // pred_check
      %p714 = pneg %p713
    $region58: #{_lambda_.8} parent=5 // pred_check_branch
      %716 = sbr.rel (%p714) target = $region60
    $region59: #{_lambda_.8} parent=5 // pred_region
      %s717 = ssub.s32 %s10, 2
    $region60: #{_lambda_.8} parent=5 // pred_fallthru
      _
  $region6: #{_lambda_.8} parent=0 // loop_footer
    %s14 = sadd.s32 1, %s10
  $region7: #{_lambda_.8} parent=0 // loop_footer_branch
    %9 = sbr.rel target = $region3
  $region8: #{_lambda_.8} parent=0 // loop_exit
    _

// kernel: _lambda_.9
$region0: #{_lambda_.9}
  #allocation0 [shape = 'u32[]', space=smem, size = 0x4, offset = 0x4, fixed_abs, tag = 'smem constant byte address 0x4 - core index']
  #allocation1 [shape = 'u32[72,128]{1,0:T(1,128)}', space=vmem, size = 0x9000, scoped, tag = 'internal scratch']
  %s0 = inlined_call_operand.vmem [shape: bf16[16,1024], index: 0, kind: input, shape index: {}]
  %s1 = inlined_call_operand.vmem [shape: bf16[1024,128], index: 1, kind: input, shape index: {}]
  %s2 = inlined_call_operand.vmem [shape: f32[1,128], index: 2, kind: input, shape index: {}]
  %s3 = inlined_call_operand.vmem [shape: f32[16,128], index: 3, kind: output, shape index: {}]
  %s4 = sld [smem:[#allocation0]]
  $region22: #{_lambda_.9} parent=0
    _
  %s6 = ssub.s32 1, %s4
  %s7 = scalar_select 0, %s6, %s4
  // Predicated region
  $region2: #{_lambda_.9} parent=0 // pred_check
    _
  $region3: #{_lambda_.9} parent=0 // pred_check_branch
    %9 = sbr.rel (0) target = $region5
  $region4: #{_lambda_.9} parent=0 // pred_region
    _
  $region5: #{_lambda_.9} parent=0 // pred_fallthru
    _
  // Predicated region
  $region6: #{_lambda_.9} parent=0 // pred_check
    _
  $region7: #{_lambda_.9} parent=0 // pred_check_branch
    %11 = sbr.rel (0) target = $region9
  $region8: #{_lambda_.9} parent=0 // pred_region
    _
  $region9: #{_lambda_.9} parent=0 // pred_fallthru
    _
  // Predicated region
  $region10: #{_lambda_.9} parent=0 // pred_check
    _
  $region11: #{_lambda_.9} parent=0 // pred_check_branch
    %13 = sbr.rel (0) target = $region13
  $region12: #{_lambda_.9} parent=0 // pred_region
    _
  $region13: #{_lambda_.9} parent=0 // pred_fallthru
    _
  %v14 = vld [vmem:[%s0] sm:$0xff]
  %v15 = vld [vmem:[%s0 + $0x8] sm:$0xff]
  %v16 = vld [vmem:[%s0 + $0x10] sm:$0xff]
  %v17 = vld [vmem:[%s0 + $0x18] sm:$0xff]
  %v18 = vld [vmem:[%s0 + $0x20] sm:$0xff]
  %v19 = vld [vmem:[%s0 + $0x28] sm:$0xff]
  %v20 = vld [vmem:[%s0 + $0x30] sm:$0xff]
  %v21 = vld [vmem:[%s0 + $0x38] sm:$0xff]
  %v22 = vld [vmem:[%s1] sm:$0xf]
  %v23 = vld [vmem:[%s1 + $0x4] sm:$0xf]
  %v24 = vld [vmem:[%s1 + $0x8] sm:$0xf]
  %v25 = vld [vmem:[%s1 + $0xc] sm:$0xf]
  %v26 = vld [vmem:[%s1 + $0x10] sm:$0xf]
  %v27 = vld [vmem:[%s1 + $0x14] sm:$0xf]
  %v28 = vld [vmem:[%s1 + $0x18] sm:$0xf]
  %v29 = vld [vmem:[%s1 + $0x1c] sm:$0xf]
  %v30 = vld [vmem:[%s1 + $0x20] sm:$0xf]
  %v31 = vld [vmem:[%s1 + $0x24] sm:$0xf]
  %v32 = vld [vmem:[%s1 + $0x28] sm:$0xf]
  %v33 = vld [vmem:[%s1 + $0x2c] sm:$0xf]
  %v34 = vld [vmem:[%s1 + $0x30] sm:$0xf]
  %v35 = vld [vmem:[%s1 + $0x34] sm:$0xf]
  %v36 = vld [vmem:[%s1 + $0x38] sm:$0xf]
  %v37 = vld [vmem:[%s1 + $0x3c] sm:$0xf]
  %v38 = vld [vmem:[%s1 + $0x40] sm:$0xf]
  %v39 = vld [vmem:[%s1 + $0x44] sm:$0xf]
  %v40 = vld [vmem:[%s1 + $0x48] sm:$0xf]
  %v41 = vld [vmem:[%s1 + $0x4c] sm:$0xf]
  %v42 = vld [vmem:[%s1 + $0x50] sm:$0xf]
  %v43 = vld [vmem:[%s1 + $0x54] sm:$0xf]
  %v44 = vld [vmem:[%s1 + $0x58] sm:$0xf]
  %v45 = vld [vmem:[%s1 + $0x5c] sm:$0xf]
  %v46 = vld [vmem:[%s1 + $0x60] sm:$0xf]
  %v47 = vld [vmem:[%s1 + $0x64] sm:$0xf]
  %v48 = vld [vmem:[%s1 + $0x68] sm:$0xf]
  %v49 = vld [vmem:[%s1 + $0x6c] sm:$0xf]
  %v50 = vld [vmem:[%s1 + $0x70] sm:$0xf]
  %v51 = vld [vmem:[%s1 + $0x74] sm:$0xf]
  %v52 = vld [vmem:[%s1 + $0x78] sm:$0xf]
  %v53 = vld [vmem:[%s1 + $0x7c] sm:$0xf]
  %v54 = vld [vmem:[%s1 + $0x80] sm:$0xf]
  %v55 = vld [vmem:[%s1 + $0x84] sm:$0xf]
  %v56 = vld [vmem:[%s1 + $0x88] sm:$0xf]
  %v57 = vld [vmem:[%s1 + $0x8c] sm:$0xf]
  %v58 = vld [vmem:[%s1 + $0x90] sm:$0xf]
  %v59 = vld [vmem:[%s1 + $0x94] sm:$0xf]
  %v60 = vld [vmem:[%s1 + $0x98] sm:$0xf]
  %v61 = vld [vmem:[%s1 + $0x9c] sm:$0xf]
  %v62 = vld [vmem:[%s1 + $0xa0] sm:$0xf]
  %v63 = vld [vmem:[%s1 + $0xa4] sm:$0xf]
  %v64 = vld [vmem:[%s1 + $0xa8] sm:$0xf]
  %v65 = vld [vmem:[%s1 + $0xac] sm:$0xf]
  %v66 = vld [vmem:[%s1 + $0xb0] sm:$0xf]
  %v67 = vld [vmem:[%s1 + $0xb4] sm:$0xf]
  %v68 = vld [vmem:[%s1 + $0xb8] sm:$0xf]
  %v69 = vld [vmem:[%s1 + $0xbc] sm:$0xf]
  %v70 = vld [vmem:[%s1 + $0xc0] sm:$0xf]
  %v71 = vld [vmem:[%s1 + $0xc4] sm:$0xf]
  %v72 = vld [vmem:[%s1 + $0xc8] sm:$0xf]
  %v73 = vld [vmem:[%s1 + $0xcc] sm:$0xf]
  %v74 = vld [vmem:[%s1 + $0xd0] sm:$0xf]
  %v75 = vld [vmem:[%s1 + $0xd4] sm:$0xf]
  %v76 = vld [vmem:[%s1 + $0xd8] sm:$0xf]
  %v77 = vld [vmem:[%s1 + $0xdc] sm:$0xf]
  %v78 = vld [vmem:[%s1 + $0xe0] sm:$0xf]
  %v79 = vld [vmem:[%s1 + $0xe4] sm:$0xf]
  %v80 = vld [vmem:[%s1 + $0xe8] sm:$0xf]
  %v81 = vld [vmem:[%s1 + $0xec] sm:$0xf]
  %v82 = vld [vmem:[%s1 + $0xf0] sm:$0xf]
  %v83 = vld [vmem:[%s1 + $0xf4] sm:$0xf]
  %v84 = vld [vmem:[%s1 + $0xf8] sm:$0xf]
  %v85 = vld [vmem:[%s1 + $0xfc] sm:$0xf]
  %v86 = vld [vmem:[%s1 + $0x100] sm:$0xf]
  %v87 = vld [vmem:[%s1 + $0x104] sm:$0xf]
  %v88 = vld [vmem:[%s1 + $0x108] sm:$0xf]
  %v89 = vld [vmem:[%s1 + $0x10c] sm:$0xf]
  %v90 = vld [vmem:[%s1 + $0x110] sm:$0xf]
  %v91 = vld [vmem:[%s1 + $0x114] sm:$0xf]
  %v92 = vld [vmem:[%s1 + $0x118] sm:$0xf]
  %v93 = vld [vmem:[%s1 + $0x11c] sm:$0xf]
  %v94 = vld [vmem:[%s1 + $0x120] sm:$0xf]
  %v95 = vld [vmem:[%s1 + $0x124] sm:$0xf]
  %v96 = vld [vmem:[%s1 + $0x128] sm:$0xf]
  %v97 = vld [vmem:[%s1 + $0x12c] sm:$0xf]
  %v98 = vld [vmem:[%s1 + $0x130] sm:$0xf]
  %v99 = vld [vmem:[%s1 + $0x134] sm:$0xf]
  %v100 = vld [vmem:[%s1 + $0x138] sm:$0xf]
  %v101 = vld [vmem:[%s1 + $0x13c] sm:$0xf]
  %v102 = vld [vmem:[%s1 + $0x140] sm:$0xf]
  %v103 = vld [vmem:[%s1 + $0x144] sm:$0xf]
  %v104 = vld [vmem:[%s1 + $0x148] sm:$0xf]
  %v105 = vld [vmem:[%s1 + $0x14c] sm:$0xf]
  %v106 = vld [vmem:[%s1 + $0x150] sm:$0xf]
  %v107 = vld [vmem:[%s1 + $0x154] sm:$0xf]
  %v108 = vld [vmem:[%s1 + $0x158] sm:$0xf]
  %v109 = vld [vmem:[%s1 + $0x15c] sm:$0xf]
  %v110 = vld [vmem:[%s1 + $0x160] sm:$0xf]
  %v111 = vld [vmem:[%s1 + $0x164] sm:$0xf]
  %v112 = vld [vmem:[%s1 + $0x168] sm:$0xf]
  %v113 = vld [vmem:[%s1 + $0x16c] sm:$0xf]
  %v114 = vld [vmem:[%s1 + $0x170] sm:$0xf]
  %v115 = vld [vmem:[%s1 + $0x174] sm:$0xf]
  %v116 = vld [vmem:[%s1 + $0x178] sm:$0xf]
  %v117 = vld [vmem:[%s1 + $0x17c] sm:$0xf]
  %v118 = vld [vmem:[%s1 + $0x180] sm:$0xf]
  %v119 = vld [vmem:[%s1 + $0x184] sm:$0xf]
  %v120 = vld [vmem:[%s1 + $0x188] sm:$0xf]
  %v121 = vld [vmem:[%s1 + $0x18c] sm:$0xf]
  %v122 = vld [vmem:[%s1 + $0x190] sm:$0xf]
  %v123 = vld [vmem:[%s1 + $0x194] sm:$0xf]
  %v124 = vld [vmem:[%s1 + $0x198] sm:$0xf]
  %v125 = vld [vmem:[%s1 + $0x19c] sm:$0xf]
  %v126 = vld [vmem:[%s1 + $0x1a0] sm:$0xf]
  %v127 = vld [vmem:[%s1 + $0x1a4] sm:$0xf]
  %v128 = vld [vmem:[%s1 + $0x1a8] sm:$0xf]
  %v129 = vld [vmem:[%s1 + $0x1ac] sm:$0xf]
  %v130 = vld [vmem:[%s1 + $0x1b0] sm:$0xf]
  %v131 = vld [vmem:[%s1 + $0x1b4] sm:$0xf]
  %v132 = vld [vmem:[%s1 + $0x1b8] sm:$0xf]
  %v133 = vld [vmem:[%s1 + $0x1bc] sm:$0xf]
  %v134 = vld [vmem:[%s1 + $0x1c0] sm:$0xf]
  %v135 = vld [vmem:[%s1 + $0x1c4] sm:$0xf]
  %v136 = vld [vmem:[%s1 + $0x1c8] sm:$0xf]
  %v137 = vld [vmem:[%s1 + $0x1cc] sm:$0xf]
  %v138 = vld [vmem:[%s1 + $0x1d0] sm:$0xf]
  %v139 = vld [vmem:[%s1 + $0x1d4] sm:$0xf]
  %v140 = vld [vmem:[%s1 + $0x1d8] sm:$0xf]
  %v141 = vld [vmem:[%s1 + $0x1dc] sm:$0xf]
  %v142 = vld [vmem:[%s1 + $0x1e0] sm:$0xf]
  %v143 = vld [vmem:[%s1 + $0x1e4] sm:$0xf]
  %v144 = vld [vmem:[%s1 + $0x1e8] sm:$0xf]
  %v145 = vld [vmem:[%s1 + $0x1ec] sm:$0xf]
  %v146 = vld [vmem:[%s1 + $0x1f0] sm:$0xf]
  %v147 = vld [vmem:[%s1 + $0x1f4] sm:$0xf]
  %v148 = vld [vmem:[%s1 + $0x1f8] sm:$0xf]
  %v149 = vld [vmem:[%s1 + $0x1fc] sm:$0xf]
  %v150 = vld [vmem:[%s2] sm:$0x1]
  %v152 = vperm.slane %v150, 0
  %v162 = vunpack.c.l.b16 %v14
  %v163 = vunpack.c.h.b16 %v14
  %v164 = vunpack.c.l.b16 %v15
  %v165 = vunpack.c.h.b16 %v15
  %v166 = vunpack.c.l.b16 %v16
  %v167 = vunpack.c.h.b16 %v16
  %v168 = vunpack.c.l.b16 %v17
  %v169 = vunpack.c.h.b16 %v17
  %v170 = vunpack.c.l.b16 %v18
  %v171 = vunpack.c.h.b16 %v18
  %v172 = vunpack.c.l.b16 %v19
  %v173 = vunpack.c.h.b16 %v19
  %v174 = vunpack.c.l.b16 %v20
  %v175 = vunpack.c.h.b16 %v20
  %v176 = vunpack.c.l.b16 %v21
  %v177 = vunpack.c.h.b16 %v21
  %v178 = vpack.c.b16 %v170, %v162
  %v179 = vpack.c.b16 %v171, %v163
  %v180 = vpack.c.b16 %v172, %v164
  %v181 = vpack.c.b16 %v173, %v165
  %v182 = vpack.c.b16 %v174, %v166
  %v183 = vpack.c.b16 %v175, %v167
  %v184 = vpack.c.b16 %v176, %v168
  %v185 = vpack.c.b16 %v177, %v169
  %v322 = vunpack.c.l.b16 %v22
  %v323 = vunpack.c.l.b16 %v23
  %v324 = vunpack.c.l.b16 %v24
  %v325 = vunpack.c.l.b16 %v25
  %v326 = vunpack.c.l.b16 %v26
  %v327 = vunpack.c.l.b16 %v27
  %v328 = vunpack.c.l.b16 %v28
  %v329 = vunpack.c.l.b16 %v29
  %v330 = vunpack.c.l.b16 %v30
  %v331 = vunpack.c.l.b16 %v31
  %v332 = vunpack.c.l.b16 %v32
  %v333 = vunpack.c.l.b16 %v33
  %v334 = vunpack.c.l.b16 %v34
  %v335 = vunpack.c.l.b16 %v35
  %v336 = vunpack.c.l.b16 %v36
  %v337 = vunpack.c.l.b16 %v37
  %v338 = vunpack.c.l.b16 %v38
  %v339 = vunpack.c.l.b16 %v39
  %v340 = vunpack.c.l.b16 %v40
  %v341 = vunpack.c.l.b16 %v41
  %v342 = vunpack.c.l.b16 %v42
  %v343 = vunpack.c.l.b16 %v43
  %v344 = vunpack.c.l.b16 %v44
  %v345 = vunpack.c.l.b16 %v45
  %v346 = vunpack.c.l.b16 %v46
  %v347 = vunpack.c.l.b16 %v47
  %v348 = vunpack.c.l.b16 %v48
  %v349 = vunpack.c.l.b16 %v49
  %v350 = vunpack.c.l.b16 %v50
  %v351 = vunpack.c.l.b16 %v51
  %v352 = vunpack.c.l.b16 %v52
  %v353 = vunpack.c.l.b16 %v53
  %v354 = vunpack.c.l.b16 %v54
  %v355 = vunpack.c.l.b16 %v55
  %v356 = vunpack.c.l.b16 %v56
  %v357 = vunpack.c.l.b16 %v57
  %v358 = vunpack.c.l.b16 %v58
  %v359 = vunpack.c.l.b16 %v59
  %v360 = vunpack.c.l.b16 %v60
  %v361 = vunpack.c.l.b16 %v61
  %v362 = vunpack.c.l.b16 %v62
  %v363 = vunpack.c.l.b16 %v63
  %v364 = vunpack.c.l.b16 %v64
  %v365 = vunpack.c.l.b16 %v65
  %v366 = vunpack.c.l.b16 %v66
  %v367 = vunpack.c.l.b16 %v67
  %v368 = vunpack.c.l.b16 %v68
  %v369 = vunpack.c.l.b16 %v69
  %v370 = vunpack.c.l.b16 %v70
  %v371 = vunpack.c.l.b16 %v71
  %v372 = vunpack.c.l.b16 %v72
  %v373 = vunpack.c.l.b16 %v73
  %v374 = vunpack.c.l.b16 %v74
  %v375 = vunpack.c.l.b16 %v75
  %v376 = vunpack.c.l.b16 %v76
  %v377 = vunpack.c.l.b16 %v77
  %v378 = vunpack.c.l.b16 %v78
  %v379 = vunpack.c.l.b16 %v79
  %v380 = vunpack.c.l.b16 %v80
  %v381 = vunpack.c.l.b16 %v81
  %v382 = vunpack.c.l.b16 %v82
  %v383 = vunpack.c.l.b16 %v83
  %v384 = vunpack.c.l.b16 %v84
  %v385 = vunpack.c.l.b16 %v85
  %v386 = vunpack.c.l.b16 %v86
  %v387 = vunpack.c.l.b16 %v87
  %v388 = vunpack.c.l.b16 %v88
  %v389 = vunpack.c.l.b16 %v89
  %v390 = vunpack.c.l.b16 %v90
  %v391 = vunpack.c.l.b16 %v91
  %v392 = vunpack.c.l.b16 %v92
  %v393 = vunpack.c.l.b16 %v93
  %v394 = vunpack.c.l.b16 %v94
  %v395 = vunpack.c.l.b16 %v95
  %v396 = vunpack.c.l.b16 %v96
  %v397 = vunpack.c.l.b16 %v97
  %v398 = vunpack.c.l.b16 %v98
  %v399 = vunpack.c.l.b16 %v99
  %v400 = vunpack.c.l.b16 %v100
  %v401 = vunpack.c.l.b16 %v101
  %v402 = vunpack.c.l.b16 %v102
  %v403 = vunpack.c.l.b16 %v103
  %v404 = vunpack.c.l.b16 %v104
  %v405 = vunpack.c.l.b16 %v105
  %v406 = vunpack.c.l.b16 %v106
  %v407 = vunpack.c.l.b16 %v107
  %v408 = vunpack.c.l.b16 %v108
  %v409 = vunpack.c.l.b16 %v109
  %v410 = vunpack.c.l.b16 %v110
  %v411 = vunpack.c.l.b16 %v111
  %v412 = vunpack.c.l.b16 %v112
  %v413 = vunpack.c.l.b16 %v113
  %v414 = vunpack.c.l.b16 %v114
  %v415 = vunpack.c.l.b16 %v115
  %v416 = vunpack.c.l.b16 %v116
  %v417 = vunpack.c.l.b16 %v117
  %v418 = vunpack.c.l.b16 %v118
  %v419 = vunpack.c.l.b16 %v119
  %v420 = vunpack.c.l.b16 %v120
  %v421 = vunpack.c.l.b16 %v121
  %v422 = vunpack.c.l.b16 %v122
  %v423 = vunpack.c.l.b16 %v123
  %v424 = vunpack.c.l.b16 %v124
  %v425 = vunpack.c.l.b16 %v125
  %v426 = vunpack.c.l.b16 %v126
  %v427 = vunpack.c.l.b16 %v127
  %v428 = vunpack.c.l.b16 %v128
  %v429 = vunpack.c.l.b16 %v129
  %v430 = vunpack.c.l.b16 %v130
  %v431 = vunpack.c.l.b16 %v131
  %v432 = vunpack.c.l.b16 %v132
  %v433 = vunpack.c.l.b16 %v133
  %v434 = vunpack.c.l.b16 %v134
  %v435 = vunpack.c.l.b16 %v135
  %v436 = vunpack.c.l.b16 %v136
  %v437 = vunpack.c.l.b16 %v137
  %v438 = vunpack.c.l.b16 %v138
  %v439 = vunpack.c.l.b16 %v139
  %v440 = vunpack.c.l.b16 %v140
  %v441 = vunpack.c.l.b16 %v141
  %v442 = vunpack.c.l.b16 %v142
  %v443 = vunpack.c.l.b16 %v143
  %v444 = vunpack.c.l.b16 %v144
  %v445 = vunpack.c.l.b16 %v145
  %v446 = vunpack.c.l.b16 %v146
  %v447 = vunpack.c.l.b16 %v147
  %v448 = vunpack.c.l.b16 %v148
  %v449 = vunpack.c.l.b16 %v149
  %v450 = vpack.c.b16 %v323, %v322
  %v451 = vpack.c.b16 %v325, %v324
  %v452 = vpack.c.b16 %v327, %v326
  %v453 = vpack.c.b16 %v329, %v328
  %v454 = vpack.c.b16 %v331, %v330
  %v455 = vpack.c.b16 %v333, %v332
  %v456 = vpack.c.b16 %v335, %v334
  %v457 = vpack.c.b16 %v337, %v336
  %v458 = vpack.c.b16 %v339, %v338
  %v459 = vpack.c.b16 %v341, %v340
  %v460 = vpack.c.b16 %v343, %v342
  %v461 = vpack.c.b16 %v345, %v344
  %v462 = vpack.c.b16 %v347, %v346
  %v463 = vpack.c.b16 %v349, %v348
  %v464 = vpack.c.b16 %v351, %v350
  %v465 = vpack.c.b16 %v353, %v352
  %v466 = vpack.c.b16 %v355, %v354
  %v467 = vpack.c.b16 %v357, %v356
  %v468 = vpack.c.b16 %v359, %v358
  %v469 = vpack.c.b16 %v361, %v360
  %v470 = vpack.c.b16 %v363, %v362
  %v471 = vpack.c.b16 %v365, %v364
  %v472 = vpack.c.b16 %v367, %v366
  %v473 = vpack.c.b16 %v369, %v368
  %v474 = vpack.c.b16 %v371, %v370
  %v475 = vpack.c.b16 %v373, %v372
  %v476 = vpack.c.b16 %v375, %v374
  %v477 = vpack.c.b16 %v377, %v376
  %v478 = vpack.c.b16 %v379, %v378
  %v479 = vpack.c.b16 %v381, %v380
  %v480 = vpack.c.b16 %v383, %v382
  %v481 = vpack.c.b16 %v385, %v384
  %v482 = vpack.c.b16 %v387, %v386
  %v483 = vpack.c.b16 %v389, %v388
  %v484 = vpack.c.b16 %v391, %v390
  %v485 = vpack.c.b16 %v393, %v392
  %v486 = vpack.c.b16 %v395, %v394
  %v487 = vpack.c.b16 %v397, %v396
  %v488 = vpack.c.b16 %v399, %v398
  %v489 = vpack.c.b16 %v401, %v400
  %v490 = vpack.c.b16 %v403, %v402
  %v491 = vpack.c.b16 %v405, %v404
  %v492 = vpack.c.b16 %v407, %v406
  %v493 = vpack.c.b16 %v409, %v408
  %v494 = vpack.c.b16 %v411, %v410
  %v495 = vpack.c.b16 %v413, %v412
  %v496 = vpack.c.b16 %v415, %v414
  %v497 = vpack.c.b16 %v417, %v416
  %v498 = vpack.c.b16 %v419, %v418
  %v499 = vpack.c.b16 %v421, %v420
  %v500 = vpack.c.b16 %v423, %v422
  %v501 = vpack.c.b16 %v425, %v424
  %v502 = vpack.c.b16 %v427, %v426
  %v503 = vpack.c.b16 %v429, %v428
  %v504 = vpack.c.b16 %v431, %v430
  %v505 = vpack.c.b16 %v433, %v432
  %v506 = vpack.c.b16 %v435, %v434
  %v507 = vpack.c.b16 %v437, %v436
  %v508 = vpack.c.b16 %v439, %v438
  %v509 = vpack.c.b16 %v441, %v440
  %v510 = vpack.c.b16 %v443, %v442
  %v511 = vpack.c.b16 %v445, %v444
  %v512 = vpack.c.b16 %v447, %v446
  %v513 = vpack.c.b16 %v449, %v448
  %578 = vmatpush.bf16.msra.mxu0 %v457
  %579 = vmatpush.bf16.msra.mxu0 %v456
  %580 = vmatpush.bf16.msra.mxu0 %v455
  %581 = vmatpush.bf16.msra.mxu0 %v454
  %582 = vmatpush.bf16.msra.mxu0 %v453
  %583 = vmatpush.bf16.msra.mxu0 %v452
  %584 = vmatpush.bf16.msra.mxu0 %v451
  %585 = vmatpush.bf16.msra.mxu0 %v450
  %586 = vmatmul.bf16.gmra.mxu0 %v178
  %v587 = vpop.f32.mrf.mxu0
  %v588 = vadd.f32 %v152, %v587
  %v589 = vpop.f32.mrf.mxu0
  %v590 = vadd.f32 %v152, %v589
  %591 = vdwg.mxu0
  %592 = vmatpush.bf16.msra.mxu0 %v465
  %593 = vmatpush.bf16.msra.mxu0 %v464
  %594 = vmatpush.bf16.msra.mxu0 %v463
  %595 = vmatpush.bf16.msra.mxu0 %v462
  %596 = vmatpush.bf16.msra.mxu0 %v461
  %597 = vmatpush.bf16.msra.mxu0 %v460
  %598 = vmatpush.bf16.msra.mxu0 %v459
  %599 = vmatpush.bf16.msra.mxu0 %v458
  %600 = vmatmul.bf16.gmra.mxu0 %v179
  %v601 = vpop.f32.mrf.mxu0
  %v602 = vadd.f32 %v588, %v601
  %v603 = vpop.f32.mrf.mxu0
  %v604 = vadd.f32 %v590, %v603
  %605 = vdwg.mxu0
  %606 = vmatpush.bf16.msra.mxu0 %v473
  %607 = vmatpush.bf16.msra.mxu0 %v472
  %608 = vmatpush.bf16.msra.mxu0 %v471
  %609 = vmatpush.bf16.msra.mxu0 %v470
  %610 = vmatpush.bf16.msra.mxu0 %v469
  %611 = vmatpush.bf16.msra.mxu0 %v468
  %612 = vmatpush.bf16.msra.mxu0 %v467
  %613 = vmatpush.bf16.msra.mxu0 %v466
  %614 = vmatmul.bf16.gmra.mxu0 %v180
  %v615 = vpop.f32.mrf.mxu0
  %v616 = vadd.f32 %v602, %v615
  %v617 = vpop.f32.mrf.mxu0
  %v618 = vadd.f32 %v604, %v617
  %619 = vdwg.mxu0
  %620 = vmatpush.bf16.msra.mxu0 %v481
  %621 = vmatpush.bf16.msra.mxu0 %v480
  %622 = vmatpush.bf16.msra.mxu0 %v479
  %623 = vmatpush.bf16.msra.mxu0 %v478
  %624 = vmatpush.bf16.msra.mxu0 %v477
  %625 = vmatpush.bf16.msra.mxu0 %v476
  %626 = vmatpush.bf16.msra.mxu0 %v475
  %627 = vmatpush.bf16.msra.mxu0 %v474
  %628 = vmatmul.bf16.gmra.mxu0 %v181
  %v629 = vpop.f32.mrf.mxu0
  %v630 = vadd.f32 %v616, %v629
  %v631 = vpop.f32.mrf.mxu0
  %v632 = vadd.f32 %v618, %v631
  %633 = vdwg.mxu0
  %634 = vmatpush.bf16.msra.mxu0 %v489
  %635 = vmatpush.bf16.msra.mxu0 %v488
  %636 = vmatpush.bf16.msra.mxu0 %v487
  %637 = vmatpush.bf16.msra.mxu0 %v486
  %638 = vmatpush.bf16.msra.mxu0 %v485
  %639 = vmatpush.bf16.msra.mxu0 %v484
  %640 = vmatpush.bf16.msra.mxu0 %v483
  %641 = vmatpush.bf16.msra.mxu0 %v482
  %642 = vmatmul.bf16.gmra.mxu0 %v182
  %v643 = vpop.f32.mrf.mxu0
  %v644 = vadd.f32 %v630, %v643
  %v645 = vpop.f32.mrf.mxu0
  %v646 = vadd.f32 %v632, %v645
  %647 = vdwg.mxu0
  %648 = vmatpush.bf16.msra.mxu0 %v497
  %649 = vmatpush.bf16.msra.mxu0 %v496
  %650 = vmatpush.bf16.msra.mxu0 %v495
  %651 = vmatpush.bf16.msra.mxu0 %v494
  %652 = vmatpush.bf16.msra.mxu0 %v493
  %653 = vmatpush.bf16.msra.mxu0 %v492
  %654 = vmatpush.bf16.msra.mxu0 %v491
  %655 = vmatpush.bf16.msra.mxu0 %v490
  %656 = vmatmul.bf16.gmra.mxu0 %v183
  %v657 = vpop.f32.mrf.mxu0
  %v658 = vadd.f32 %v644, %v657
  %v659 = vpop.f32.mrf.mxu0
  %v660 = vadd.f32 %v646, %v659
  %661 = vdwg.mxu0
  %662 = vmatpush.bf16.msra.mxu0 %v505
  %663 = vmatpush.bf16.msra.mxu0 %v504
  %664 = vmatpush.bf16.msra.mxu0 %v503
  %665 = vmatpush.bf16.msra.mxu0 %v502
  %666 = vmatpush.bf16.msra.mxu0 %v501
  %667 = vmatpush.bf16.msra.mxu0 %v500
  %668 = vmatpush.bf16.msra.mxu0 %v499
  %669 = vmatpush.bf16.msra.mxu0 %v498
  %670 = vmatmul.bf16.gmra.mxu0 %v184
  %v671 = vpop.f32.mrf.mxu0
  %v672 = vadd.f32 %v658, %v671
  %v673 = vpop.f32.mrf.mxu0
  %v674 = vadd.f32 %v660, %v673
  %675 = vdwg.mxu0
  %676 = vmatpush.bf16.msra.mxu0 %v513
  %677 = vmatpush.bf16.msra.mxu0 %v512
  %678 = vmatpush.bf16.msra.mxu0 %v511
  %679 = vmatpush.bf16.msra.mxu0 %v510
  %680 = vmatpush.bf16.msra.mxu0 %v509
  %681 = vmatpush.bf16.msra.mxu0 %v508
  %682 = vmatpush.bf16.msra.mxu0 %v507
  %683 = vmatpush.bf16.msra.mxu0 %v506
  %684 = vmatmul.bf16.gmra.mxu0 %v185
  %v685 = vpop.f32.mrf.mxu0
  %v686 = vadd.f32 %v672, %v685
  %v687 = vpop.f32.mrf.mxu0
  %v688 = vadd.f32 %v674, %v687
  %689 = vdwg.mxu0
  %v690 = vsub.f32 0.0, %v686
  %v691 = vsub.f32 0.0, %v688
  %v692 = vmul.f32 %v690, 1.442695
  %v693 = vpow.pop %v692
  %v694 = vmul.f32 %v691, 1.442695
  %v695 = vpow.pop %v694
  %v696 = vadd.f32 %v693, 1.0
  %v697 = vadd.f32 %v695, 1.0
  %v698 = vrcp.pop %v696
  %v699 = vrcp.pop %v697
  %700 = vst [vmem:[%s3] sm:$0xff] %v698
  %701 = vst [vmem:[%s3 + $0x8] sm:$0xff] %v699
  // Predicated region
  $region14: #{_lambda_.9} parent=0 // pred_check
    _
  $region15: #{_lambda_.9} parent=0 // pred_check_branch
    %703 = sbr.rel (0) target = $region17
  $region16: #{_lambda_.9} parent=0 // pred_region
    _
  $region17: #{_lambda_.9} parent=0 // pred_fallthru
    _
  // Predicated region
  $region18: #{_lambda_.9} parent=0 // pred_check
    _
  $region19: #{_lambda_.9} parent=0 // pred_check_branch
    %705 = sbr.rel (0) target = $region21
  $region20: #{_lambda_.9} parent=0 // pred_region
    _
  $region21: #{_lambda_.9} parent=0 // pred_fallthru
    _

</llo_original>
